<compile_context>
chip_gen: v5e
topology: v5e:2x2
jax: 0.10.0
libtpu: 0.0.40
codegen_flags: <defaults>
</compile_context>

<pallas_src>
import functools

import jax
import jax.numpy as jnp
from jax.experimental import pallas as pl
from jax.experimental.pallas import tpu as pltpu

LANE = 128


def _round_up(x, m):
    return (x + m - 1) // m * m


def bottleneck_kernel(xm_ref, xt_ref, xb_ref, w1_ref, w2_ref, w3_ref,
                      b1_ref, b2_ref, b3_ref, o_ref, *, width):
    """One (batch, H-tile) grid step.

    xm_ref: (1, T, M, Cp)    main tile; M = block_h * W rows of flattened H*W
    xt_ref: (1, T, W, Cp)    -1 H halo row-group (clamped at the image edge)
    xb_ref: (1, T, W, Cp)    +1 H halo row-group (clamped at the image edge)
    w1_ref: (3, Cp, Pp)      conv1 temporal taps (BN1 scale folded, bf16)
    w2_ref: (3, 3*Pp, Pp)    conv2 with the 3 dx taps fused along K (BN2 folded)
    w3_ref: (Pp, C4p)        conv3 (BN3 scale folded)
    b*_ref: (1, Pp / C4p)    BN biases (f32)
    o_ref : (1, T, M, C4p)   output tile (bf16)
    """
    _, T, M, Cp = xm_ref.shape
    Pp = w1_ref.shape[2]
    C4p = w3_ref.shape[1]
    W = width
    R = M + 2 * W                      # rows incl. top/bottom halo row-groups

    f32, bf16 = jnp.float32, jnp.bfloat16
    h = pl.program_id(1)
    n_h = pl.num_programs(1)
    at_top = h == 0
    at_bot = h == n_h - 1

    # Hoisted out of the unrolled t loop (JAX does not CSE broadcast_in_dim).
    b1m = jnp.broadcast_to(b1_ref[...], (M, Pp))
    b1h = jnp.broadcast_to(b1_ref[...], (W, Pp))
    b2m = jnp.broadcast_to(b2_ref[...], (M, Pp))
    b3m = jnp.broadcast_to(b3_ref[...], (M, C4p))
    # conv2 W zero-padding masks for the two row-shifted operands (hoisted).
    col = jax.lax.broadcasted_iota(jnp.int32, (R, Pp), 0) % W
    not_w_first = col != 0
    not_w_last = col != W - 1
    zrow = jnp.zeros((1, Pp), f32)

    def conv1(x_ref, t, bias):
        # (3,1,1) temporal conv; T zero-padding via skipped boundary taps.
        acc = jnp.dot(x_ref[0, t], w1_ref[1], preferred_element_type=f32)
        if t > 0:
            acc = acc + jnp.dot(x_ref[0, t - 1], w1_ref[0],
                                preferred_element_type=f32)
        if t < T - 1:
            acc = acc + jnp.dot(x_ref[0, t + 1], w1_ref[2],
                                preferred_element_type=f32)
        return jnp.maximum(acc + bias, 0.0)

    for t in range(T):
        # ---- conv1 + bn1 + relu, straight from the input blocks ----
        o1_main = conv1(xm_ref, t, b1m)                        # (M, Pp) f32
        # Clamped halo fetches must be zeroed at the true image boundary
        # (relu(bias) of a zeroed input row is NOT zero).
        o1_top = jnp.where(at_top, 0.0, conv1(xt_ref, t, b1h))
        o1_bot = jnp.where(at_bot, 0.0, conv1(xb_ref, t, b1h))
        o1 = jnp.concatenate([o1_top, o1_main, o1_bot], axis=0)   # (R, Pp)

        # ---- conv2 (1,3,3): fuse the 3 dx taps into one K = 3*Pp operand ----
        o1_wm = jnp.where(not_w_first,
                          jnp.concatenate([zrow, o1[:R - 1]], axis=0), 0.0)
        o1_wp = jnp.where(not_w_last,
                          jnp.concatenate([o1[1:], zrow], axis=0), 0.0)
        wide = jnp.concatenate([o1_wm, o1, o1_wp], axis=-1).astype(bf16)
        acc2 = jnp.dot(wide[0:M], w2_ref[0], preferred_element_type=f32)
        acc2 = acc2 + jnp.dot(wide[W:W + M], w2_ref[1],
                              preferred_element_type=f32)
        acc2 = acc2 + jnp.dot(wide[2 * W:2 * W + M], w2_ref[2],
                              preferred_element_type=f32)
        o2 = jnp.maximum(acc2 + b2m, 0.0).astype(bf16)

        # ---- conv3 (1x1x1) + bn3 bias, residual add, relu ----
        o3 = jnp.dot(o2, w3_ref[...], preferred_element_type=f32) + b3m
        res = xm_ref[0, t].astype(f32)        # Cin == 4*planes (no downsample)
        o_ref[0, t] = jnp.maximum(o3 + res, 0.0).astype(o_ref.dtype)


def _vmem_capacity_bytes():
    try:
        return int(pltpu.get_tpu_info().vmem_capacity_bytes)
    except Exception:
        return 64 * 1024 * 1024        # conservative fallback (v7x per-core)


def _pick_block_h(H, W, T, Cp, Pp, C4p, budget):
    """Largest divisor of H whose per-step VMEM footprint fits the budget."""
    bf = 2
    fixed = ((3 * Cp * Pp + 3 * 3 * Pp * Pp + Pp * C4p) * bf * 2   # weights x2
             + 2 * 2 * T * W * Cp * bf                             # halo blocks
             + (2 * Pp + C4p) * 4 * 2                              # biases
             + (1 << 20))                                          # slack
    best = 1
    for bh in range(1, H + 1):
        if H % bh:
            continue
        m, r = bh * W, (bh + 2) * W
        per = (2 * T * m * Cp * bf         # main input block (double-buffered)
               + 2 * T * m * C4p * bf      # bf16 output block (double-buffered)
               + 3 * r * Pp * 4            # o1 / shifted f32 temporaries
               + r * 3 * Pp * bf           # fused conv2 operand
               + m * (Pp + C4p) * 4)       # conv2 / conv3 f32 accumulators
        if fixed + per <= budget:
            best = bh
    return best


def bottleneck_pallas(x, w1, w2, w3, s1, b1, s2, b2, s3, b3, *, block_h=None):
    """x: (N, T, H, W, Cin) NDHWC.  w1: (3, Cin, P), w2: (3, 3, P, P),
    w3: (P, 4P).  s*/b*: per-channel BN inference scale/bias."""
    N, T, H, W, Cin = x.shape
    P = w1.shape[2]
    C4 = w3.shape[1]
    assert Cin == C4, "downsample=None requires inplanes == planes * 4"
    assert W % 8 == 0, "W must be sublane aligned for the flattened layout"

    Cp = _round_up(Cin, LANE)
    Pp = _round_up(P, LANE)
    C4p = Cp

    vmem_cap = _vmem_capacity_bytes()
    budget = int(vmem_cap * 0.6)
    if block_h is None:
        block_h = _pick_block_h(H, W, T, Cp, Pp, C4p, budget)
        # Keep at least two grid steps so the megacore split / pipeline has work.
        if N * (H // block_h) < 2:
            for bh in range(block_h - 1, 0, -1):
                if H % bh == 0:
                    block_h = bh
                    break
    assert H % block_h == 0
    n_h = H // block_h

    f32, bf16 = jnp.float32, jnp.bfloat16
    s1 = s1.reshape(-1).astype(f32); b1 = b1.reshape(-1).astype(f32)
    s2 = s2.reshape(-1).astype(f32); b2 = b2.reshape(-1).astype(f32)
    s3 = s3.reshape(-1).astype(f32); b3 = b3.reshape(-1).astype(f32)

    def pad2(a, r, c):
        """Zero-pad the last two dims of `a` to (r, c); no-op when aligned."""
        pr, pc = r - a.shape[-2], c - a.shape[-1]
        if pr == 0 and pc == 0:
            return a
        cfg = [(0, 0)] * (a.ndim - 2) + [(0, pr), (0, pc)]
        return jnp.pad(a, cfg)

    # Fold BN scales into conv weights; pad channels only when not lane-aligned.
    w1p = pad2(w1.astype(f32) * s1[None, None, :], Cp, Pp).astype(bf16)
    w2p = pad2(w2.astype(f32) * s2[None, None, None, :], Pp, Pp)
    w2f = w2p.reshape(3, 3 * Pp, Pp).astype(bf16)      # dx taps fused along K
    w3p = pad2(w3.astype(f32) * s3[None, :], Pp, C4p).astype(bf16)
    b1p = pad2(b1[None, :], 1, Pp)
    b2p = pad2(b2[None, :], 1, Pp)
    b3p = pad2(b3[None, :], 1, C4p)

    # bf16 input, (H, W) flattened to rows; channel pad only when needed.
    xf = x.reshape(N, T, H * W, Cin).astype(bf16)
    if Cin != Cp:
        xf = jnp.pad(xf, [(0, 0), (0, 0), (0, 0), (0, Cp - Cin)])

    def full(shape):
        return pl.BlockSpec(shape, lambda n, hh: (0,) * len(shape))

    m_rows = block_h * W
    out = pl.pallas_call(
        functools.partial(bottleneck_kernel, width=W),
        out_shape=jax.ShapeDtypeStruct((N, T, H * W, C4p), bf16),
        grid_spec=pltpu.PrefetchScalarGridSpec(
            num_scalar_prefetch=0,
            grid=(N, n_h),
            in_specs=[
                # main tile (block_h H-rows, flattened with W)
                pl.BlockSpec((1, T, m_rows, Cp),
                             lambda n, hh: (n, 0, hh, 0)),
                # top halo row-group (clamped; masked in-kernel at h==0)
                pl.BlockSpec((1, T, W, Cp),
                             lambda n, hh: (n, 0,
                                            jnp.maximum(hh * block_h - 1, 0),
                                            0)),
                # bottom halo row-group (clamped; masked at h==n_h-1)
                pl.BlockSpec((1, T, W, Cp),
                             lambda n, hh: (n, 0,
                                            jnp.minimum((hh + 1) * block_h,
                                                        H - 1),
                                            0)),
                full((3, Cp, Pp)),
                full((3, 3 * Pp, Pp)),
                full((Pp, C4p)),
                full((1, Pp)), full((1, Pp)), full((1, C4p)),
            ],
            out_specs=pl.BlockSpec((1, T, m_rows, C4p),
                                   lambda n, hh: (n, 0, hh, 0)),
        ),
        compiler_params=pltpu.CompilerParams(
            dimension_semantics=("parallel", "parallel"),
            vmem_limit_bytes=min(int(vmem_cap * 0.75), 128 * 1024 * 1024)),
    )(xf, xf, xf, w1p, w2f, w3p, b1p, b2p, b3p)

    if C4p != C4:
        out = out[..., :C4]
    return out.reshape(N, T, H, W, C4).astype(x.dtype)


if __name__ == "__main__":
    key = jax.random.PRNGKey(0)
    N, T, H, W = 2, 4, 8, 8
    planes = 8
    inplanes = planes * 4      # residual requires inplanes == planes*expansion
    eps = 1e-5

    ks = jax.random.split(key, 16)
    x = jax.random.normal(ks[0], (N, T, H, W, inplanes), jnp.float32)

    # conv weights (channels-last):
    #  torch conv1 weight (P, Cin, 3, 1, 1) -> (3, Cin, P)
    #  torch conv2 weight (P, P, 1, 3, 3)   -> (3, 3, P, P)
    #  torch conv3 weight (4P, P, 1, 1, 1)  -> (P, 4P)
    w1 = 0.1 * jax.random.normal(ks[1], (3, inplanes, planes), jnp.float32)
    w2 = 0.1 * jax.random.normal(ks[2], (3, 3, planes, planes), jnp.float32)
    w3 = 0.1 * jax.random.normal(ks[3], (planes, planes * 4), jnp.float32)

    def bn_affine(kg, kb, km, kv, c):
        gamma = 1.0 + 0.1 * jax.random.normal(kg, (c,), jnp.float32)
        beta = 0.1 * jax.random.normal(kb, (c,), jnp.float32)
        mean = 0.1 * jax.random.normal(km, (c,), jnp.float32)
        var = jnp.abs(jax.random.normal(kv, (c,), jnp.float32)) + 0.5
        scale = gamma / jnp.sqrt(var + eps)
        bias = beta - mean * scale
        return scale, bias

    s1, b1 = bn_affine(ks[4], ks[5], ks[6], ks[7], planes)
    s2, b2 = bn_affine(ks[8], ks[9], ks[10], ks[11], planes)
    s3, b3 = bn_affine(ks[12], ks[13], ks[14], ks[15], planes * 4)

    # Pure-JAX f32 reference (lax conv) for correctness.
    def ref_forward(x):
        dn = ('NDHWC', 'DHWIO', 'NDHWC')
        o = jax.lax.conv_general_dilated(
            x, w1.reshape(3, 1, 1, inplanes, planes), (1, 1, 1),
            [(1, 1), (0, 0), (0, 0)], dimension_numbers=dn)
        o = jnp.maximum(o * s1 + b1, 0.0)
        o = jax.lax.conv_general_dilated(
            o, w2.reshape(1, 3, 3, planes, planes), (1, 1, 1),
            [(0, 0), (1, 1), (1, 1)], dimension_numbers=dn)
        o = jnp.maximum(o * s2 + b2, 0.0)
        o = jax.lax.conv_general_dilated(
            o, w3.reshape(1, 1, 1, planes, planes * 4), (1, 1, 1),
            [(0, 0), (0, 0), (0, 0)], dimension_numbers=dn)
        o = o * s3 + b3
        return jnp.maximum(o + x, 0.0)

    ref = jax.block_until_ready(ref_forward(x))

    # Explicit H tiling (exercises interior + boundary halo paths) and the
    # auto-sized tiling derived from the device VMEM capacity.
    for bh in (4, None):
        out = bottleneck_pallas(x, w1, w2, w3, s1, b1, s2, b2, s3, b3,
                                block_h=bh)
        out = jax.block_until_ready(out)
        assert out.shape == ref.shape, (out.shape, ref.shape)
        max_err = float(jnp.max(jnp.abs(out - ref)))
        # bf16 matmul operands / bf16 output (f32 accumulation) vs f32 ref.
        assert jnp.allclose(out, ref, rtol=1e-1, atol=5e-2), max_err

    print("KERNEL_OK")
</pallas_src>

<mosaic_0001>
module attributes {stable_mosaic.version = 11 : i64} {
  func.func @bottleneck_kernel(%arg0: i32, %arg1: i32, %arg2: memref<1x4x32x128xbf16, #tpu.memory_space<vmem>>, %arg3: memref<1x4x8x128xbf16, #tpu.memory_space<vmem>>, %arg4: memref<1x4x8x128xbf16, #tpu.memory_space<vmem>>, %arg5: memref<3x128x128xbf16, #tpu.memory_space<vmem>>, %arg6: memref<3x384x128xbf16, #tpu.memory_space<vmem>>, %arg7: memref<128x128xbf16, #tpu.memory_space<vmem>>, %arg8: memref<1x128xf32, #tpu.memory_space<vmem>>, %arg9: memref<1x128xf32, #tpu.memory_space<vmem>>, %arg10: memref<1x128xf32, #tpu.memory_space<vmem>>, %arg11: memref<1x4x32x128xbf16, #tpu.memory_space<vmem>>) attributes {dimension_semantics = [#tpu.dimension_semantics<parallel>, #tpu.dimension_semantics<parallel>], iteration_bounds = array<i64: 2, 2>, scalar_prefetch = 0 : i64, scratch_operands = 0 : i64, tpu.core_type = #tpu.core_type<tc>, window_params = [{transform_indices = @transform_0, window_bounds = array<i64: 1, 4, 32, 128>}, {transform_indices = @transform_1, window_bounds = array<i64: 1, 4, 8, 128>}, {transform_indices = @transform_2, window_bounds = array<i64: 1, 4, 8, 128>}, {pipeline_mode = #tpu.pipeline_mode<synchronous>, transform_indices = @transform_3, window_bounds = array<i64: 3, 128, 128>}, {pipeline_mode = #tpu.pipeline_mode<synchronous>, transform_indices = @transform_4, window_bounds = array<i64: 3, 384, 128>}, {pipeline_mode = #tpu.pipeline_mode<synchronous>, transform_indices = @transform_5, window_bounds = array<i64: 128, 128>}, {pipeline_mode = #tpu.pipeline_mode<synchronous>, transform_indices = @transform_6, window_bounds = array<i64: 1, 128>}, {pipeline_mode = #tpu.pipeline_mode<synchronous>, transform_indices = @transform_7, window_bounds = array<i64: 1, 128>}, {pipeline_mode = #tpu.pipeline_mode<synchronous>, transform_indices = @transform_8, window_bounds = array<i64: 1, 128>}, {transform_indices = @transform_9, window_bounds = array<i64: 1, 4, 32, 128>}]} {
    %c0_i32 = arith.constant 0 : i32
    %0 = arith.cmpi eq, %arg1, %c0_i32 : i32
    %c1_i32 = arith.constant 1 : i32
    %1 = arith.cmpi eq, %arg1, %c1_i32 : i32
    %c0 = arith.constant 0 : index
    %c0_0 = arith.constant 0 : index
    %2 = vector.load %arg8[%c0, %c0_0] : memref<1x128xf32, #tpu.memory_space<vmem>>, vector<1x128xf32>
    %3 = vector.shape_cast %2 : vector<1x128xf32> to vector<1x128xf32>
    %4 = vector.broadcast %3 : vector<1x128xf32> to vector<32x128xf32>
    %c0_1 = arith.constant 0 : index
    %c0_2 = arith.constant 0 : index
    %5 = vector.load %arg8[%c0_1, %c0_2] : memref<1x128xf32, #tpu.memory_space<vmem>>, vector<1x128xf32>
    %6 = vector.shape_cast %5 : vector<1x128xf32> to vector<1x128xf32>
    %7 = vector.broadcast %6 : vector<1x128xf32> to vector<8x128xf32>
    %c0_3 = arith.constant 0 : index
    %c0_4 = arith.constant 0 : index
    %8 = vector.load %arg9[%c0_3, %c0_4] : memref<1x128xf32, #tpu.memory_space<vmem>>, vector<1x128xf32>
    %9 = vector.shape_cast %8 : vector<1x128xf32> to vector<1x128xf32>
    %10 = vector.broadcast %9 : vector<1x128xf32> to vector<32x128xf32>
    %c0_5 = arith.constant 0 : index
    %c0_6 = arith.constant 0 : index
    %11 = vector.load %arg10[%c0_5, %c0_6] : memref<1x128xf32, #tpu.memory_space<vmem>>, vector<1x128xf32>
    %12 = vector.shape_cast %11 : vector<1x128xf32> to vector<1x128xf32>
    %13 = vector.broadcast %12 : vector<1x128xf32> to vector<32x128xf32>
    %14 = tpu.iota {dimensions = array<i32: 0>} : vector<48x128xi32>
    %c8_i32 = arith.constant 8 : i32
    %c0_i32_7 = arith.constant 0 : i32
    %15 = arith.cmpi eq, %c8_i32, %c0_i32_7 : i32
    %c1_i32_8 = arith.constant 1 : i32
    %16 = arith.select %15, %c1_i32_8, %c8_i32 : i32
    %17 = vector.broadcast %16 : i32 to vector<48x128xi32>
    %18 = arith.remsi %14, %17 : vector<48x128xi32>
    %c0_i32_9 = arith.constant 0 : i32
    %19 = vector.broadcast %c0_i32_9 : i32 to vector<48x128xi32>
    %20 = arith.cmpi ne, %18, %19 : vector<48x128xi32>
    %c0_i32_10 = arith.constant 0 : i32
    %21 = vector.broadcast %c0_i32_10 : i32 to vector<48x128xi32>
    %22 = arith.cmpi slt, %18, %21 : vector<48x128xi32>
    %c0_i32_11 = arith.constant 0 : i32
    %23 = arith.cmpi slt, %16, %c0_i32_11 : i32
    %24 = vector.broadcast %23 : i1 to vector<48x128xi1>
    %25 = vector.broadcast %24 : vector<48x128xi1> to vector<48x128xi1>
    %26 = arith.xori %22, %25 : vector<48x128xi1>
    %27 = arith.andi %26, %20 : vector<48x128xi1>
    %28 = vector.broadcast %16 : i32 to vector<48x128xi32>
    %29 = arith.addi %18, %28 : vector<48x128xi32>
    %30 = arith.select %27, %29, %18 : vector<48x128xi1>, vector<48x128xi32>
    %c0_i32_12 = arith.constant 0 : i32
    %31 = vector.broadcast %c0_i32_12 : i32 to vector<48x128xi32>
    %32 = arith.cmpi ne, %30, %31 : vector<48x128xi32>
    %c7_i32 = arith.constant 7 : i32
    %33 = vector.broadcast %c7_i32 : i32 to vector<48x128xi32>
    %34 = arith.cmpi ne, %30, %33 : vector<48x128xi32>
    %cst = arith.constant 0.000000e+00 : f32
    %35 = vector.broadcast %cst : f32 to vector<1x128xf32>
    %c0_13 = arith.constant 0 : index
    %c0_14 = arith.constant 0 : index
    %c0_15 = arith.constant 0 : index
    %c0_16 = arith.constant 0 : index
    %36 = vector.load %arg2[%c0_13, %c0_14, %c0_15, %c0_16] : memref<1x4x32x128xbf16, #tpu.memory_space<vmem>>, vector<1x1x32x128xbf16>
    %37 = vector.shape_cast %36 : vector<1x1x32x128xbf16> to vector<32x128xbf16>
    %c1 = arith.constant 1 : index
    %c0_17 = arith.constant 0 : index
    %c0_18 = arith.constant 0 : index
    %38 = vector.load %arg5[%c1, %c0_17, %c0_18] : memref<3x128x128xbf16, #tpu.memory_space<vmem>>, vector<1x128x128xbf16>
    %39 = vector.shape_cast %38 : vector<1x128x128xbf16> to vector<128x128xbf16>
    %cst_19 = arith.constant dense<0.000000e+00> : vector<32x128xf32>
    %40 = tpu.matmul %37, %39, %cst_19 {dimension_numbers = #tpu.dot_dimension_numbers<[1], [0], [0], [1], [0, 0, 1, 1], [], []>} : vector<32x128xbf16>, vector<128x128xbf16>, vector<32x128xf32> -> vector<32x128xf32>
    %c0_20 = arith.constant 0 : index
    %c1_21 = arith.constant 1 : index
    %c0_22 = arith.constant 0 : index
    %c0_23 = arith.constant 0 : index
    %41 = vector.load %arg2[%c0_20, %c1_21, %c0_22, %c0_23] : memref<1x4x32x128xbf16, #tpu.memory_space<vmem>>, vector<1x1x32x128xbf16>
    %42 = vector.shape_cast %41 : vector<1x1x32x128xbf16> to vector<32x128xbf16>
    %c2 = arith.constant 2 : index
    %c0_24 = arith.constant 0 : index
    %c0_25 = arith.constant 0 : index
    %43 = vector.load %arg5[%c2, %c0_24, %c0_25] : memref<3x128x128xbf16, #tpu.memory_space<vmem>>, vector<1x128x128xbf16>
    %44 = vector.shape_cast %43 : vector<1x128x128xbf16> to vector<128x128xbf16>
    %cst_26 = arith.constant dense<0.000000e+00> : vector<32x128xf32>
    %45 = tpu.matmul %42, %44, %cst_26 {dimension_numbers = #tpu.dot_dimension_numbers<[1], [0], [0], [1], [0, 0, 1, 1], [], []>} : vector<32x128xbf16>, vector<128x128xbf16>, vector<32x128xf32> -> vector<32x128xf32>
    %46 = arith.addf %40, %45 : vector<32x128xf32>
    %47 = arith.addf %46, %4 : vector<32x128xf32>
    %cst_27 = arith.constant 0.000000e+00 : f32
    %48 = vector.broadcast %cst_27 : f32 to vector<32x128xf32>
    %49 = arith.maximumf %47, %48 : vector<32x128xf32>
    %c0_28 = arith.constant 0 : index
    %c0_29 = arith.constant 0 : index
    %c0_30 = arith.constant 0 : index
    %c0_31 = arith.constant 0 : index
    %50 = vector.load %arg3[%c0_28, %c0_29, %c0_30, %c0_31] : memref<1x4x8x128xbf16, #tpu.memory_space<vmem>>, vector<1x1x8x128xbf16>
    %51 = vector.shape_cast %50 : vector<1x1x8x128xbf16> to vector<8x128xbf16>
    %c1_32 = arith.constant 1 : index
    %c0_33 = arith.constant 0 : index
    %c0_34 = arith.constant 0 : index
    %52 = vector.load %arg5[%c1_32, %c0_33, %c0_34] : memref<3x128x128xbf16, #tpu.memory_space<vmem>>, vector<1x128x128xbf16>
    %53 = vector.shape_cast %52 : vector<1x128x128xbf16> to vector<128x128xbf16>
    %cst_35 = arith.constant dense<0.000000e+00> : vector<8x128xf32>
    %54 = tpu.matmul %51, %53, %cst_35 {dimension_numbers = #tpu.dot_dimension_numbers<[1], [0], [0], [1], [0, 0, 1, 1], [], []>} : vector<8x128xbf16>, vector<128x128xbf16>, vector<8x128xf32> -> vector<8x128xf32>
    %c0_36 = arith.constant 0 : index
    %c1_37 = arith.constant 1 : index
    %c0_38 = arith.constant 0 : index
    %c0_39 = arith.constant 0 : index
    %55 = vector.load %arg3[%c0_36, %c1_37, %c0_38, %c0_39] : memref<1x4x8x128xbf16, #tpu.memory_space<vmem>>, vector<1x1x8x128xbf16>
    %56 = vector.shape_cast %55 : vector<1x1x8x128xbf16> to vector<8x128xbf16>
    %c2_40 = arith.constant 2 : index
    %c0_41 = arith.constant 0 : index
    %c0_42 = arith.constant 0 : index
    %57 = vector.load %arg5[%c2_40, %c0_41, %c0_42] : memref<3x128x128xbf16, #tpu.memory_space<vmem>>, vector<1x128x128xbf16>
    %58 = vector.shape_cast %57 : vector<1x128x128xbf16> to vector<128x128xbf16>
    %cst_43 = arith.constant dense<0.000000e+00> : vector<8x128xf32>
    %59 = tpu.matmul %56, %58, %cst_43 {dimension_numbers = #tpu.dot_dimension_numbers<[1], [0], [0], [1], [0, 0, 1, 1], [], []>} : vector<8x128xbf16>, vector<128x128xbf16>, vector<8x128xf32> -> vector<8x128xf32>
    %60 = arith.addf %54, %59 : vector<8x128xf32>
    %61 = arith.addf %60, %7 : vector<8x128xf32>
    %cst_44 = arith.constant 0.000000e+00 : f32
    %62 = vector.broadcast %cst_44 : f32 to vector<8x128xf32>
    %63 = arith.maximumf %61, %62 : vector<8x128xf32>
    %cst_45 = arith.constant 0.000000e+00 : f32
    %64 = vector.broadcast %cst_45 : f32 to vector<8x128xf32>
    %65 = arith.select %0, %64, %63 : vector<8x128xf32>
    %c0_46 = arith.constant 0 : index
    %c0_47 = arith.constant 0 : index
    %c0_48 = arith.constant 0 : index
    %c0_49 = arith.constant 0 : index
    %66 = vector.load %arg4[%c0_46, %c0_47, %c0_48, %c0_49] : memref<1x4x8x128xbf16, #tpu.memory_space<vmem>>, vector<1x1x8x128xbf16>
    %67 = vector.shape_cast %66 : vector<1x1x8x128xbf16> to vector<8x128xbf16>
    %c1_50 = arith.constant 1 : index
    %c0_51 = arith.constant 0 : index
    %c0_52 = arith.constant 0 : index
    %68 = vector.load %arg5[%c1_50, %c0_51, %c0_52] : memref<3x128x128xbf16, #tpu.memory_space<vmem>>, vector<1x128x128xbf16>
    %69 = vector.shape_cast %68 : vector<1x128x128xbf16> to vector<128x128xbf16>
    %cst_53 = arith.constant dense<0.000000e+00> : vector<8x128xf32>
    %70 = tpu.matmul %67, %69, %cst_53 {dimension_numbers = #tpu.dot_dimension_numbers<[1], [0], [0], [1], [0, 0, 1, 1], [], []>} : vector<8x128xbf16>, vector<128x128xbf16>, vector<8x128xf32> -> vector<8x128xf32>
    %c0_54 = arith.constant 0 : index
    %c1_55 = arith.constant 1 : index
    %c0_56 = arith.constant 0 : index
    %c0_57 = arith.constant 0 : index
    %71 = vector.load %arg4[%c0_54, %c1_55, %c0_56, %c0_57] : memref<1x4x8x128xbf16, #tpu.memory_space<vmem>>, vector<1x1x8x128xbf16>
    %72 = vector.shape_cast %71 : vector<1x1x8x128xbf16> to vector<8x128xbf16>
    %c2_58 = arith.constant 2 : index
    %c0_59 = arith.constant 0 : index
    %c0_60 = arith.constant 0 : index
    %73 = vector.load %arg5[%c2_58, %c0_59, %c0_60] : memref<3x128x128xbf16, #tpu.memory_space<vmem>>, vector<1x128x128xbf16>
    %74 = vector.shape_cast %73 : vector<1x128x128xbf16> to vector<128x128xbf16>
    %cst_61 = arith.constant dense<0.000000e+00> : vector<8x128xf32>
    %75 = tpu.matmul %72, %74, %cst_61 {dimension_numbers = #tpu.dot_dimension_numbers<[1], [0], [0], [1], [0, 0, 1, 1], [], []>} : vector<8x128xbf16>, vector<128x128xbf16>, vector<8x128xf32> -> vector<8x128xf32>
    %76 = arith.addf %70, %75 : vector<8x128xf32>
    %77 = arith.addf %76, %7 : vector<8x128xf32>
    %cst_62 = arith.constant 0.000000e+00 : f32
    %78 = vector.broadcast %cst_62 : f32 to vector<8x128xf32>
    %79 = arith.maximumf %77, %78 : vector<8x128xf32>
    %cst_63 = arith.constant 0.000000e+00 : f32
    %80 = vector.broadcast %cst_63 : f32 to vector<8x128xf32>
    %81 = arith.select %1, %80, %79 : vector<8x128xf32>
    %82 = tpu.concatenate %65, %49, %81 in 0 : vector<8x128xf32>, vector<32x128xf32>, vector<8x128xf32> -> vector<48x128xf32>
    %83 = vector.extract_strided_slice %82 {offsets = [0, 0], sizes = [47, 128], strides = [1, 1]} : vector<48x128xf32> to vector<47x128xf32>
    %84 = tpu.concatenate %35, %83 in 0 : vector<1x128xf32>, vector<47x128xf32> -> vector<48x128xf32>
    %cst_64 = arith.constant 0.000000e+00 : f32
    %85 = vector.broadcast %cst_64 : f32 to vector<48x128xf32>
    %86 = arith.select %32, %84, %85 : vector<48x128xi1>, vector<48x128xf32>
    %87 = vector.extract_strided_slice %82 {offsets = [1, 0], sizes = [47, 128], strides = [1, 1]} : vector<48x128xf32> to vector<47x128xf32>
    %88 = tpu.concatenate %87, %35 in 0 : vector<47x128xf32>, vector<1x128xf32> -> vector<48x128xf32>
    %cst_65 = arith.constant 0.000000e+00 : f32
    %89 = vector.broadcast %cst_65 : f32 to vector<48x128xf32>
    %90 = arith.select %34, %88, %89 : vector<48x128xi1>, vector<48x128xf32>
    %91 = tpu.concatenate %86, %82, %90 in 1 : vector<48x128xf32>, vector<48x128xf32>, vector<48x128xf32> -> vector<48x384xf32>
    %92 = arith.truncf %91 : vector<48x384xf32> to vector<48x384xbf16>
    %93 = vector.extract_strided_slice %92 {offsets = [0, 0], sizes = [32, 384], strides = [1, 1]} : vector<48x384xbf16> to vector<32x384xbf16>
    %c0_66 = arith.constant 0 : index
    %c0_67 = arith.constant 0 : index
    %c0_68 = arith.constant 0 : index
    %94 = vector.load %arg6[%c0_66, %c0_67, %c0_68] : memref<3x384x128xbf16, #tpu.memory_space<vmem>>, vector<1x384x128xbf16>
    %95 = vector.shape_cast %94 : vector<1x384x128xbf16> to vector<384x128xbf16>
    %cst_69 = arith.constant dense<0.000000e+00> : vector<32x128xf32>
    %96 = tpu.matmul %93, %95, %cst_69 {dimension_numbers = #tpu.dot_dimension_numbers<[1], [0], [0], [1], [0, 0, 1, 1], [], []>} : vector<32x384xbf16>, vector<384x128xbf16>, vector<32x128xf32> -> vector<32x128xf32>
    %97 = vector.extract_strided_slice %92 {offsets = [8, 0], sizes = [32, 384], strides = [1, 1]} : vector<48x384xbf16> to vector<32x384xbf16>
    %c1_70 = arith.constant 1 : index
    %c0_71 = arith.constant 0 : index
    %c0_72 = arith.constant 0 : index
    %98 = vector.load %arg6[%c1_70, %c0_71, %c0_72] : memref<3x384x128xbf16, #tpu.memory_space<vmem>>, vector<1x384x128xbf16>
    %99 = vector.shape_cast %98 : vector<1x384x128xbf16> to vector<384x128xbf16>
    %cst_73 = arith.constant dense<0.000000e+00> : vector<32x128xf32>
    %100 = tpu.matmul %97, %99, %cst_73 {dimension_numbers = #tpu.dot_dimension_numbers<[1], [0], [0], [1], [0, 0, 1, 1], [], []>} : vector<32x384xbf16>, vector<384x128xbf16>, vector<32x128xf32> -> vector<32x128xf32>
    %101 = arith.addf %96, %100 : vector<32x128xf32>
    %102 = vector.extract_strided_slice %92 {offsets = [16, 0], sizes = [32, 384], strides = [1, 1]} : vector<48x384xbf16> to vector<32x384xbf16>
    %c2_74 = arith.constant 2 : index
    %c0_75 = arith.constant 0 : index
    %c0_76 = arith.constant 0 : index
    %103 = vector.load %arg6[%c2_74, %c0_75, %c0_76] : memref<3x384x128xbf16, #tpu.memory_space<vmem>>, vector<1x384x128xbf16>
    %104 = vector.shape_cast %103 : vector<1x384x128xbf16> to vector<384x128xbf16>
    %cst_77 = arith.constant dense<0.000000e+00> : vector<32x128xf32>
    %105 = tpu.matmul %102, %104, %cst_77 {dimension_numbers = #tpu.dot_dimension_numbers<[1], [0], [0], [1], [0, 0, 1, 1], [], []>} : vector<32x384xbf16>, vector<384x128xbf16>, vector<32x128xf32> -> vector<32x128xf32>
    %106 = arith.addf %101, %105 : vector<32x128xf32>
    %107 = arith.addf %106, %10 : vector<32x128xf32>
    %cst_78 = arith.constant 0.000000e+00 : f32
    %108 = vector.broadcast %cst_78 : f32 to vector<32x128xf32>
    %109 = arith.maximumf %107, %108 : vector<32x128xf32>
    %110 = arith.truncf %109 : vector<32x128xf32> to vector<32x128xbf16>
    %c0_79 = arith.constant 0 : index
    %c0_80 = arith.constant 0 : index
    %111 = vector.load %arg7[%c0_79, %c0_80] : memref<128x128xbf16, #tpu.memory_space<vmem>>, vector<128x128xbf16>
    %cst_81 = arith.constant dense<0.000000e+00> : vector<32x128xf32>
    %112 = tpu.matmul %110, %111, %cst_81 {dimension_numbers = #tpu.dot_dimension_numbers<[1], [0], [0], [1], [0, 0, 1, 1], [], []>} : vector<32x128xbf16>, vector<128x128xbf16>, vector<32x128xf32> -> vector<32x128xf32>
    %113 = arith.addf %112, %13 : vector<32x128xf32>
    %c0_82 = arith.constant 0 : index
    %c0_83 = arith.constant 0 : index
    %c0_84 = arith.constant 0 : index
    %c0_85 = arith.constant 0 : index
    %114 = vector.load %arg2[%c0_82, %c0_83, %c0_84, %c0_85] : memref<1x4x32x128xbf16, #tpu.memory_space<vmem>>, vector<1x1x32x128xbf16>
    %115 = vector.shape_cast %114 : vector<1x1x32x128xbf16> to vector<32x128xbf16>
    %116 = arith.extf %115 : vector<32x128xbf16> to vector<32x128xf32>
    %117 = arith.addf %113, %116 : vector<32x128xf32>
    %cst_86 = arith.constant 0.000000e+00 : f32
    %118 = vector.broadcast %cst_86 : f32 to vector<32x128xf32>
    %119 = arith.maximumf %117, %118 : vector<32x128xf32>
    %120 = arith.truncf %119 : vector<32x128xf32> to vector<32x128xbf16>
    %c0_87 = arith.constant 0 : index
    %c0_88 = arith.constant 0 : index
    %c0_89 = arith.constant 0 : index
    %c0_90 = arith.constant 0 : index
    %121 = vector.load %arg11[%c0_87, %c0_88, %c0_89, %c0_90] : memref<1x4x32x128xbf16, #tpu.memory_space<vmem>>, vector<1x1x32x128xbf16>
    %122 = vector.shape_cast %121 : vector<1x1x32x128xbf16> to vector<32x128xbf16>
    %123 = vector.shape_cast %120 : vector<32x128xbf16> to vector<1x1x32x128xbf16>
    tpu.vector_store %arg11[%c0_87, %c0_88, %c0_89, %c0_90], %123 {strides = array<i32>} : memref<1x4x32x128xbf16, #tpu.memory_space<vmem>>, vector<1x1x32x128xbf16>,
    %c0_91 = arith.constant 0 : index
    %c1_92 = arith.constant 1 : index
    %c0_93 = arith.constant 0 : index
    %c0_94 = arith.constant 0 : index
    %124 = vector.load %arg2[%c0_91, %c1_92, %c0_93, %c0_94] : memref<1x4x32x128xbf16, #tpu.memory_space<vmem>>, vector<1x1x32x128xbf16>
    %125 = vector.shape_cast %124 : vector<1x1x32x128xbf16> to vector<32x128xbf16>
    %c1_95 = arith.constant 1 : index
    %c0_96 = arith.constant 0 : index
    %c0_97 = arith.constant 0 : index
    %126 = vector.load %arg5[%c1_95, %c0_96, %c0_97] : memref<3x128x128xbf16, #tpu.memory_space<vmem>>, vector<1x128x128xbf16>
    %127 = vector.shape_cast %126 : vector<1x128x128xbf16> to vector<128x128xbf16>
    %cst_98 = arith.constant dense<0.000000e+00> : vector<32x128xf32>
    %128 = tpu.matmul %125, %127, %cst_98 {dimension_numbers = #tpu.dot_dimension_numbers<[1], [0], [0], [1], [0, 0, 1, 1], [], []>} : vector<32x128xbf16>, vector<128x128xbf16>, vector<32x128xf32> -> vector<32x128xf32>
    %c0_99 = arith.constant 0 : index
    %c0_100 = arith.constant 0 : index
    %c0_101 = arith.constant 0 : index
    %c0_102 = arith.constant 0 : index
    %129 = vector.load %arg2[%c0_99, %c0_100, %c0_101, %c0_102] : memref<1x4x32x128xbf16, #tpu.memory_space<vmem>>, vector<1x1x32x128xbf16>
    %130 = vector.shape_cast %129 : vector<1x1x32x128xbf16> to vector<32x128xbf16>
    %c0_103 = arith.constant 0 : index
    %c0_104 = arith.constant 0 : index
    %c0_105 = arith.constant 0 : index
    %131 = vector.load %arg5[%c0_103, %c0_104, %c0_105] : memref<3x128x128xbf16, #tpu.memory_space<vmem>>, vector<1x128x128xbf16>
    %132 = vector.shape_cast %131 : vector<1x128x128xbf16> to vector<128x128xbf16>
    %cst_106 = arith.constant dense<0.000000e+00> : vector<32x128xf32>
    %133 = tpu.matmul %130, %132, %cst_106 {dimension_numbers = #tpu.dot_dimension_numbers<[1], [0], [0], [1], [0, 0, 1, 1], [], []>} : vector<32x128xbf16>, vector<128x128xbf16>, vector<32x128xf32> -> vector<32x128xf32>
    %134 = arith.addf %128, %133 : vector<32x128xf32>
    %c0_107 = arith.constant 0 : index
    %c2_108 = arith.constant 2 : index
    %c0_109 = arith.constant 0 : index
    %c0_110 = arith.constant 0 : index
    %135 = vector.load %arg2[%c0_107, %c2_108, %c0_109, %c0_110] : memref<1x4x32x128xbf16, #tpu.memory_space<vmem>>, vector<1x1x32x128xbf16>
    %136 = vector.shape_cast %135 : vector<1x1x32x128xbf16> to vector<32x128xbf16>
    %c2_111 = arith.constant 2 : index
    %c0_112 = arith.constant 0 : index
    %c0_113 = arith.constant 0 : index
    %137 = vector.load %arg5[%c2_111, %c0_112, %c0_113] : memref<3x128x128xbf16, #tpu.memory_space<vmem>>, vector<1x128x128xbf16>
    %138 = vector.shape_cast %137 : vector<1x128x128xbf16> to vector<128x128xbf16>
    %cst_114 = arith.constant dense<0.000000e+00> : vector<32x128xf32>
    %139 = tpu.matmul %136, %138, %cst_114 {dimension_numbers = #tpu.dot_dimension_numbers<[1], [0], [0], [1], [0, 0, 1, 1], [], []>} : vector<32x128xbf16>, vector<128x128xbf16>, vector<32x128xf32> -> vector<32x128xf32>
    %140 = arith.addf %134, %139 : vector<32x128xf32>
    %141 = arith.addf %140, %4 : vector<32x128xf32>
    %cst_115 = arith.constant 0.000000e+00 : f32
    %142 = vector.broadcast %cst_115 : f32 to vector<32x128xf32>
    %143 = arith.maximumf %141, %142 : vector<32x128xf32>
    %c0_116 = arith.constant 0 : index
    %c1_117 = arith.constant 1 : index
    %c0_118 = arith.constant 0 : index
    %c0_119 = arith.constant 0 : index
    %144 = vector.load %arg3[%c0_116, %c1_117, %c0_118, %c0_119] : memref<1x4x8x128xbf16, #tpu.memory_space<vmem>>, vector<1x1x8x128xbf16>
    %145 = vector.shape_cast %144 : vector<1x1x8x128xbf16> to vector<8x128xbf16>
    %c1_120 = arith.constant 1 : index
    %c0_121 = arith.constant 0 : index
    %c0_122 = arith.constant 0 : index
    %146 = vector.load %arg5[%c1_120, %c0_121, %c0_122] : memref<3x128x128xbf16, #tpu.memory_space<vmem>>, vector<1x128x128xbf16>
    %147 = vector.shape_cast %146 : vector<1x128x128xbf16> to vector<128x128xbf16>
    %cst_123 = arith.constant dense<0.000000e+00> : vector<8x128xf32>
    %148 = tpu.matmul %145, %147, %cst_123 {dimension_numbers = #tpu.dot_dimension_numbers<[1], [0], [0], [1], [0, 0, 1, 1], [], []>} : vector<8x128xbf16>, vector<128x128xbf16>, vector<8x128xf32> -> vector<8x128xf32>
    %c0_124 = arith.constant 0 : index
    %c0_125 = arith.constant 0 : index
    %c0_126 = arith.constant 0 : index
    %c0_127 = arith.constant 0 : index
    %149 = vector.load %arg3[%c0_124, %c0_125, %c0_126, %c0_127] : memref<1x4x8x128xbf16, #tpu.memory_space<vmem>>, vector<1x1x8x128xbf16>
    %150 = vector.shape_cast %149 : vector<1x1x8x128xbf16> to vector<8x128xbf16>
    %c0_128 = arith.constant 0 : index
    %c0_129 = arith.constant 0 : index
    %c0_130 = arith.constant 0 : index
    %151 = vector.load %arg5[%c0_128, %c0_129, %c0_130] : memref<3x128x128xbf16, #tpu.memory_space<vmem>>, vector<1x128x128xbf16>
    %152 = vector.shape_cast %151 : vector<1x128x128xbf16> to vector<128x128xbf16>
    %cst_131 = arith.constant dense<0.000000e+00> : vector<8x128xf32>
    %153 = tpu.matmul %150, %152, %cst_131 {dimension_numbers = #tpu.dot_dimension_numbers<[1], [0], [0], [1], [0, 0, 1, 1], [], []>} : vector<8x128xbf16>, vector<128x128xbf16>, vector<8x128xf32> -> vector<8x128xf32>
    %154 = arith.addf %148, %153 : vector<8x128xf32>
    %c0_132 = arith.constant 0 : index
    %c2_133 = arith.constant 2 : index
    %c0_134 = arith.constant 0 : index
    %c0_135 = arith.constant 0 : index
    %155 = vector.load %arg3[%c0_132, %c2_133, %c0_134, %c0_135] : memref<1x4x8x128xbf16, #tpu.memory_space<vmem>>, vector<1x1x8x128xbf16>
    %156 = vector.shape_cast %155 : vector<1x1x8x128xbf16> to vector<8x128xbf16>
    %c2_136 = arith.constant 2 : index
    %c0_137 = arith.constant 0 : index
    %c0_138 = arith.constant 0 : index
    %157 = vector.load %arg5[%c2_136, %c0_137, %c0_138] : memref<3x128x128xbf16, #tpu.memory_space<vmem>>, vector<1x128x128xbf16>
    %158 = vector.shape_cast %157 : vector<1x128x128xbf16> to vector<128x128xbf16>
    %cst_139 = arith.constant dense<0.000000e+00> : vector<8x128xf32>
    %159 = tpu.matmul %156, %158, %cst_139 {dimension_numbers = #tpu.dot_dimension_numbers<[1], [0], [0], [1], [0, 0, 1, 1], [], []>} : vector<8x128xbf16>, vector<128x128xbf16>, vector<8x128xf32> -> vector<8x128xf32>
    %160 = arith.addf %154, %159 : vector<8x128xf32>
    %161 = arith.addf %160, %7 : vector<8x128xf32>
    %cst_140 = arith.constant 0.000000e+00 : f32
    %162 = vector.broadcast %cst_140 : f32 to vector<8x128xf32>
    %163 = arith.maximumf %161, %162 : vector<8x128xf32>
    %cst_141 = arith.constant 0.000000e+00 : f32
    %164 = vector.broadcast %cst_141 : f32 to vector<8x128xf32>
    %165 = arith.select %0, %164, %163 : vector<8x128xf32>
    %c0_142 = arith.constant 0 : index
    %c1_143 = arith.constant 1 : index
    %c0_144 = arith.constant 0 : index
    %c0_145 = arith.constant 0 : index
    %166 = vector.load %arg4[%c0_142, %c1_143, %c0_144, %c0_145] : memref<1x4x8x128xbf16, #tpu.memory_space<vmem>>, vector<1x1x8x128xbf16>
    %167 = vector.shape_cast %166 : vector<1x1x8x128xbf16> to vector<8x128xbf16>
    %c1_146 = arith.constant 1 : index
    %c0_147 = arith.constant 0 : index
    %c0_148 = arith.constant 0 : index
    %168 = vector.load %arg5[%c1_146, %c0_147, %c0_148] : memref<3x128x128xbf16, #tpu.memory_space<vmem>>, vector<1x128x128xbf16>
    %169 = vector.shape_cast %168 : vector<1x128x128xbf16> to vector<128x128xbf16>
    %cst_149 = arith.constant dense<0.000000e+00> : vector<8x128xf32>
    %170 = tpu.matmul %167, %169, %cst_149 {dimension_numbers = #tpu.dot_dimension_numbers<[1], [0], [0], [1], [0, 0, 1, 1], [], []>} : vector<8x128xbf16>, vector<128x128xbf16>, vector<8x128xf32> -> vector<8x128xf32>
    %c0_150 = arith.constant 0 : index
    %c0_151 = arith.constant 0 : index
    %c0_152 = arith.constant 0 : index
    %c0_153 = arith.constant 0 : index
    %171 = vector.load %arg4[%c0_150, %c0_151, %c0_152, %c0_153] : memref<1x4x8x128xbf16, #tpu.memory_space<vmem>>, vector<1x1x8x128xbf16>
    %172 = vector.shape_cast %171 : vector<1x1x8x128xbf16> to vector<8x128xbf16>
    %c0_154 = arith.constant 0 : index
    %c0_155 = arith.constant 0 : index
    %c0_156 = arith.constant 0 : index
    %173 = vector.load %arg5[%c0_154, %c0_155, %c0_156] : memref<3x128x128xbf16, #tpu.memory_space<vmem>>, vector<1x128x128xbf16>
    %174 = vector.shape_cast %173 : vector<1x128x128xbf16> to vector<128x128xbf16>
    %cst_157 = arith.constant dense<0.000000e+00> : vector<8x128xf32>
    %175 = tpu.matmul %172, %174, %cst_157 {dimension_numbers = #tpu.dot_dimension_numbers<[1], [0], [0], [1], [0, 0, 1, 1], [], []>} : vector<8x128xbf16>, vector<128x128xbf16>, vector<8x128xf32> -> vector<8x128xf32>
    %176 = arith.addf %170, %175 : vector<8x128xf32>
    %c0_158 = arith.constant 0 : index
    %c2_159 = arith.constant 2 : index
    %c0_160 = arith.constant 0 : index
    %c0_161 = arith.constant 0 : index
    %177 = vector.load %arg4[%c0_158, %c2_159, %c0_160, %c0_161] : memref<1x4x8x128xbf16, #tpu.memory_space<vmem>>, vector<1x1x8x128xbf16>
    %178 = vector.shape_cast %177 : vector<1x1x8x128xbf16> to vector<8x128xbf16>
    %c2_162 = arith.constant 2 : index
    %c0_163 = arith.constant 0 : index
    %c0_164 = arith.constant 0 : index
    %179 = vector.load %arg5[%c2_162, %c0_163, %c0_164] : memref<3x128x128xbf16, #tpu.memory_space<vmem>>, vector<1x128x128xbf16>
    %180 = vector.shape_cast %179 : vector<1x128x128xbf16> to vector<128x128xbf16>
    %cst_165 = arith.constant dense<0.000000e+00> : vector<8x128xf32>
    %181 = tpu.matmul %178, %180, %cst_165 {dimension_numbers = #tpu.dot_dimension_numbers<[1], [0], [0], [1], [0, 0, 1, 1], [], []>} : vector<8x128xbf16>, vector<128x128xbf16>, vector<8x128xf32> -> vector<8x128xf32>
    %182 = arith.addf %176, %181 : vector<8x128xf32>
    %183 = arith.addf %182, %7 : vector<8x128xf32>
    %cst_166 = arith.constant 0.000000e+00 : f32
    %184 = vector.broadcast %cst_166 : f32 to vector<8x128xf32>
    %185 = arith.maximumf %183, %184 : vector<8x128xf32>
    %cst_167 = arith.constant 0.000000e+00 : f32
    %186 = vector.broadcast %cst_167 : f32 to vector<8x128xf32>
    %187 = arith.select %1, %186, %185 : vector<8x128xf32>
    %188 = tpu.concatenate %165, %143, %187 in 0 : vector<8x128xf32>, vector<32x128xf32>, vector<8x128xf32> -> vector<48x128xf32>
    %189 = vector.extract_strided_slice %188 {offsets = [0, 0], sizes = [47, 128], strides = [1, 1]} : vector<48x128xf32> to vector<47x128xf32>
    %190 = tpu.concatenate %35, %189 in 0 : vector<1x128xf32>, vector<47x128xf32> -> vector<48x128xf32>
    %cst_168 = arith.constant 0.000000e+00 : f32
    %191 = vector.broadcast %cst_168 : f32 to vector<48x128xf32>
    %192 = arith.select %32, %190, %191 : vector<48x128xi1>, vector<48x128xf32>
    %193 = vector.extract_strided_slice %188 {offsets = [1, 0], sizes = [47, 128], strides = [1, 1]} : vector<48x128xf32> to vector<47x128xf32>
    %194 = tpu.concatenate %193, %35 in 0 : vector<47x128xf32>, vector<1x128xf32> -> vector<48x128xf32>
    %cst_169 = arith.constant 0.000000e+00 : f32
    %195 = vector.broadcast %cst_169 : f32 to vector<48x128xf32>
    %196 = arith.select %34, %194, %195 : vector<48x128xi1>, vector<48x128xf32>
    %197 = tpu.concatenate %192, %188, %196 in 1 : vector<48x128xf32>, vector<48x128xf32>, vector<48x128xf32> -> vector<48x384xf32>
    %198 = arith.truncf %197 : vector<48x384xf32> to vector<48x384xbf16>
    %199 = vector.extract_strided_slice %198 {offsets = [0, 0], sizes = [32, 384], strides = [1, 1]} : vector<48x384xbf16> to vector<32x384xbf16>
    %c0_170 = arith.constant 0 : index
    %c0_171 = arith.constant 0 : index
    %c0_172 = arith.constant 0 : index
    %200 = vector.load %arg6[%c0_170, %c0_171, %c0_172] : memref<3x384x128xbf16, #tpu.memory_space<vmem>>, vector<1x384x128xbf16>
    %201 = vector.shape_cast %200 : vector<1x384x128xbf16> to vector<384x128xbf16>
    %cst_173 = arith.constant dense<0.000000e+00> : vector<32x128xf32>
    %202 = tpu.matmul %199, %201, %cst_173 {dimension_numbers = #tpu.dot_dimension_numbers<[1], [0], [0], [1], [0, 0, 1, 1], [], []>} : vector<32x384xbf16>, vector<384x128xbf16>, vector<32x128xf32> -> vector<32x128xf32>
    %203 = vector.extract_strided_slice %198 {offsets = [8, 0], sizes = [32, 384], strides = [1, 1]} : vector<48x384xbf16> to vector<32x384xbf16>
    %c1_174 = arith.constant 1 : index
    %c0_175 = arith.constant 0 : index
    %c0_176 = arith.constant 0 : index
    %204 = vector.load %arg6[%c1_174, %c0_175, %c0_176] : memref<3x384x128xbf16, #tpu.memory_space<vmem>>, vector<1x384x128xbf16>
    %205 = vector.shape_cast %204 : vector<1x384x128xbf16> to vector<384x128xbf16>
    %cst_177 = arith.constant dense<0.000000e+00> : vector<32x128xf32>
    %206 = tpu.matmul %203, %205, %cst_177 {dimension_numbers = #tpu.dot_dimension_numbers<[1], [0], [0], [1], [0, 0, 1, 1], [], []>} : vector<32x384xbf16>, vector<384x128xbf16>, vector<32x128xf32> -> vector<32x128xf32>
    %207 = arith.addf %202, %206 : vector<32x128xf32>
    %208 = vector.extract_strided_slice %198 {offsets = [16, 0], sizes = [32, 384], strides = [1, 1]} : vector<48x384xbf16> to vector<32x384xbf16>
    %c2_178 = arith.constant 2 : index
    %c0_179 = arith.constant 0 : index
    %c0_180 = arith.constant 0 : index
    %209 = vector.load %arg6[%c2_178, %c0_179, %c0_180] : memref<3x384x128xbf16, #tpu.memory_space<vmem>>, vector<1x384x128xbf16>
    %210 = vector.shape_cast %209 : vector<1x384x128xbf16> to vector<384x128xbf16>
    %cst_181 = arith.constant dense<0.000000e+00> : vector<32x128xf32>
    %211 = tpu.matmul %208, %210, %cst_181 {dimension_numbers = #tpu.dot_dimension_numbers<[1], [0], [0], [1], [0, 0, 1, 1], [], []>} : vector<32x384xbf16>, vector<384x128xbf16>, vector<32x128xf32> -> vector<32x128xf32>
    %212 = arith.addf %207, %211 : vector<32x128xf32>
    %213 = arith.addf %212, %10 : vector<32x128xf32>
    %cst_182 = arith.constant 0.000000e+00 : f32
    %214 = vector.broadcast %cst_182 : f32 to vector<32x128xf32>
    %215 = arith.maximumf %213, %214 : vector<32x128xf32>
    %216 = arith.truncf %215 : vector<32x128xf32> to vector<32x128xbf16>
    %c0_183 = arith.constant 0 : index
    %c0_184 = arith.constant 0 : index
    %217 = vector.load %arg7[%c0_183, %c0_184] : memref<128x128xbf16, #tpu.memory_space<vmem>>, vector<128x128xbf16>
    %cst_185 = arith.constant dense<0.000000e+00> : vector<32x128xf32>
    %218 = tpu.matmul %216, %217, %cst_185 {dimension_numbers = #tpu.dot_dimension_numbers<[1], [0], [0], [1], [0, 0, 1, 1], [], []>} : vector<32x128xbf16>, vector<128x128xbf16>, vector<32x128xf32> -> vector<32x128xf32>
    %219 = arith.addf %218, %13 : vector<32x128xf32>
    %c0_186 = arith.constant 0 : index
    %c1_187 = arith.constant 1 : index
    %c0_188 = arith.constant 0 : index
    %c0_189 = arith.constant 0 : index
    %220 = vector.load %arg2[%c0_186, %c1_187, %c0_188, %c0_189] : memref<1x4x32x128xbf16, #tpu.memory_space<vmem>>, vector<1x1x32x128xbf16>
    %221 = vector.shape_cast %220 : vector<1x1x32x128xbf16> to vector<32x128xbf16>
    %222 = arith.extf %221 : vector<32x128xbf16> to vector<32x128xf32>
    %223 = arith.addf %219, %222 : vector<32x128xf32>
    %cst_190 = arith.constant 0.000000e+00 : f32
    %224 = vector.broadcast %cst_190 : f32 to vector<32x128xf32>
    %225 = arith.maximumf %223, %224 : vector<32x128xf32>
    %226 = arith.truncf %225 : vector<32x128xf32> to vector<32x128xbf16>
    %c0_191 = arith.constant 0 : index
    %c1_192 = arith.constant 1 : index
    %c0_193 = arith.constant 0 : index
    %c0_194 = arith.constant 0 : index
    %227 = vector.load %arg11[%c0_191, %c1_192, %c0_193, %c0_194] : memref<1x4x32x128xbf16, #tpu.memory_space<vmem>>, vector<1x1x32x128xbf16>
    %228 = vector.shape_cast %227 : vector<1x1x32x128xbf16> to vector<32x128xbf16>
    %229 = vector.shape_cast %226 : vector<32x128xbf16> to vector<1x1x32x128xbf16>
    tpu.vector_store %arg11[%c0_191, %c1_192, %c0_193, %c0_194], %229 {strides = array<i32>} : memref<1x4x32x128xbf16, #tpu.memory_space<vmem>>, vector<1x1x32x128xbf16>,
    %c0_195 = arith.constant 0 : index
    %c2_196 = arith.constant 2 : index
    %c0_197 = arith.constant 0 : index
    %c0_198 = arith.constant 0 : index
    %230 = vector.load %arg2[%c0_195, %c2_196, %c0_197, %c0_198] : memref<1x4x32x128xbf16, #tpu.memory_space<vmem>>, vector<1x1x32x128xbf16>
    %231 = vector.shape_cast %230 : vector<1x1x32x128xbf16> to vector<32x128xbf16>
    %c1_199 = arith.constant 1 : index
    %c0_200 = arith.constant 0 : index
    %c0_201 = arith.constant 0 : index
    %232 = vector.load %arg5[%c1_199, %c0_200, %c0_201] : memref<3x128x128xbf16, #tpu.memory_space<vmem>>, vector<1x128x128xbf16>
    %233 = vector.shape_cast %232 : vector<1x128x128xbf16> to vector<128x128xbf16>
    %cst_202 = arith.constant dense<0.000000e+00> : vector<32x128xf32>
    %234 = tpu.matmul %231, %233, %cst_202 {dimension_numbers = #tpu.dot_dimension_numbers<[1], [0], [0], [1], [0, 0, 1, 1], [], []>} : vector<32x128xbf16>, vector<128x128xbf16>, vector<32x128xf32> -> vector<32x128xf32>
    %c0_203 = arith.constant 0 : index
    %c1_204 = arith.constant 1 : index
    %c0_205 = arith.constant 0 : index
    %c0_206 = arith.constant 0 : index
    %235 = vector.load %arg2[%c0_203, %c1_204, %c0_205, %c0_206] : memref<1x4x32x128xbf16, #tpu.memory_space<vmem>>, vector<1x1x32x128xbf16>
    %236 = vector.shape_cast %235 : vector<1x1x32x128xbf16> to vector<32x128xbf16>
    %c0_207 = arith.constant 0 : index
    %c0_208 = arith.constant 0 : index
    %c0_209 = arith.constant 0 : index
    %237 = vector.load %arg5[%c0_207, %c0_208, %c0_209] : memref<3x128x128xbf16, #tpu.memory_space<vmem>>, vector<1x128x128xbf16>
    %238 = vector.shape_cast %237 : vector<1x128x128xbf16> to vector<128x128xbf16>
    %cst_210 = arith.constant dense<0.000000e+00> : vector<32x128xf32>
    %239 = tpu.matmul %236, %238, %cst_210 {dimension_numbers = #tpu.dot_dimension_numbers<[1], [0], [0], [1], [0, 0, 1, 1], [], []>} : vector<32x128xbf16>, vector<128x128xbf16>, vector<32x128xf32> -> vector<32x128xf32>
    %240 = arith.addf %234, %239 : vector<32x128xf32>
    %c0_211 = arith.constant 0 : index
    %c3 = arith.constant 3 : index
    %c0_212 = arith.constant 0 : index
    %c0_213 = arith.constant 0 : index
    %241 = vector.load %arg2[%c0_211, %c3, %c0_212, %c0_213] : memref<1x4x32x128xbf16, #tpu.memory_space<vmem>>, vector<1x1x32x128xbf16>
    %242 = vector.shape_cast %241 : vector<1x1x32x128xbf16> to vector<32x128xbf16>
    %c2_214 = arith.constant 2 : index
    %c0_215 = arith.constant 0 : index
    %c0_216 = arith.constant 0 : index
    %243 = vector.load %arg5[%c2_214, %c0_215, %c0_216] : memref<3x128x128xbf16, #tpu.memory_space<vmem>>, vector<1x128x128xbf16>
    %244 = vector.shape_cast %243 : vector<1x128x128xbf16> to vector<128x128xbf16>
    %cst_217 = arith.constant dense<0.000000e+00> : vector<32x128xf32>
    %245 = tpu.matmul %242, %244, %cst_217 {dimension_numbers = #tpu.dot_dimension_numbers<[1], [0], [0], [1], [0, 0, 1, 1], [], []>} : vector<32x128xbf16>, vector<128x128xbf16>, vector<32x128xf32> -> vector<32x128xf32>
    %246 = arith.addf %240, %245 : vector<32x128xf32>
    %247 = arith.addf %246, %4 : vector<32x128xf32>
    %cst_218 = arith.constant 0.000000e+00 : f32
    %248 = vector.broadcast %cst_218 : f32 to vector<32x128xf32>
    %249 = arith.maximumf %247, %248 : vector<32x128xf32>
    %c0_219 = arith.constant 0 : index
    %c2_220 = arith.constant 2 : index
    %c0_221 = arith.constant 0 : index
    %c0_222 = arith.constant 0 : index
    %250 = vector.load %arg3[%c0_219, %c2_220, %c0_221, %c0_222] : memref<1x4x8x128xbf16, #tpu.memory_space<vmem>>, vector<1x1x8x128xbf16>
    %251 = vector.shape_cast %250 : vector<1x1x8x128xbf16> to vector<8x128xbf16>
    %c1_223 = arith.constant 1 : index
    %c0_224 = arith.constant 0 : index
    %c0_225 = arith.constant 0 : index
    %252 = vector.load %arg5[%c1_223, %c0_224, %c0_225] : memref<3x128x128xbf16, #tpu.memory_space<vmem>>, vector<1x128x128xbf16>
    %253 = vector.shape_cast %252 : vector<1x128x128xbf16> to vector<128x128xbf16>
    %cst_226 = arith.constant dense<0.000000e+00> : vector<8x128xf32>
    %254 = tpu.matmul %251, %253, %cst_226 {dimension_numbers = #tpu.dot_dimension_numbers<[1], [0], [0], [1], [0, 0, 1, 1], [], []>} : vector<8x128xbf16>, vector<128x128xbf16>, vector<8x128xf32> -> vector<8x128xf32>
    %c0_227 = arith.constant 0 : index
    %c1_228 = arith.constant 1 : index
    %c0_229 = arith.constant 0 : index
    %c0_230 = arith.constant 0 : index
    %255 = vector.load %arg3[%c0_227, %c1_228, %c0_229, %c0_230] : memref<1x4x8x128xbf16, #tpu.memory_space<vmem>>, vector<1x1x8x128xbf16>
    %256 = vector.shape_cast %255 : vector<1x1x8x128xbf16> to vector<8x128xbf16>
    %c0_231 = arith.constant 0 : index
    %c0_232 = arith.constant 0 : index
    %c0_233 = arith.constant 0 : index
    %257 = vector.load %arg5[%c0_231, %c0_232, %c0_233] : memref<3x128x128xbf16, #tpu.memory_space<vmem>>, vector<1x128x128xbf16>
    %258 = vector.shape_cast %257 : vector<1x128x128xbf16> to vector<128x128xbf16>
    %cst_234 = arith.constant dense<0.000000e+00> : vector<8x128xf32>
    %259 = tpu.matmul %256, %258, %cst_234 {dimension_numbers = #tpu.dot_dimension_numbers<[1], [0], [0], [1], [0, 0, 1, 1], [], []>} : vector<8x128xbf16>, vector<128x128xbf16>, vector<8x128xf32> -> vector<8x128xf32>
    %260 = arith.addf %254, %259 : vector<8x128xf32>
    %c0_235 = arith.constant 0 : index
    %c3_236 = arith.constant 3 : index
    %c0_237 = arith.constant 0 : index
    %c0_238 = arith.constant 0 : index
    %261 = vector.load %arg3[%c0_235, %c3_236, %c0_237, %c0_238] : memref<1x4x8x128xbf16, #tpu.memory_space<vmem>>, vector<1x1x8x128xbf16>
    %262 = vector.shape_cast %261 : vector<1x1x8x128xbf16> to vector<8x128xbf16>
    %c2_239 = arith.constant 2 : index
    %c0_240 = arith.constant 0 : index
    %c0_241 = arith.constant 0 : index
    %263 = vector.load %arg5[%c2_239, %c0_240, %c0_241] : memref<3x128x128xbf16, #tpu.memory_space<vmem>>, vector<1x128x128xbf16>
    %264 = vector.shape_cast %263 : vector<1x128x128xbf16> to vector<128x128xbf16>
    %cst_242 = arith.constant dense<0.000000e+00> : vector<8x128xf32>
    %265 = tpu.matmul %262, %264, %cst_242 {dimension_numbers = #tpu.dot_dimension_numbers<[1], [0], [0], [1], [0, 0, 1, 1], [], []>} : vector<8x128xbf16>, vector<128x128xbf16>, vector<8x128xf32> -> vector<8x128xf32>
    %266 = arith.addf %260, %265 : vector<8x128xf32>
    %267 = arith.addf %266, %7 : vector<8x128xf32>
    %cst_243 = arith.constant 0.000000e+00 : f32
    %268 = vector.broadcast %cst_243 : f32 to vector<8x128xf32>
    %269 = arith.maximumf %267, %268 : vector<8x128xf32>
    %cst_244 = arith.constant 0.000000e+00 : f32
    %270 = vector.broadcast %cst_244 : f32 to vector<8x128xf32>
    %271 = arith.select %0, %270, %269 : vector<8x128xf32>
    %c0_245 = arith.constant 0 : index
    %c2_246 = arith.constant 2 : index
    %c0_247 = arith.constant 0 : index
    %c0_248 = arith.constant 0 : index
    %272 = vector.load %arg4[%c0_245, %c2_246, %c0_247, %c0_248] : memref<1x4x8x128xbf16, #tpu.memory_space<vmem>>, vector<1x1x8x128xbf16>
    %273 = vector.shape_cast %272 : vector<1x1x8x128xbf16> to vector<8x128xbf16>
    %c1_249 = arith.constant 1 : index
    %c0_250 = arith.constant 0 : index
    %c0_251 = arith.constant 0 : index
    %274 = vector.load %arg5[%c1_249, %c0_250, %c0_251] : memref<3x128x128xbf16, #tpu.memory_space<vmem>>, vector<1x128x128xbf16>
    %275 = vector.shape_cast %274 : vector<1x128x128xbf16> to vector<128x128xbf16>
    %cst_252 = arith.constant dense<0.000000e+00> : vector<8x128xf32>
    %276 = tpu.matmul %273, %275, %cst_252 {dimension_numbers = #tpu.dot_dimension_numbers<[1], [0], [0], [1], [0, 0, 1, 1], [], []>} : vector<8x128xbf16>, vector<128x128xbf16>, vector<8x128xf32> -> vector<8x128xf32>
    %c0_253 = arith.constant 0 : index
    %c1_254 = arith.constant 1 : index
    %c0_255 = arith.constant 0 : index
    %c0_256 = arith.constant 0 : index
    %277 = vector.load %arg4[%c0_253, %c1_254, %c0_255, %c0_256] : memref<1x4x8x128xbf16, #tpu.memory_space<vmem>>, vector<1x1x8x128xbf16>
    %278 = vector.shape_cast %277 : vector<1x1x8x128xbf16> to vector<8x128xbf16>
    %c0_257 = arith.constant 0 : index
    %c0_258 = arith.constant 0 : index
    %c0_259 = arith.constant 0 : index
    %279 = vector.load %arg5[%c0_257, %c0_258, %c0_259] : memref<3x128x128xbf16, #tpu.memory_space<vmem>>, vector<1x128x128xbf16>
    %280 = vector.shape_cast %279 : vector<1x128x128xbf16> to vector<128x128xbf16>
    %cst_260 = arith.constant dense<0.000000e+00> : vector<8x128xf32>
    %281 = tpu.matmul %278, %280, %cst_260 {dimension_numbers = #tpu.dot_dimension_numbers<[1], [0], [0], [1], [0, 0, 1, 1], [], []>} : vector<8x128xbf16>, vector<128x128xbf16>, vector<8x128xf32> -> vector<8x128xf32>
    %282 = arith.addf %276, %281 : vector<8x128xf32>
    %c0_261 = arith.constant 0 : index
    %c3_262 = arith.constant 3 : index
    %c0_263 = arith.constant 0 : index
    %c0_264 = arith.constant 0 : index
    %283 = vector.load %arg4[%c0_261, %c3_262, %c0_263, %c0_264] : memref<1x4x8x128xbf16, #tpu.memory_space<vmem>>, vector<1x1x8x128xbf16>
    %284 = vector.shape_cast %283 : vector<1x1x8x128xbf16> to vector<8x128xbf16>
    %c2_265 = arith.constant 2 : index
    %c0_266 = arith.constant 0 : index
    %c0_267 = arith.constant 0 : index
    %285 = vector.load %arg5[%c2_265, %c0_266, %c0_267] : memref<3x128x128xbf16, #tpu.memory_space<vmem>>, vector<1x128x128xbf16>
    %286 = vector.shape_cast %285 : vector<1x128x128xbf16> to vector<128x128xbf16>
    %cst_268 = arith.constant dense<0.000000e+00> : vector<8x128xf32>
    %287 = tpu.matmul %284, %286, %cst_268 {dimension_numbers = #tpu.dot_dimension_numbers<[1], [0], [0], [1], [0, 0, 1, 1], [], []>} : vector<8x128xbf16>, vector<128x128xbf16>, vector<8x128xf32> -> vector<8x128xf32>
    %288 = arith.addf %282, %287 : vector<8x128xf32>
    %289 = arith.addf %288, %7 : vector<8x128xf32>
    %cst_269 = arith.constant 0.000000e+00 : f32
    %290 = vector.broadcast %cst_269 : f32 to vector<8x128xf32>
    %291 = arith.maximumf %289, %290 : vector<8x128xf32>
    %cst_270 = arith.constant 0.000000e+00 : f32
    %292 = vector.broadcast %cst_270 : f32 to vector<8x128xf32>
    %293 = arith.select %1, %292, %291 : vector<8x128xf32>
    %294 = tpu.concatenate %271, %249, %293 in 0 : vector<8x128xf32>, vector<32x128xf32>, vector<8x128xf32> -> vector<48x128xf32>
    %295 = vector.extract_strided_slice %294 {offsets = [0, 0], sizes = [47, 128], strides = [1, 1]} : vector<48x128xf32> to vector<47x128xf32>
    %296 = tpu.concatenate %35, %295 in 0 : vector<1x128xf32>, vector<47x128xf32> -> vector<48x128xf32>
    %cst_271 = arith.constant 0.000000e+00 : f32
    %297 = vector.broadcast %cst_271 : f32 to vector<48x128xf32>
    %298 = arith.select %32, %296, %297 : vector<48x128xi1>, vector<48x128xf32>
    %299 = vector.extract_strided_slice %294 {offsets = [1, 0], sizes = [47, 128], strides = [1, 1]} : vector<48x128xf32> to vector<47x128xf32>
    %300 = tpu.concatenate %299, %35 in 0 : vector<47x128xf32>, vector<1x128xf32> -> vector<48x128xf32>
    %cst_272 = arith.constant 0.000000e+00 : f32
    %301 = vector.broadcast %cst_272 : f32 to vector<48x128xf32>
    %302 = arith.select %34, %300, %301 : vector<48x128xi1>, vector<48x128xf32>
    %303 = tpu.concatenate %298, %294, %302 in 1 : vector<48x128xf32>, vector<48x128xf32>, vector<48x128xf32> -> vector<48x384xf32>
    %304 = arith.truncf %303 : vector<48x384xf32> to vector<48x384xbf16>
    %305 = vector.extract_strided_slice %304 {offsets = [0, 0], sizes = [32, 384], strides = [1, 1]} : vector<48x384xbf16> to vector<32x384xbf16>
    %c0_273 = arith.constant 0 : index
    %c0_274 = arith.constant 0 : index
    %c0_275 = arith.constant 0 : index
    %306 = vector.load %arg6[%c0_273, %c0_274, %c0_275] : memref<3x384x128xbf16, #tpu.memory_space<vmem>>, vector<1x384x128xbf16>
    %307 = vector.shape_cast %306 : vector<1x384x128xbf16> to vector<384x128xbf16>
    %cst_276 = arith.constant dense<0.000000e+00> : vector<32x128xf32>
    %308 = tpu.matmul %305, %307, %cst_276 {dimension_numbers = #tpu.dot_dimension_numbers<[1], [0], [0], [1], [0, 0, 1, 1], [], []>} : vector<32x384xbf16>, vector<384x128xbf16>, vector<32x128xf32> -> vector<32x128xf32>
    %309 = vector.extract_strided_slice %304 {offsets = [8, 0], sizes = [32, 384], strides = [1, 1]} : vector<48x384xbf16> to vector<32x384xbf16>
    %c1_277 = arith.constant 1 : index
    %c0_278 = arith.constant 0 : index
    %c0_279 = arith.constant 0 : index
    %310 = vector.load %arg6[%c1_277, %c0_278, %c0_279] : memref<3x384x128xbf16, #tpu.memory_space<vmem>>, vector<1x384x128xbf16>
    %311 = vector.shape_cast %310 : vector<1x384x128xbf16> to vector<384x128xbf16>
    %cst_280 = arith.constant dense<0.000000e+00> : vector<32x128xf32>
    %312 = tpu.matmul %309, %311, %cst_280 {dimension_numbers = #tpu.dot_dimension_numbers<[1], [0], [0], [1], [0, 0, 1, 1], [], []>} : vector<32x384xbf16>, vector<384x128xbf16>, vector<32x128xf32> -> vector<32x128xf32>
    %313 = arith.addf %308, %312 : vector<32x128xf32>
    %314 = vector.extract_strided_slice %304 {offsets = [16, 0], sizes = [32, 384], strides = [1, 1]} : vector<48x384xbf16> to vector<32x384xbf16>
    %c2_281 = arith.constant 2 : index
    %c0_282 = arith.constant 0 : index
    %c0_283 = arith.constant 0 : index
    %315 = vector.load %arg6[%c2_281, %c0_282, %c0_283] : memref<3x384x128xbf16, #tpu.memory_space<vmem>>, vector<1x384x128xbf16>
    %316 = vector.shape_cast %315 : vector<1x384x128xbf16> to vector<384x128xbf16>
    %cst_284 = arith.constant dense<0.000000e+00> : vector<32x128xf32>
    %317 = tpu.matmul %314, %316, %cst_284 {dimension_numbers = #tpu.dot_dimension_numbers<[1], [0], [0], [1], [0, 0, 1, 1], [], []>} : vector<32x384xbf16>, vector<384x128xbf16>, vector<32x128xf32> -> vector<32x128xf32>
    %318 = arith.addf %313, %317 : vector<32x128xf32>
    %319 = arith.addf %318, %10 : vector<32x128xf32>
    %cst_285 = arith.constant 0.000000e+00 : f32
    %320 = vector.broadcast %cst_285 : f32 to vector<32x128xf32>
    %321 = arith.maximumf %319, %320 : vector<32x128xf32>
    %322 = arith.truncf %321 : vector<32x128xf32> to vector<32x128xbf16>
    %c0_286 = arith.constant 0 : index
    %c0_287 = arith.constant 0 : index
    %323 = vector.load %arg7[%c0_286, %c0_287] : memref<128x128xbf16, #tpu.memory_space<vmem>>, vector<128x128xbf16>
    %cst_288 = arith.constant dense<0.000000e+00> : vector<32x128xf32>
    %324 = tpu.matmul %322, %323, %cst_288 {dimension_numbers = #tpu.dot_dimension_numbers<[1], [0], [0], [1], [0, 0, 1, 1], [], []>} : vector<32x128xbf16>, vector<128x128xbf16>, vector<32x128xf32> -> vector<32x128xf32>
    %325 = arith.addf %324, %13 : vector<32x128xf32>
    %c0_289 = arith.constant 0 : index
    %c2_290 = arith.constant 2 : index
    %c0_291 = arith.constant 0 : index
    %c0_292 = arith.constant 0 : index
    %326 = vector.load %arg2[%c0_289, %c2_290, %c0_291, %c0_292] : memref<1x4x32x128xbf16, #tpu.memory_space<vmem>>, vector<1x1x32x128xbf16>
    %327 = vector.shape_cast %326 : vector<1x1x32x128xbf16> to vector<32x128xbf16>
    %328 = arith.extf %327 : vector<32x128xbf16> to vector<32x128xf32>
    %329 = arith.addf %325, %328 : vector<32x128xf32>
    %cst_293 = arith.constant 0.000000e+00 : f32
    %330 = vector.broadcast %cst_293 : f32 to vector<32x128xf32>
    %331 = arith.maximumf %329, %330 : vector<32x128xf32>
    %332 = arith.truncf %331 : vector<32x128xf32> to vector<32x128xbf16>
    %c0_294 = arith.constant 0 : index
    %c2_295 = arith.constant 2 : index
    %c0_296 = arith.constant 0 : index
    %c0_297 = arith.constant 0 : index
    %333 = vector.load %arg11[%c0_294, %c2_295, %c0_296, %c0_297] : memref<1x4x32x128xbf16, #tpu.memory_space<vmem>>, vector<1x1x32x128xbf16>
    %334 = vector.shape_cast %333 : vector<1x1x32x128xbf16> to vector<32x128xbf16>
    %335 = vector.shape_cast %332 : vector<32x128xbf16> to vector<1x1x32x128xbf16>
    tpu.vector_store %arg11[%c0_294, %c2_295, %c0_296, %c0_297], %335 {strides = array<i32>} : memref<1x4x32x128xbf16, #tpu.memory_space<vmem>>, vector<1x1x32x128xbf16>,
    %c0_298 = arith.constant 0 : index
    %c3_299 = arith.constant 3 : index
    %c0_300 = arith.constant 0 : index
    %c0_301 = arith.constant 0 : index
    %336 = vector.load %arg2[%c0_298, %c3_299, %c0_300, %c0_301] : memref<1x4x32x128xbf16, #tpu.memory_space<vmem>>, vector<1x1x32x128xbf16>
    %337 = vector.shape_cast %336 : vector<1x1x32x128xbf16> to vector<32x128xbf16>
    %c1_302 = arith.constant 1 : index
    %c0_303 = arith.constant 0 : index
    %c0_304 = arith.constant 0 : index
    %338 = vector.load %arg5[%c1_302, %c0_303, %c0_304] : memref<3x128x128xbf16, #tpu.memory_space<vmem>>, vector<1x128x128xbf16>
    %339 = vector.shape_cast %338 : vector<1x128x128xbf16> to vector<128x128xbf16>
    %cst_305 = arith.constant dense<0.000000e+00> : vector<32x128xf32>
    %340 = tpu.matmul %337, %339, %cst_305 {dimension_numbers = #tpu.dot_dimension_numbers<[1], [0], [0], [1], [0, 0, 1, 1], [], []>} : vector<32x128xbf16>, vector<128x128xbf16>, vector<32x128xf32> -> vector<32x128xf32>
    %c0_306 = arith.constant 0 : index
    %c2_307 = arith.constant 2 : index
    %c0_308 = arith.constant 0 : index
    %c0_309 = arith.constant 0 : index
    %341 = vector.load %arg2[%c0_306, %c2_307, %c0_308, %c0_309] : memref<1x4x32x128xbf16, #tpu.memory_space<vmem>>, vector<1x1x32x128xbf16>
    %342 = vector.shape_cast %341 : vector<1x1x32x128xbf16> to vector<32x128xbf16>
    %c0_310 = arith.constant 0 : index
    %c0_311 = arith.constant 0 : index
    %c0_312 = arith.constant 0 : index
    %343 = vector.load %arg5[%c0_310, %c0_311, %c0_312] : memref<3x128x128xbf16, #tpu.memory_space<vmem>>, vector<1x128x128xbf16>
    %344 = vector.shape_cast %343 : vector<1x128x128xbf16> to vector<128x128xbf16>
    %cst_313 = arith.constant dense<0.000000e+00> : vector<32x128xf32>
    %345 = tpu.matmul %342, %344, %cst_313 {dimension_numbers = #tpu.dot_dimension_numbers<[1], [0], [0], [1], [0, 0, 1, 1], [], []>} : vector<32x128xbf16>, vector<128x128xbf16>, vector<32x128xf32> -> vector<32x128xf32>
    %346 = arith.addf %340, %345 : vector<32x128xf32>
    %347 = arith.addf %346, %4 : vector<32x128xf32>
    %cst_314 = arith.constant 0.000000e+00 : f32
    %348 = vector.broadcast %cst_314 : f32 to vector<32x128xf32>
    %349 = arith.maximumf %347, %348 : vector<32x128xf32>
    %c0_315 = arith.constant 0 : index
    %c3_316 = arith.constant 3 : index
    %c0_317 = arith.constant 0 : index
    %c0_318 = arith.constant 0 : index
    %350 = vector.load %arg3[%c0_315, %c3_316, %c0_317, %c0_318] : memref<1x4x8x128xbf16, #tpu.memory_space<vmem>>, vector<1x1x8x128xbf16>
    %351 = vector.shape_cast %350 : vector<1x1x8x128xbf16> to vector<8x128xbf16>
    %c1_319 = arith.constant 1 : index
    %c0_320 = arith.constant 0 : index
    %c0_321 = arith.constant 0 : index
    %352 = vector.load %arg5[%c1_319, %c0_320, %c0_321] : memref<3x128x128xbf16, #tpu.memory_space<vmem>>, vector<1x128x128xbf16>
    %353 = vector.shape_cast %352 : vector<1x128x128xbf16> to vector<128x128xbf16>
    %cst_322 = arith.constant dense<0.000000e+00> : vector<8x128xf32>
    %354 = tpu.matmul %351, %353, %cst_322 {dimension_numbers = #tpu.dot_dimension_numbers<[1], [0], [0], [1], [0, 0, 1, 1], [], []>} : vector<8x128xbf16>, vector<128x128xbf16>, vector<8x128xf32> -> vector<8x128xf32>
    %c0_323 = arith.constant 0 : index
    %c2_324 = arith.constant 2 : index
    %c0_325 = arith.constant 0 : index
    %c0_326 = arith.constant 0 : index
    %355 = vector.load %arg3[%c0_323, %c2_324, %c0_325, %c0_326] : memref<1x4x8x128xbf16, #tpu.memory_space<vmem>>, vector<1x1x8x128xbf16>
    %356 = vector.shape_cast %355 : vector<1x1x8x128xbf16> to vector<8x128xbf16>
    %c0_327 = arith.constant 0 : index
    %c0_328 = arith.constant 0 : index
    %c0_329 = arith.constant 0 : index
    %357 = vector.load %arg5[%c0_327, %c0_328, %c0_329] : memref<3x128x128xbf16, #tpu.memory_space<vmem>>, vector<1x128x128xbf16>
    %358 = vector.shape_cast %357 : vector<1x128x128xbf16> to vector<128x128xbf16>
    %cst_330 = arith.constant dense<0.000000e+00> : vector<8x128xf32>
    %359 = tpu.matmul %356, %358, %cst_330 {dimension_numbers = #tpu.dot_dimension_numbers<[1], [0], [0], [1], [0, 0, 1, 1], [], []>} : vector<8x128xbf16>, vector<128x128xbf16>, vector<8x128xf32> -> vector<8x128xf32>
    %360 = arith.addf %354, %359 : vector<8x128xf32>
    %361 = arith.addf %360, %7 : vector<8x128xf32>
    %cst_331 = arith.constant 0.000000e+00 : f32
    %362 = vector.broadcast %cst_331 : f32 to vector<8x128xf32>
    %363 = arith.maximumf %361, %362 : vector<8x128xf32>
    %cst_332 = arith.constant 0.000000e+00 : f32
    %364 = vector.broadcast %cst_332 : f32 to vector<8x128xf32>
    %365 = arith.select %0, %364, %363 : vector<8x128xf32>
    %c0_333 = arith.constant 0 : index
    %c3_334 = arith.constant 3 : index
    %c0_335 = arith.constant 0 : index
    %c0_336 = arith.constant 0 : index
    %366 = vector.load %arg4[%c0_333, %c3_334, %c0_335, %c0_336] : memref<1x4x8x128xbf16, #tpu.memory_space<vmem>>, vector<1x1x8x128xbf16>
    %367 = vector.shape_cast %366 : vector<1x1x8x128xbf16> to vector<8x128xbf16>
    %c1_337 = arith.constant 1 : index
    %c0_338 = arith.constant 0 : index
    %c0_339 = arith.constant 0 : index
    %368 = vector.load %arg5[%c1_337, %c0_338, %c0_339] : memref<3x128x128xbf16, #tpu.memory_space<vmem>>, vector<1x128x128xbf16>
    %369 = vector.shape_cast %368 : vector<1x128x128xbf16> to vector<128x128xbf16>
    %cst_340 = arith.constant dense<0.000000e+00> : vector<8x128xf32>
    %370 = tpu.matmul %367, %369, %cst_340 {dimension_numbers = #tpu.dot_dimension_numbers<[1], [0], [0], [1], [0, 0, 1, 1], [], []>} : vector<8x128xbf16>, vector<128x128xbf16>, vector<8x128xf32> -> vector<8x128xf32>
    %c0_341 = arith.constant 0 : index
    %c2_342 = arith.constant 2 : index
    %c0_343 = arith.constant 0 : index
    %c0_344 = arith.constant 0 : index
    %371 = vector.load %arg4[%c0_341, %c2_342, %c0_343, %c0_344] : memref<1x4x8x128xbf16, #tpu.memory_space<vmem>>, vector<1x1x8x128xbf16>
    %372 = vector.shape_cast %371 : vector<1x1x8x128xbf16> to vector<8x128xbf16>
    %c0_345 = arith.constant 0 : index
    %c0_346 = arith.constant 0 : index
    %c0_347 = arith.constant 0 : index
    %373 = vector.load %arg5[%c0_345, %c0_346, %c0_347] : memref<3x128x128xbf16, #tpu.memory_space<vmem>>, vector<1x128x128xbf16>
    %374 = vector.shape_cast %373 : vector<1x128x128xbf16> to vector<128x128xbf16>
    %cst_348 = arith.constant dense<0.000000e+00> : vector<8x128xf32>
    %375 = tpu.matmul %372, %374, %cst_348 {dimension_numbers = #tpu.dot_dimension_numbers<[1], [0], [0], [1], [0, 0, 1, 1], [], []>} : vector<8x128xbf16>, vector<128x128xbf16>, vector<8x128xf32> -> vector<8x128xf32>
    %376 = arith.addf %370, %375 : vector<8x128xf32>
    %377 = arith.addf %376, %7 : vector<8x128xf32>
    %cst_349 = arith.constant 0.000000e+00 : f32
    %378 = vector.broadcast %cst_349 : f32 to vector<8x128xf32>
    %379 = arith.maximumf %377, %378 : vector<8x128xf32>
    %cst_350 = arith.constant 0.000000e+00 : f32
    %380 = vector.broadcast %cst_350 : f32 to vector<8x128xf32>
    %381 = arith.select %1, %380, %379 : vector<8x128xf32>
    %382 = tpu.concatenate %365, %349, %381 in 0 : vector<8x128xf32>, vector<32x128xf32>, vector<8x128xf32> -> vector<48x128xf32>
    %383 = vector.extract_strided_slice %382 {offsets = [0, 0], sizes = [47, 128], strides = [1, 1]} : vector<48x128xf32> to vector<47x128xf32>
    %384 = tpu.concatenate %35, %383 in 0 : vector<1x128xf32>, vector<47x128xf32> -> vector<48x128xf32>
    %cst_351 = arith.constant 0.000000e+00 : f32
    %385 = vector.broadcast %cst_351 : f32 to vector<48x128xf32>
    %386 = arith.select %32, %384, %385 : vector<48x128xi1>, vector<48x128xf32>
    %387 = vector.extract_strided_slice %382 {offsets = [1, 0], sizes = [47, 128], strides = [1, 1]} : vector<48x128xf32> to vector<47x128xf32>
    %388 = tpu.concatenate %387, %35 in 0 : vector<47x128xf32>, vector<1x128xf32> -> vector<48x128xf32>
    %cst_352 = arith.constant 0.000000e+00 : f32
    %389 = vector.broadcast %cst_352 : f32 to vector<48x128xf32>
    %390 = arith.select %34, %388, %389 : vector<48x128xi1>, vector<48x128xf32>
    %391 = tpu.concatenate %386, %382, %390 in 1 : vector<48x128xf32>, vector<48x128xf32>, vector<48x128xf32> -> vector<48x384xf32>
    %392 = arith.truncf %391 : vector<48x384xf32> to vector<48x384xbf16>
    %393 = vector.extract_strided_slice %392 {offsets = [0, 0], sizes = [32, 384], strides = [1, 1]} : vector<48x384xbf16> to vector<32x384xbf16>
    %c0_353 = arith.constant 0 : index
    %c0_354 = arith.constant 0 : index
    %c0_355 = arith.constant 0 : index
    %394 = vector.load %arg6[%c0_353, %c0_354, %c0_355] : memref<3x384x128xbf16, #tpu.memory_space<vmem>>, vector<1x384x128xbf16>
    %395 = vector.shape_cast %394 : vector<1x384x128xbf16> to vector<384x128xbf16>
    %cst_356 = arith.constant dense<0.000000e+00> : vector<32x128xf32>
    %396 = tpu.matmul %393, %395, %cst_356 {dimension_numbers = #tpu.dot_dimension_numbers<[1], [0], [0], [1], [0, 0, 1, 1], [], []>} : vector<32x384xbf16>, vector<384x128xbf16>, vector<32x128xf32> -> vector<32x128xf32>
    %397 = vector.extract_strided_slice %392 {offsets = [8, 0], sizes = [32, 384], strides = [1, 1]} : vector<48x384xbf16> to vector<32x384xbf16>
    %c1_357 = arith.constant 1 : index
    %c0_358 = arith.constant 0 : index
    %c0_359 = arith.constant 0 : index
    %398 = vector.load %arg6[%c1_357, %c0_358, %c0_359] : memref<3x384x128xbf16, #tpu.memory_space<vmem>>, vector<1x384x128xbf16>
    %399 = vector.shape_cast %398 : vector<1x384x128xbf16> to vector<384x128xbf16>
    %cst_360 = arith.constant dense<0.000000e+00> : vector<32x128xf32>
    %400 = tpu.matmul %397, %399, %cst_360 {dimension_numbers = #tpu.dot_dimension_numbers<[1], [0], [0], [1], [0, 0, 1, 1], [], []>} : vector<32x384xbf16>, vector<384x128xbf16>, vector<32x128xf32> -> vector<32x128xf32>
    %401 = arith.addf %396, %400 : vector<32x128xf32>
    %402 = vector.extract_strided_slice %392 {offsets = [16, 0], sizes = [32, 384], strides = [1, 1]} : vector<48x384xbf16> to vector<32x384xbf16>
    %c2_361 = arith.constant 2 : index
    %c0_362 = arith.constant 0 : index
    %c0_363 = arith.constant 0 : index
    %403 = vector.load %arg6[%c2_361, %c0_362, %c0_363] : memref<3x384x128xbf16, #tpu.memory_space<vmem>>, vector<1x384x128xbf16>
    %404 = vector.shape_cast %403 : vector<1x384x128xbf16> to vector<384x128xbf16>
    %cst_364 = arith.constant dense<0.000000e+00> : vector<32x128xf32>
    %405 = tpu.matmul %402, %404, %cst_364 {dimension_numbers = #tpu.dot_dimension_numbers<[1], [0], [0], [1], [0, 0, 1, 1], [], []>} : vector<32x384xbf16>, vector<384x128xbf16>, vector<32x128xf32> -> vector<32x128xf32>
    %406 = arith.addf %401, %405 : vector<32x128xf32>
    %407 = arith.addf %406, %10 : vector<32x128xf32>
    %cst_365 = arith.constant 0.000000e+00 : f32
    %408 = vector.broadcast %cst_365 : f32 to vector<32x128xf32>
    %409 = arith.maximumf %407, %408 : vector<32x128xf32>
    %410 = arith.truncf %409 : vector<32x128xf32> to vector<32x128xbf16>
    %c0_366 = arith.constant 0 : index
    %c0_367 = arith.constant 0 : index
    %411 = vector.load %arg7[%c0_366, %c0_367] : memref<128x128xbf16, #tpu.memory_space<vmem>>, vector<128x128xbf16>
    %cst_368 = arith.constant dense<0.000000e+00> : vector<32x128xf32>
    %412 = tpu.matmul %410, %411, %cst_368 {dimension_numbers = #tpu.dot_dimension_numbers<[1], [0], [0], [1], [0, 0, 1, 1], [], []>} : vector<32x128xbf16>, vector<128x128xbf16>, vector<32x128xf32> -> vector<32x128xf32>
    %413 = arith.addf %412, %13 : vector<32x128xf32>
    %c0_369 = arith.constant 0 : index
    %c3_370 = arith.constant 3 : index
    %c0_371 = arith.constant 0 : index
    %c0_372 = arith.constant 0 : index
    %414 = vector.load %arg2[%c0_369, %c3_370, %c0_371, %c0_372] : memref<1x4x32x128xbf16, #tpu.memory_space<vmem>>, vector<1x1x32x128xbf16>
    %415 = vector.shape_cast %414 : vector<1x1x32x128xbf16> to vector<32x128xbf16>
    %416 = arith.extf %415 : vector<32x128xbf16> to vector<32x128xf32>
    %417 = arith.addf %413, %416 : vector<32x128xf32>
    %cst_373 = arith.constant 0.000000e+00 : f32
    %418 = vector.broadcast %cst_373 : f32 to vector<32x128xf32>
    %419 = arith.maximumf %417, %418 : vector<32x128xf32>
    %420 = arith.truncf %419 : vector<32x128xf32> to vector<32x128xbf16>
    %c0_374 = arith.constant 0 : index
    %c3_375 = arith.constant 3 : index
    %c0_376 = arith.constant 0 : index
    %c0_377 = arith.constant 0 : index
    %421 = vector.load %arg11[%c0_374, %c3_375, %c0_376, %c0_377] : memref<1x4x32x128xbf16, #tpu.memory_space<vmem>>, vector<1x1x32x128xbf16>
    %422 = vector.shape_cast %421 : vector<1x1x32x128xbf16> to vector<32x128xbf16>
    %423 = vector.shape_cast %420 : vector<32x128xbf16> to vector<1x1x32x128xbf16>
    tpu.vector_store %arg11[%c0_374, %c3_375, %c0_376, %c0_377], %423 {strides = array<i32>} : memref<1x4x32x128xbf16, #tpu.memory_space<vmem>>, vector<1x1x32x128xbf16>,
    return
  }
  func.func @transform_0(%arg0: i32, %arg1: i32) -> (i32, i32, i32, i32) {
    %c0_i32 = arith.constant 0 : i32
    %c0_i32_0 = arith.constant 0 : i32
    %c0_i32_1 = arith.constant 0 : i32
    return %arg0, %c0_i32, %arg1, %c0_i32_0 : i32, i32, i32, i32
  }
  func.func @transform_1(%arg0: i32, %arg1: i32) -> (i32, i32, i32, i32) {
    %c4_i32 = arith.constant 4 : i32
    %0 = arith.muli %arg1, %c4_i32 : i32
    %c1_i32 = arith.constant 1 : i32
    %1 = arith.subi %0, %c1_i32 : i32
    %c0_i32 = arith.constant 0 : i32
    %2 = arith.maxsi %1, %c0_i32 : i32
    %c0_i32_0 = arith.constant 0 : i32
    %c0_i32_1 = arith.constant 0 : i32
    %c0_i32_2 = arith.constant 0 : i32
    return %arg0, %c0_i32_0, %2, %c0_i32_1 : i32, i32, i32, i32
  }
  func.func @transform_2(%arg0: i32, %arg1: i32) -> (i32, i32, i32, i32) {
    %c1_i32 = arith.constant 1 : i32
    %0 = arith.addi %arg1, %c1_i32 : i32
    %c4_i32 = arith.constant 4 : i32
    %1 = arith.muli %0, %c4_i32 : i32
    %c7_i32 = arith.constant 7 : i32
    %2 = arith.minsi %1, %c7_i32 : i32
    %c0_i32 = arith.constant 0 : i32
    %c0_i32_0 = arith.constant 0 : i32
    %c0_i32_1 = arith.constant 0 : i32
    return %arg0, %c0_i32, %2, %c0_i32_0 : i32, i32, i32, i32
  }
  func.func @transform_3(%arg0: i32, %arg1: i32) -> (i32, i32, i32) {
    %c0_i32 = arith.constant 0 : i32
    %c0_i32_0 = arith.constant 0 : i32
    %c0_i32_1 = arith.constant 0 : i32
    %c0_i32_2 = arith.constant 0 : i32
    return %c0_i32, %c0_i32_0, %c0_i32_1 : i32, i32, i32
  }
  func.func @transform_4(%arg0: i32, %arg1: i32) -> (i32, i32, i32) {
    %c0_i32 = arith.constant 0 : i32
    %c0_i32_0 = arith.constant 0 : i32
    %c0_i32_1 = arith.constant 0 : i32
    %c0_i32_2 = arith.constant 0 : i32
    return %c0_i32, %c0_i32_0, %c0_i32_1 : i32, i32, i32
  }
  func.func @transform_5(%arg0: i32, %arg1: i32) -> (i32, i32) {
    %c0_i32 = arith.constant 0 : i32
    %c0_i32_0 = arith.constant 0 : i32
    %c0_i32_1 = arith.constant 0 : i32
    return %c0_i32, %c0_i32_0 : i32, i32
  }
  func.func @transform_6(%arg0: i32, %arg1: i32) -> (i32, i32) {
    %c0_i32 = arith.constant 0 : i32
    %c0_i32_0 = arith.constant 0 : i32
    %c0_i32_1 = arith.constant 0 : i32
    return %c0_i32, %c0_i32_0 : i32, i32
  }
  func.func @transform_7(%arg0: i32, %arg1: i32) -> (i32, i32) {
    %c0_i32 = arith.constant 0 : i32
    %c0_i32_0 = arith.constant 0 : i32
    %c0_i32_1 = arith.constant 0 : i32
    return %c0_i32, %c0_i32_0 : i32, i32
  }
  func.func @transform_8(%arg0: i32, %arg1: i32) -> (i32, i32) {
    %c0_i32 = arith.constant 0 : i32
    %c0_i32_0 = arith.constant 0 : i32
    %c0_i32_1 = arith.constant 0 : i32
    return %c0_i32, %c0_i32_0 : i32, i32
  }
  func.func @transform_9(%arg0: i32, %arg1: i32) -> (i32, i32, i32, i32) {
    %c0_i32 = arith.constant 0 : i32
    %c0_i32_0 = arith.constant 0 : i32
    %c0_i32_1 = arith.constant 0 : i32
    return %arg0, %c0_i32, %arg1, %c0_i32_0 : i32, i32, i32, i32
  }
}

</mosaic_0001>

<llo_original>
// kernel: tpu_custom_call.1
$region0: #{tpu_custom_call.1}
  #allocation0 [shape = 'u32[]', space=smem, size = 0x4, offset = 0x4, fixed_abs, tag = 'smem constant byte address 0x4 - core index']
  #allocation1 [shape = 'u32[72,128]{1,0:T(1,128)}', space=vmem, size = 0x9000, scoped, tag = 'internal scratch']
  #allocation14 [shape = 's32[]', space=sflag, size = 0x4, offset = 0, fixed_abs, tag = 'sflag constant byte address 0x0 - dummy sync flag']
  #allocation16 [shape = 's32[]', space=sflag, size = 0x4, offset = 0, fixed_abs, tag = 'sflag constant byte address 0x0 - dummy sync flag']
  %s0 = inlined_call_operand.hbm [shape: bf16[2,4,64,128], index: 0, kind: input, shape index: {}]
  %s1 = inlined_call_operand.hbm [shape: bf16[2,4,64,128], index: 1, kind: input, shape index: {}]
  %s2 = inlined_call_operand.hbm [shape: bf16[2,4,64,128], index: 2, kind: input, shape index: {}]
  %s3 = inlined_call_operand.hbm [shape: bf16[3,128,128], index: 3, kind: input, shape index: {}]
  %s4 = inlined_call_operand.hbm [shape: bf16[3,384,128], index: 4, kind: input, shape index: {}]
  %s5 = inlined_call_operand.hbm [shape: bf16[128,128], index: 5, kind: input, shape index: {}]
  %s6 = inlined_call_operand.vmem [shape: f32[1,128], index: 6, kind: input, shape index: {}]
  %s7 = inlined_call_operand.vmem [shape: f32[1,128], index: 7, kind: input, shape index: {}]
  %s8 = inlined_call_operand.vmem [shape: f32[1,128], index: 8, kind: input, shape index: {}]
  %s9 = inlined_call_operand.hbm [shape: bf16[2,4,64,128], index: 9, kind: output, shape index: {}]
  %s10 = sld [smem:[#allocation0]]
  $region93: #{tpu_custom_call.1} parent=0
    _
  %s12 = ssub.s32 1, %s10
  %s13 = scalar_select 0, %s12, %s10
  $region1: #{tpu_custom_call.1} parent=0
    #allocation2 [shape = 'u8[65536]{0}', space=vmem, size = 0x10000, scoped, tag = 'input window, operand 0']
    #allocation3 [shape = 's32[2]{0}', space=sflag, size = 0x8, scoped, tag = 'scoped memory for tpu_custom_call.1']
    #allocation4 [shape = 's32[2]{0}', space=sflag, size = 0x8, scoped, tag = 'scoped memory for tpu_custom_call.1']
    #allocation5 [shape = 'u8[16384]{0}', space=vmem, size = 0x4000, scoped, tag = 'input window, operand 1']
    #allocation6 [shape = 's32[2]{0}', space=sflag, size = 0x8, scoped, tag = 'scoped memory for tpu_custom_call.1']
    #allocation7 [shape = 'u8[16384]{0}', space=vmem, size = 0x4000, scoped, tag = 'input window, operand 2']
    #allocation8 [shape = 'u8[98304]{0}', space=vmem, size = 0x18000, scoped, tag = 'input window, operand 3, single buffered']
    #allocation9 [shape = 's32[1]{0}', space=sflag, size = 0x4, scoped, tag = 'scoped memory for tpu_custom_call.1']
    #allocation10 [shape = 'u8[294912]{0}', space=vmem, size = 0x48000, scoped, tag = 'input window, operand 4, single buffered']
    #allocation11 [shape = 'u8[32768]{0}', space=vmem, size = 0x8000, scoped, tag = 'input window, operand 5, single buffered']
    #allocation12 [shape = 's32[1]{0}', space=sflag, size = 0x4, scoped, tag = 'scoped memory for tpu_custom_call.1']
    #allocation13 [shape = 'u8[65536]{0}', space=vmem, size = 0x10000, scoped, tag = 'output window, operand 0']
    %14 = vsyncpa [#allocation3], 0
    %s15 = scalar_lea.sflag [#allocation3], 1
    %16 = vsyncpa %s15, 0
    %17 = vsyncpa [#allocation6], 0
    %s18 = scalar_lea.sflag [#allocation6], 1
    %19 = vsyncpa %s18, 0
    %20 = vsyncpa [#allocation9], 0
    %21 = vsyncpa [#allocation12], 0
    %22 = vsyncpa [#allocation4], 0
    %s23 = scalar_lea.sflag [#allocation4], 1
    %24 = vsyncpa %s23, 0
    loop: start=0, step=1, limit=6
    $region2: #{tpu_custom_call.1} parent=1 // loop_pre_header
      _
    $region3: #{tpu_custom_call.1} parent=1 // loop_header
      %s26 = sphi 0, %s30
      %p27 = scmp.ge.s32.totalorder %s26, 6
      %s33 = sphi 0, %s45
      %s34 = sphi 0, %s41
      %s35 = sphi 0, %s33
      %s36 = sphi 0, %s34
      %s37 = sphi 0, %s35
      %s38 = sphi 0, %s36
      %s50 = sphi 0, %s52
      %s53 = sphi 0, %s50
      %s54 = sphi 0, %s53
      %s70 = sphi 0, %s54
      %s86 = sphi 0, %s88
      %s89 = sphi 0, %s86
      %s90 = sphi 0, %s89
      %s106 = sphi 0, %s90
      %s122 = sphi 0, %s124
      %s125 = sphi 0, %s122
      %s126 = sphi 0, %s125
      %s142 = sphi 0, %s126
      %s146 = sphi 0, %s146
      %s148 = sphi 0, %s146
      %s149 = sphi 0, %s148
      %s163 = sphi 0, %s149
      %s167 = sphi 0, %s167
      %s169 = sphi 0, %s167
      %s170 = sphi 0, %s169
      %s184 = sphi 0, %s170
      %s188 = sphi 0, %s188
      %s190 = sphi 0, %s188
      %s191 = sphi 0, %s190
      %s205 = sphi 0, %s191
      %s209 = sphi 0, %s209
      %s211 = sphi 0, %s209
      %s212 = sphi 0, %s211
      %s226 = sphi 0, %s212
      %s230 = sphi 0, %s230
      %s232 = sphi 0, %s230
      %s233 = sphi 0, %s232
      %s247 = sphi 0, %s233
      %s251 = sphi 0, %s251
      %s253 = sphi 0, %s251
      %s254 = sphi 0, %s253
      %s268 = sphi 0, %s254
      %s276 = sphi 0, %s278
      %s279 = sphi 0, %s276
      %s280 = sphi 0, %s279
      %s296 = sphi 0, %s280
    $region4: #{tpu_custom_call.1} parent=1 // loop_header_branch
      %29 = sbr.rel (%p27) target = $region8
    $region5: #{tpu_custom_call.1} parent=1 // loop_body
      %s31 = ssub.s32 %s26, 1
      %s32 = ssub.s32 %s26, 2
      %s39 = sadd.s32 1, %s34
      %p40 = scmp.ge.s32.totalorder %s39, 2
      %s41 = scalar_select %p40, 0, %s39
      %s42 = sadd.s32 1, %s33
      %s43 = scalar_select %p40, %s42, %s33
      %p44 = scmp.ge.s32.totalorder %s43, 2
      %s45 = scalar_select %p44, 0, %s43
      %s46 = ssub.s32 %s33, %s45
      %s47 = ssub.s32 %s34, %s41
      %s48 = sor.u32 %s46, %s47
      %p49 = scmp.eq.s32.totalorder %s48, 0
      %s51 = sadd.s32 %s50, 1
      %s52 = scalar_select %p49, %s50, %s51
      %p55 = pneg %p49
      %p56 = scmp.eq.s32.totalorder %s26, 3
      %p57 = por %p55, %p56
      %p58 = scmp.ne.s32.totalorder %s50, %s53
      %p59 = scmp.eq.s32.totalorder %s26, 0
      %p60 = por %p58, %p59
      %p61 = scmp.ne.s32.totalorder %s50, %s53
      %p62 = scmp.eq.s32.totalorder %s31, 3
      %p63 = por %p61, %p62
      %p64 = scmp.ne.s32.totalorder %s53, %s54
      %p65 = scmp.eq.s32.totalorder %s31, 0
      %p66 = por %p64, %p65
      %p67 = scmp.ne.s32.totalorder %s53, %s54
      %p68 = scmp.eq.s32.totalorder %s32, 3
      %p69 = por %p67, %p68
      %p71 = scmp.ne.s32.totalorder %s54, %s70
      %p72 = scmp.eq.s32.totalorder %s32, 0
      %p73 = por %p71, %p72
      %s74 = smul.u32 %s34, 4
      %s75 = ssub.s32 %s74, 1
      %p76 = scmp.gt.s32.totalorder %s75, 0
      %s77 = scalar_select %p76, %s75, 0
      %s78 = smul.u32 %s41, 4
      %s79 = ssub.s32 %s78, 1
      %p80 = scmp.gt.s32.totalorder %s79, 0
      %s81 = scalar_select %p80, %s79, 0
      %s82 = ssub.s32 %s33, %s45
      %s83 = ssub.s32 %s77, %s81
      %s84 = sor.u32 %s82, %s83
      %p85 = scmp.eq.s32.totalorder %s84, 0
      %s87 = sadd.s32 %s86, 1
      %s88 = scalar_select %p85, %s86, %s87
      %p91 = pneg %p85
      %p92 = scmp.eq.s32.totalorder %s26, 3
      %p93 = por %p91, %p92
      %p94 = scmp.ne.s32.totalorder %s86, %s89
      %p95 = scmp.eq.s32.totalorder %s26, 0
      %p96 = por %p94, %p95
      %p97 = scmp.ne.s32.totalorder %s86, %s89
      %p98 = scmp.eq.s32.totalorder %s31, 3
      %p99 = por %p97, %p98
      %p100 = scmp.ne.s32.totalorder %s89, %s90
      %p101 = scmp.eq.s32.totalorder %s31, 0
      %p102 = por %p100, %p101
      %p103 = scmp.ne.s32.totalorder %s89, %s90
      %p104 = scmp.eq.s32.totalorder %s32, 3
      %p105 = por %p103, %p104
      %p107 = scmp.ne.s32.totalorder %s90, %s106
      %p108 = scmp.eq.s32.totalorder %s32, 0
      %p109 = por %p107, %p108
      %s110 = sadd.s32 %s34, 1
      %s111 = smul.u32 %s110, 4
      %p112 = scmp.lt.s32.totalorder %s111, 7
      %s113 = scalar_select %p112, %s111, 7
      %s114 = sadd.s32 %s41, 1
      %s115 = smul.u32 %s114, 4
      %p116 = scmp.lt.s32.totalorder %s115, 7
      %s117 = scalar_select %p116, %s115, 7
      %s118 = ssub.s32 %s33, %s45
      %s119 = ssub.s32 %s113, %s117
      %s120 = sor.u32 %s118, %s119
      %p121 = scmp.eq.s32.totalorder %s120, 0
      %s123 = sadd.s32 %s122, 1
      %s124 = scalar_select %p121, %s122, %s123
      %p127 = pneg %p121
      %p128 = scmp.eq.s32.totalorder %s26, 3
      %p129 = por %p127, %p128
      %p130 = scmp.ne.s32.totalorder %s122, %s125
      %p131 = scmp.eq.s32.totalorder %s26, 0
      %p132 = por %p130, %p131
      %p133 = scmp.ne.s32.totalorder %s122, %s125
      %p134 = scmp.eq.s32.totalorder %s31, 3
      %p135 = por %p133, %p134
      %p136 = scmp.ne.s32.totalorder %s125, %s126
      %p137 = scmp.eq.s32.totalorder %s31, 0
      %p138 = por %p136, %p137
      %p139 = scmp.ne.s32.totalorder %s125, %s126
      %p140 = scmp.eq.s32.totalorder %s32, 3
      %p141 = por %p139, %p140
      %p143 = scmp.ne.s32.totalorder %s126, %s142
      %p144 = scmp.eq.s32.totalorder %s32, 0
      %p145 = por %p143, %p144
      %s147 = sadd.s32 %s146, 1
      %p150 = scmp.eq.s32.totalorder %s26, 3
      %p151 = scmp.ne.s32.totalorder %s146, %s148
      %p152 = scmp.eq.s32.totalorder %s26, 0
      %p153 = por %p151, %p152
      %p154 = scmp.ne.s32.totalorder %s146, %s148
      %p155 = scmp.eq.s32.totalorder %s31, 3
      %p156 = por %p154, %p155
      %p157 = scmp.ne.s32.totalorder %s148, %s149
      %p158 = scmp.eq.s32.totalorder %s31, 0
      %p159 = por %p157, %p158
      %p160 = scmp.ne.s32.totalorder %s148, %s149
      %p161 = scmp.eq.s32.totalorder %s32, 3
      %p162 = por %p160, %p161
      %p164 = scmp.ne.s32.totalorder %s149, %s163
      %p165 = scmp.eq.s32.totalorder %s32, 0
      %p166 = por %p164, %p165
      %s168 = sadd.s32 %s167, 1
      %p171 = scmp.eq.s32.totalorder %s26, 3
      %p172 = scmp.ne.s32.totalorder %s167, %s169
      %p173 = scmp.eq.s32.totalorder %s26, 0
      %p174 = por %p172, %p173
      %p175 = scmp.ne.s32.totalorder %s167, %s169
      %p176 = scmp.eq.s32.totalorder %s31, 3
      %p177 = por %p175, %p176
      %p178 = scmp.ne.s32.totalorder %s169, %s170
      %p179 = scmp.eq.s32.totalorder %s31, 0
      %p180 = por %p178, %p179
      %p181 = scmp.ne.s32.totalorder %s169, %s170
      %p182 = scmp.eq.s32.totalorder %s32, 3
      %p183 = por %p181, %p182
      %p185 = scmp.ne.s32.totalorder %s170, %s184
      %p186 = scmp.eq.s32.totalorder %s32, 0
      %p187 = por %p185, %p186
      %s189 = sadd.s32 %s188, 1
      %p192 = scmp.eq.s32.totalorder %s26, 3
      %p193 = scmp.ne.s32.totalorder %s188, %s190
      %p194 = scmp.eq.s32.totalorder %s26, 0
      %p195 = por %p193, %p194
      %p196 = scmp.ne.s32.totalorder %s188, %s190
      %p197 = scmp.eq.s32.totalorder %s31, 3
      %p198 = por %p196, %p197
      %p199 = scmp.ne.s32.totalorder %s190, %s191
      %p200 = scmp.eq.s32.totalorder %s31, 0
      %p201 = por %p199, %p200
      %p202 = scmp.ne.s32.totalorder %s190, %s191
      %p203 = scmp.eq.s32.totalorder %s32, 3
      %p204 = por %p202, %p203
      %p206 = scmp.ne.s32.totalorder %s191, %s205
      %p207 = scmp.eq.s32.totalorder %s32, 0
      %p208 = por %p206, %p207
      %s210 = sadd.s32 %s209, 1
      %p213 = scmp.eq.s32.totalorder %s26, 3
      %p214 = scmp.ne.s32.totalorder %s209, %s211
      %p215 = scmp.eq.s32.totalorder %s26, 0
      %p216 = por %p214, %p215
      %p217 = scmp.ne.s32.totalorder %s209, %s211
      %p218 = scmp.eq.s32.totalorder %s31, 3
      %p219 = por %p217, %p218
      %p220 = scmp.ne.s32.totalorder %s211, %s212
      %p221 = scmp.eq.s32.totalorder %s31, 0
      %p222 = por %p220, %p221
      %p223 = scmp.ne.s32.totalorder %s211, %s212
      %p224 = scmp.eq.s32.totalorder %s32, 3
      %p225 = por %p223, %p224
      %p227 = scmp.ne.s32.totalorder %s212, %s226
      %p228 = scmp.eq.s32.totalorder %s32, 0
      %p229 = por %p227, %p228
      %s231 = sadd.s32 %s230, 1
      %p234 = scmp.eq.s32.totalorder %s26, 3
      %p235 = scmp.ne.s32.totalorder %s230, %s232
      %p236 = scmp.eq.s32.totalorder %s26, 0
      %p237 = por %p235, %p236
      %p238 = scmp.ne.s32.totalorder %s230, %s232
      %p239 = scmp.eq.s32.totalorder %s31, 3
      %p240 = por %p238, %p239
      %p241 = scmp.ne.s32.totalorder %s232, %s233
      %p242 = scmp.eq.s32.totalorder %s31, 0
      %p243 = por %p241, %p242
      %p244 = scmp.ne.s32.totalorder %s232, %s233
      %p245 = scmp.eq.s32.totalorder %s32, 3
      %p246 = por %p244, %p245
      %p248 = scmp.ne.s32.totalorder %s233, %s247
      %p249 = scmp.eq.s32.totalorder %s32, 0
      %p250 = por %p248, %p249
      %s252 = sadd.s32 %s251, 1
      %p255 = scmp.eq.s32.totalorder %s26, 3
      %p256 = scmp.ne.s32.totalorder %s251, %s253
      %p257 = scmp.eq.s32.totalorder %s26, 0
      %p258 = por %p256, %p257
      %p259 = scmp.ne.s32.totalorder %s251, %s253
      %p260 = scmp.eq.s32.totalorder %s31, 3
      %p261 = por %p259, %p260
      %p262 = scmp.ne.s32.totalorder %s253, %s254
      %p263 = scmp.eq.s32.totalorder %s31, 0
      %p264 = por %p262, %p263
      %p265 = scmp.ne.s32.totalorder %s253, %s254
      %p266 = scmp.eq.s32.totalorder %s32, 3
      %p267 = por %p265, %p266
      %p269 = scmp.ne.s32.totalorder %s254, %s268
      %p270 = scmp.eq.s32.totalorder %s32, 0
      %p271 = por %p269, %p270
      %s272 = ssub.s32 %s33, %s45
      %s273 = ssub.s32 %s34, %s41
      %s274 = sor.u32 %s272, %s273
      %p275 = scmp.eq.s32.totalorder %s274, 0
      %s277 = sadd.s32 %s276, 1
      %s278 = scalar_select %p275, %s276, %s277
      %p281 = pneg %p275
      %p282 = scmp.eq.s32.totalorder %s26, 3
      %p283 = por %p281, %p282
      %p284 = scmp.ne.s32.totalorder %s276, %s279
      %p285 = scmp.eq.s32.totalorder %s26, 0
      %p286 = por %p284, %p285
      %p287 = scmp.ne.s32.totalorder %s276, %s279
      %p288 = scmp.eq.s32.totalorder %s31, 3
      %p289 = por %p287, %p288
      %p290 = scmp.ne.s32.totalorder %s279, %s280
      %p291 = scmp.eq.s32.totalorder %s31, 0
      %p292 = por %p290, %p291
      %p293 = scmp.ne.s32.totalorder %s279, %s280
      %p294 = scmp.eq.s32.totalorder %s32, 3
      %p295 = por %p293, %p294
      %p297 = scmp.ne.s32.totalorder %s280, %s296
      %p298 = scmp.eq.s32.totalorder %s32, 0
      %p299 = por %p297, %p298
      %p300 = scmp.le.s32.totalorder 1, %s26
      %p301 = scmp.lt.s32.totalorder %s26, 5
      %p302 = pnand %p300, %p301
      %p303 = pneg %p302
      // Predicated region
      $region9: #{tpu_custom_call.1} parent=5 // pred_check
        _
      $region10: #{tpu_custom_call.1} parent=5 // pred_check_branch
        %305 = sbr.rel (%p302) target = $region12
      $region11: #{tpu_custom_call.1} parent=5 // pred_region
        %s306 = ssub.s32 %s26, 1
        // Predicated region
        $region13: #{tpu_custom_call.1} parent=11 // pred_check
          %p307 = pneg %p159
        $region14: #{tpu_custom_call.1} parent=11 // pred_check_branch
          %309 = sbr.rel (%p307) target = $region16
        $region15: #{tpu_custom_call.1} parent=11 // pred_region
          %311 = vsyncadd [#allocation9], 0
          %s312 = sshll.u32 %s3, 4
          %s313 = int_to_ptr.hbm [resolvable:$true] %s312
          %s314 = sshll.u32 [#allocation8], 4
          %s315 = int_to_ptr.vmem [resolvable:$true] %s314
          %320 = dma.hbm_to_vmem [thread:$0]  %s313, 3072, %s315, [#allocation9], 64, 64, 4
        $region16: #{tpu_custom_call.1} parent=11 // pred_fallthru
          _
        // Predicated region
        $region17: #{tpu_custom_call.1} parent=11 // pred_check
          %p321 = pneg %p180
        $region18: #{tpu_custom_call.1} parent=11 // pred_check_branch
          %323 = sbr.rel (%p321) target = $region20
        $region19: #{tpu_custom_call.1} parent=11 // pred_region
          %325 = vsyncadd [#allocation9], 0
          %s326 = sshll.u32 %s4, 4
          %s327 = int_to_ptr.hbm [resolvable:$true] %s326
          %s328 = sshll.u32 [#allocation10], 4
          %s329 = int_to_ptr.vmem [resolvable:$true] %s328
          %334 = dma.hbm_to_vmem [thread:$0]  %s327, 9216, %s329, [#allocation9], 64, 64, 4
        $region20: #{tpu_custom_call.1} parent=11 // pred_fallthru
          _
        // Predicated region
        $region21: #{tpu_custom_call.1} parent=11 // pred_check
          %p335 = pneg %p201
        $region22: #{tpu_custom_call.1} parent=11 // pred_check_branch
          %337 = sbr.rel (%p335) target = $region24
        $region23: #{tpu_custom_call.1} parent=11 // pred_region
          %339 = vsyncadd [#allocation12], 0
          %s340 = sshll.u32 %s5, 4
          %s341 = int_to_ptr.hbm [resolvable:$true] %s340
          %s342 = sshll.u32 [#allocation11], 4
          %s343 = int_to_ptr.vmem [resolvable:$true] %s342
          %348 = dma.hbm_to_vmem [thread:$0]  %s341, 1024, %s343, [#allocation12], 64, 64, 4
        $region24: #{tpu_custom_call.1} parent=11 // pred_fallthru
          _
        // Predicated region
        $region25: #{tpu_custom_call.1} parent=11 // pred_check
          %p349 = pneg %p222
        $region26: #{tpu_custom_call.1} parent=11 // pred_check_branch
          %351 = sbr.rel (%p349) target = $region28
        $region27: #{tpu_custom_call.1} parent=11 // pred_region
          _
        $region28: #{tpu_custom_call.1} parent=11 // pred_fallthru
          _
        // Predicated region
        $region29: #{tpu_custom_call.1} parent=11 // pred_check
          %p352 = pneg %p243
        $region30: #{tpu_custom_call.1} parent=11 // pred_check_branch
          %354 = sbr.rel (%p352) target = $region32
        $region31: #{tpu_custom_call.1} parent=11 // pred_region
          _
        $region32: #{tpu_custom_call.1} parent=11 // pred_fallthru
          _
        // Predicated region
        $region33: #{tpu_custom_call.1} parent=11 // pred_check
          %p355 = pneg %p264
        $region34: #{tpu_custom_call.1} parent=11 // pred_check_branch
          %357 = sbr.rel (%p355) target = $region36
        $region35: #{tpu_custom_call.1} parent=11 // pred_region
          _
        $region36: #{tpu_custom_call.1} parent=11 // pred_fallthru
          _
      $region12: #{tpu_custom_call.1} parent=5 // pred_fallthru
        _
      %p358 = scmp.lt.s32.totalorder %s26, 4
      // Predicated region
      $region37: #{tpu_custom_call.1} parent=5 // pred_check
        %p359 = pneg %p358
      $region38: #{tpu_custom_call.1} parent=5 // pred_check_branch
        %361 = sbr.rel (%p359) target = $region40
      $region39: #{tpu_custom_call.1} parent=5 // pred_region
        // Predicated region
        $region41: #{tpu_custom_call.1} parent=39 // pred_check
          %p362 = pneg %p60
        $region42: #{tpu_custom_call.1} parent=39 // pred_check_branch
          %364 = sbr.rel (%p362) target = $region44
        $region43: #{tpu_custom_call.1} parent=39 // pred_region
          #allocation15 [shape = 'u32[6]{0}', space=smem, size = 0x18, scoped, tag = 'DMA stride descriptor']
          %s365 = sand.u32 %s50, 1
          %s366 = scalar_lea.sflag [#allocation3], %s365
          %s367 = sand.u32 %s50, 1
          %s368 = smul.addr %s367, 64
          %s369 = scalar_lea.vmem [#allocation2], %s368
          %s370 = smul.u32 4, %s34
          %372 = vsyncadd %s366, 0
          %s373 = smul.addr %s33, 32
          %s374 = sadd.s32 %s370, %s373
          %s375 = smul.addr %s374, 4
          %s376 = scalar_lea.hbm %s0, %s375
          %s378 = sshll.u32 1, 14
          %s379 = sxor.u32 4294967295, %s378
          %s381 = sld [smem:[#allocation0]]
          %s382 = sadd.s32 2, %s381
          %s384 = sshll.u32 7, 26
          %s385 = sxor.u32 4294967295, %s384
          %s386 = sand.u32 0, %s385
          %s387 = sshll.u32 %s382, 26
          %s388 = sor.u32 %s386, %s387
          %s389 = sshll.u32 %s376, 4
          %s390 = int_to_ptr.hbm [resolvable:$true] %s389
          %s391 = sshll.u32 %s369, 4
          %s392 = int_to_ptr.vmem [resolvable:$true] %s391
          %398 = sst [smem:[#allocation15]] 512
          %s399 = scalar_lea.smem [#allocation15], 1
          %400 = sst [smem:[%s399]] 256
          %s401 = scalar_lea.smem [#allocation15], 2
          %402 = sst [smem:[%s401]] 4
          %s403 = scalar_lea.smem [#allocation15], 3
          %404 = sst [smem:[%s403]] 64
          %s405 = scalar_lea.smem [#allocation15], 4
          %406 = sst [smem:[%s405]] 64
          %s407 = scalar_lea.smem [#allocation15], 5
          %408 = sst [smem:[%s407]] 4
          %410 = dma.general %s390, 1024, %s392, %s366, [#allocation14], [#allocation15], %s388, 0
        $region44: #{tpu_custom_call.1} parent=39 // pred_fallthru
          _
        // Predicated region
        $region45: #{tpu_custom_call.1} parent=39 // pred_check
          %p411 = pneg %p96
        $region46: #{tpu_custom_call.1} parent=39 // pred_check_branch
          %413 = sbr.rel (%p411) target = $region48
        $region47: #{tpu_custom_call.1} parent=39 // pred_region
          %s414 = sand.u32 %s26, 1
          %s415 = scalar_lea.sflag [#allocation6], %s414
          %s416 = sand.u32 %s86, 1
          %s417 = smul.addr %s416, 16
          %s418 = scalar_lea.vmem [#allocation5], %s417
          %s419 = smul.u32 %s34, 4
          %s420 = ssub.s32 %s419, 1
          %p421 = scmp.gt.s32.totalorder %s420, 0
          %s422 = scalar_select %p421, %s420, 0
          %424 = vsyncadd %s415, 0
          %s425 = smul.addr %s33, 32
          %s426 = sadd.s32 %s422, %s425
          %s427 = smul.addr %s426, 4
          %s428 = scalar_lea.hbm %s1, %s427
          %s429 = sshll.u32 %s428, 4
          %s430 = int_to_ptr.hbm [resolvable:$true] %s429
          %s431 = sshll.u32 %s418, 4
          %s432 = int_to_ptr.vmem [resolvable:$true] %s431
          %437 = dma.hbm_to_vmem [thread:$0]  %s430, 256, %s432, %s415, 512, 64, 4
        $region48: #{tpu_custom_call.1} parent=39 // pred_fallthru
          _
        // Predicated region
        $region49: #{tpu_custom_call.1} parent=39 // pred_check
          %p438 = pneg %p132
        $region50: #{tpu_custom_call.1} parent=39 // pred_check_branch
          %440 = sbr.rel (%p438) target = $region52
        $region51: #{tpu_custom_call.1} parent=39 // pred_region
          %s441 = sand.u32 %s26, 1
          %s442 = scalar_lea.sflag [#allocation6], %s441
          %s443 = sand.u32 %s122, 1
          %s444 = smul.addr %s443, 16
          %s445 = scalar_lea.vmem [#allocation7], %s444
          %s446 = sadd.s32 %s34, 1
          %s447 = smul.u32 %s446, 4
          %p448 = scmp.lt.s32.totalorder %s447, 7
          %s449 = scalar_select %p448, %s447, 7
          %451 = vsyncadd %s442, 0
          %s452 = smul.addr %s33, 32
          %s453 = sadd.s32 %s449, %s452
          %s454 = smul.addr %s453, 4
          %s455 = scalar_lea.hbm %s2, %s454
          %s456 = sshll.u32 %s455, 4
          %s457 = int_to_ptr.hbm [resolvable:$true] %s456
          %s458 = sshll.u32 %s445, 4
          %s459 = int_to_ptr.vmem [resolvable:$true] %s458
          %464 = dma.hbm_to_vmem [thread:$0]  %s457, 256, %s459, %s442, 512, 64, 4
        $region52: #{tpu_custom_call.1} parent=39 // pred_fallthru
          _
      $region40: #{tpu_custom_call.1} parent=5 // pred_fallthru
        _
      %p465 = scmp.le.s32.totalorder 1, %s26
      %p466 = scmp.lt.s32.totalorder %s26, 5
      %p467 = pnand %p465, %p466
      %p468 = pneg %p467
      // Predicated region
      $region53: #{tpu_custom_call.1} parent=5 // pred_check
        _
      $region54: #{tpu_custom_call.1} parent=5 // pred_check_branch
        %470 = sbr.rel (%p467) target = $region56
      $region55: #{tpu_custom_call.1} parent=5 // pred_region
        %s471 = ssub.s32 %s26, 1
        %s472 = sand.u32 %s53, 1
        %s473 = scalar_lea.sflag [#allocation3], %s472
        %s474 = sand.u32 %s53, 1
        %s475 = smul.addr %s474, 64
        %s476 = scalar_lea.vmem [#allocation2], %s475
        // Predicated region
        $region57: #{tpu_custom_call.1} parent=55 // pred_check
          %p477 = pneg %p66
        $region58: #{tpu_custom_call.1} parent=55 // pred_check_branch
          %479 = sbr.rel (%p477) target = $region60
        $region59: #{tpu_custom_call.1} parent=55 // pred_region
          %481 = dma.done %s473, 1024
        $region60: #{tpu_custom_call.1} parent=55 // pred_fallthru
          _
        %s482 = sand.u32 %s31, 1
        %s483 = scalar_lea.sflag [#allocation6], %s482
        %s484 = sand.u32 %s89, 1
        %s485 = smul.addr %s484, 16
        %s486 = scalar_lea.vmem [#allocation5], %s485
        // Predicated region
        $region61: #{tpu_custom_call.1} parent=55 // pred_check
          %p487 = pneg %p102
        $region62: #{tpu_custom_call.1} parent=55 // pred_check_branch
          %489 = sbr.rel (%p487) target = $region64
        $region63: #{tpu_custom_call.1} parent=55 // pred_region
          %491 = dma.done %s483, 256
        $region64: #{tpu_custom_call.1} parent=55 // pred_fallthru
          _
        %s492 = sand.u32 %s31, 1
        %s493 = scalar_lea.sflag [#allocation6], %s492
        %s494 = sand.u32 %s125, 1
        %s495 = smul.addr %s494, 16
        %s496 = scalar_lea.vmem [#allocation7], %s495
        // Predicated region
        $region65: #{tpu_custom_call.1} parent=55 // pred_check
          %p497 = pneg %p138
        $region66: #{tpu_custom_call.1} parent=55 // pred_check_branch
          %499 = sbr.rel (%p497) target = $region68
        $region67: #{tpu_custom_call.1} parent=55 // pred_region
          %501 = dma.done %s493, 256
        $region68: #{tpu_custom_call.1} parent=55 // pred_fallthru
          _
        // Predicated region
        $region69: #{tpu_custom_call.1} parent=55 // pred_check
          %p502 = pneg %p159
        $region70: #{tpu_custom_call.1} parent=55 // pred_check_branch
          %504 = sbr.rel (%p502) target = $region72
        $region71: #{tpu_custom_call.1} parent=55 // pred_region
          %506 = dma.done [#allocation9], 3072
        $region72: #{tpu_custom_call.1} parent=55 // pred_fallthru
          _
        // Predicated region
        $region73: #{tpu_custom_call.1} parent=55 // pred_check
          %p507 = pneg %p180
        $region74: #{tpu_custom_call.1} parent=55 // pred_check_branch
          %509 = sbr.rel (%p507) target = $region76
        $region75: #{tpu_custom_call.1} parent=55 // pred_region
          %511 = dma.done [#allocation9], 9216
        $region76: #{tpu_custom_call.1} parent=55 // pred_fallthru
          _
        // Predicated region
        $region77: #{tpu_custom_call.1} parent=55 // pred_check
          %p512 = pneg %p201
        $region78: #{tpu_custom_call.1} parent=55 // pred_check_branch
          %514 = sbr.rel (%p512) target = $region80
        $region79: #{tpu_custom_call.1} parent=55 // pred_region
          %516 = dma.done [#allocation12], 1024
        $region80: #{tpu_custom_call.1} parent=55 // pred_fallthru
          _
        %s517 = sand.u32 %s53, 1
        %s518 = scalar_lea.sflag [#allocation3], %s517
        %s519 = sand.u32 %s53, 1
        %s520 = smul.addr %s519, 64
        %s521 = scalar_lea.vmem [#allocation2], %s520
        %p522 = pneg %p66
        %p523 = pneg %p63
        %s524 = sand.u32 %s31, 1
        %s525 = scalar_lea.sflag [#allocation6], %s524
        %s526 = sand.u32 %s89, 1
        %s527 = smul.addr %s526, 16
        %s528 = scalar_lea.vmem [#allocation5], %s527
        %p529 = pneg %p102
        %p530 = pneg %p99
        %s531 = sand.u32 %s31, 1
        %s532 = scalar_lea.sflag [#allocation6], %s531
        %s533 = sand.u32 %s125, 1
        %s534 = smul.addr %s533, 16
        %s535 = scalar_lea.vmem [#allocation7], %s534
        %p536 = pneg %p138
        %p537 = pneg %p135
        %p538 = pneg %p159
        %p539 = pneg %p156
        %p540 = pneg %p180
        %p541 = pneg %p177
        %p542 = pneg %p201
        %p543 = pneg %p198
        %p544 = pneg %p222
        %p545 = pneg %p219
        %p546 = pneg %p243
        %p547 = pneg %p240
        %p548 = pneg %p264
        %p549 = pneg %p261
        %p550 = pneg %p292
        %p551 = pneg %p289
        %s552 = sand.u32 %s279, 1
        %s553 = scalar_lea.sflag [#allocation4], %s552
        %s554 = sand.u32 %s279, 1
        %s555 = smul.addr %s554, 64
        %s556 = scalar_lea.vmem [#allocation13], %s555
        %s557 = smul.u32 4, %s36
        %s558 = smul.u32 %s36, 4
        %s559 = ssub.s32 %s558, 1
        %p560 = scmp.gt.s32.totalorder %s559, 0
        %s561 = scalar_select %p560, %s559, 0
        %s562 = sadd.s32 %s36, 1
        %s563 = smul.u32 %s562, 4
        %p564 = scmp.lt.s32.totalorder %s563, 7
        %s565 = scalar_select %p564, %s563, 7
        %s566 = smul.u32 4, %s36
        %p567 = scmp.eq.s32.totalorder %s36, 0
        %p568 = scmp.eq.s32.totalorder %s36, 1
        %v569 = vld [vmem:[%s6] sm:$0x1]
        %v571 = vperm.slane %v569, 0
        %v573 = vld [vmem:[%s7] sm:$0x1]
        %v575 = vperm.slane %v573, 0
        %v577 = vld [vmem:[%s8] sm:$0x1]
        %v579 = vperm.slane %v577, 0
        %v581 = vlaneseq
        %v582 = vshrl.u32 %v581, 7
        %v583 = vadd.s32 %v582, 8
        %v584 = vadd.s32 %v582, 16
        %v585 = vadd.s32 %v582, 24
        %v586 = vadd.s32 %v582, 32
        %v587 = vadd.s32 %v582, 40
        %vm588 = vcmp.lt.s32.totalorder %v582, 0
        %v589 = vsub.s32 0, %v582
        %v590 = vsel %vm588, %v589, %v582
        %v591 = vshrl.u32 %v590, 3
        %v592 = vand.u32 %v590, 7
        %v593 = vsub.s32 0, %v592
        %v594 = vsel %vm588, %v593, %v592
        %vm595 = vcmp.lt.s32.totalorder %v583, 0
        %v596 = vsub.s32 0, %v583
        %v597 = vsel %vm595, %v596, %v583
        %v598 = vshrl.u32 %v597, 3
        %v599 = vand.u32 %v597, 7
        %v600 = vsub.s32 0, %v599
        %v601 = vsel %vm595, %v600, %v599
        %vm602 = vcmp.lt.s32.totalorder %v584, 0
        %v603 = vsub.s32 0, %v584
        %v604 = vsel %vm602, %v603, %v584
        %v605 = vshrl.u32 %v604, 3
        %v606 = vand.u32 %v604, 7
        %v607 = vsub.s32 0, %v606
        %v608 = vsel %vm602, %v607, %v606
        %vm609 = vcmp.lt.s32.totalorder %v585, 0
        %v610 = vsub.s32 0, %v585
        %v611 = vsel %vm609, %v610, %v585
        %v612 = vshrl.u32 %v611, 3
        %v613 = vand.u32 %v611, 7
        %v614 = vsub.s32 0, %v613
        %v615 = vsel %vm609, %v614, %v613
        %vm616 = vcmp.lt.s32.totalorder %v586, 0
        %v617 = vsub.s32 0, %v586
        %v618 = vsel %vm616, %v617, %v586
        %v619 = vshrl.u32 %v618, 3
        %v620 = vand.u32 %v618, 7
        %v621 = vsub.s32 0, %v620
        %v622 = vsel %vm616, %v621, %v620
        %vm623 = vcmp.lt.s32.totalorder %v587, 0
        %v624 = vsub.s32 0, %v587
        %v625 = vsel %vm623, %v624, %v587
        %v626 = vshrl.u32 %v625, 3
        %v627 = vand.u32 %v625, 7
        %v628 = vsub.s32 0, %v627
        %v629 = vsel %vm623, %v628, %v627
        %vm630 = vcmp.ne.s32.totalorder %v594, 0
        %vm631 = vcmp.ne.s32.totalorder %v601, 0
        %vm632 = vcmp.ne.s32.totalorder %v608, 0
        %vm633 = vcmp.ne.s32.totalorder %v615, 0
        %vm634 = vcmp.ne.s32.totalorder %v622, 0
        %vm635 = vcmp.ne.s32.totalorder %v629, 0
        %vm636 = vcmp.lt.s32.totalorder %v594, 0
        %vm637 = vcmp.lt.s32.totalorder %v601, 0
        %vm638 = vcmp.lt.s32.totalorder %v608, 0
        %vm639 = vcmp.lt.s32.totalorder %v615, 0
        %vm640 = vcmp.lt.s32.totalorder %v622, 0
        %vm641 = vcmp.lt.s32.totalorder %v629, 0
        %vm642 = vmand %vm636, %vm630
        %vm643 = vmand %vm637, %vm631
        %vm644 = vmand %vm638, %vm632
        %vm645 = vmand %vm639, %vm633
        %vm646 = vmand %vm640, %vm634
        %vm647 = vmand %vm641, %vm635
        %v648 = vadd.s32 %v594, 8
        %v649 = vadd.s32 %v601, 8
        %v650 = vadd.s32 %v608, 8
        %v651 = vadd.s32 %v615, 8
        %v652 = vadd.s32 %v622, 8
        %v653 = vadd.s32 %v629, 8
        %v654 = vsel %vm642, %v648, %v594
        %v655 = vsel %vm643, %v649, %v601
        %v656 = vsel %vm644, %v650, %v608
        %v657 = vsel %vm645, %v651, %v615
        %v658 = vsel %vm646, %v652, %v622
        %v659 = vsel %vm647, %v653, %v629
        %vm660 = vcmp.ne.s32.totalorder %v654, 0
        %vm661 = vcmp.ne.s32.totalorder %v655, 0
        %vm662 = vcmp.ne.s32.totalorder %v656, 0
        %vm663 = vcmp.ne.s32.totalorder %v657, 0
        %vm664 = vcmp.ne.s32.totalorder %v658, 0
        %vm665 = vcmp.ne.s32.totalorder %v659, 0
        %vm666 = vcmp.ne.s32.totalorder %v654, 7
        %vm667 = vcmp.ne.s32.totalorder %v655, 7
        %vm668 = vcmp.ne.s32.totalorder %v656, 7
        %vm669 = vcmp.ne.s32.totalorder %v657, 7
        %vm670 = vcmp.ne.s32.totalorder %v658, 7
        %vm671 = vcmp.ne.s32.totalorder %v659, 7
        %v672 = vld [vmem:[%s476] sm:$0xf]
        %v673 = vld [vmem:[%s476 + $0x4] sm:$0xf]
        %v674 = vld [vmem:[%s476 + $0x8] sm:$0xf]
        %v675 = vld [vmem:[%s476 + $0xc] sm:$0xf]
        %s676 = scalar_lea.vmem [#allocation8], 64
        %v677 = vld [vmem:[%s676] sm:$0xf]
        %v678 = vld [vmem:[%s676 + $0x4] sm:$0xf]
        %v679 = vld [vmem:[%s676 + $0x8] sm:$0xf]
        %v680 = vld [vmem:[%s676 + $0xc] sm:$0xf]
        %v681 = vld [vmem:[%s676 + $0x10] sm:$0xf]
        %v682 = vld [vmem:[%s676 + $0x14] sm:$0xf]
        %v683 = vld [vmem:[%s676 + $0x18] sm:$0xf]
        %v684 = vld [vmem:[%s676 + $0x1c] sm:$0xf]
        %v685 = vld [vmem:[%s676 + $0x20] sm:$0xf]
        %v686 = vld [vmem:[%s676 + $0x24] sm:$0xf]
        %v687 = vld [vmem:[%s676 + $0x28] sm:$0xf]
        %v688 = vld [vmem:[%s676 + $0x2c] sm:$0xf]
        %v689 = vld [vmem:[%s676 + $0x30] sm:$0xf]
        %v690 = vld [vmem:[%s676 + $0x34] sm:$0xf]
        %v691 = vld [vmem:[%s676 + $0x38] sm:$0xf]
        %v692 = vld [vmem:[%s676 + $0x3c] sm:$0xf]
        %s693 = scalar_lea.vmem %s476, 16 [#allocation2]
        %v694 = vld [vmem:[%s693] sm:$0xf]
        %v695 = vld [vmem:[%s693 + $0x4] sm:$0xf]
        %v696 = vld [vmem:[%s693 + $0x8] sm:$0xf]
        %v697 = vld [vmem:[%s693 + $0xc] sm:$0xf]
        %s698 = scalar_lea.vmem [#allocation8], 128
        %v699 = vld [vmem:[%s698] sm:$0xf]
        %v700 = vld [vmem:[%s698 + $0x4] sm:$0xf]
        %v701 = vld [vmem:[%s698 + $0x8] sm:$0xf]
        %v702 = vld [vmem:[%s698 + $0xc] sm:$0xf]
        %v703 = vld [vmem:[%s698 + $0x10] sm:$0xf]
        %v704 = vld [vmem:[%s698 + $0x14] sm:$0xf]
        %v705 = vld [vmem:[%s698 + $0x18] sm:$0xf]
        %v706 = vld [vmem:[%s698 + $0x1c] sm:$0xf]
        %v707 = vld [vmem:[%s698 + $0x20] sm:$0xf]
        %v708 = vld [vmem:[%s698 + $0x24] sm:$0xf]
        %v709 = vld [vmem:[%s698 + $0x28] sm:$0xf]
        %v710 = vld [vmem:[%s698 + $0x2c] sm:$0xf]
        %v711 = vld [vmem:[%s698 + $0x30] sm:$0xf]
        %v712 = vld [vmem:[%s698 + $0x34] sm:$0xf]
        %v713 = vld [vmem:[%s698 + $0x38] sm:$0xf]
        %v714 = vld [vmem:[%s698 + $0x3c] sm:$0xf]
        %v719 = vunpack.c.l.b16 %v694
        %v720 = vunpack.c.l.b16 %v695
        %v721 = vunpack.c.l.b16 %v696
        %v722 = vunpack.c.l.b16 %v697
        %v723 = vpack.c.b16 %v720, %v719
        %v724 = vpack.c.b16 %v722, %v721
        %v743 = vunpack.c.l.b16 %v699
        %v744 = vunpack.c.l.b16 %v700
        %v745 = vunpack.c.l.b16 %v701
        %v746 = vunpack.c.l.b16 %v702
        %v747 = vunpack.c.l.b16 %v703
        %v748 = vunpack.c.l.b16 %v704
        %v749 = vunpack.c.l.b16 %v705
        %v750 = vunpack.c.l.b16 %v706
        %v751 = vunpack.c.l.b16 %v707
        %v752 = vunpack.c.l.b16 %v708
        %v753 = vunpack.c.l.b16 %v709
        %v754 = vunpack.c.l.b16 %v710
        %v755 = vunpack.c.l.b16 %v711
        %v756 = vunpack.c.l.b16 %v712
        %v757 = vunpack.c.l.b16 %v713
        %v758 = vunpack.c.l.b16 %v714
        %v759 = vpack.c.b16 %v744, %v743
        %v760 = vpack.c.b16 %v746, %v745
        %v761 = vpack.c.b16 %v748, %v747
        %v762 = vpack.c.b16 %v750, %v749
        %v763 = vpack.c.b16 %v752, %v751
        %v764 = vpack.c.b16 %v754, %v753
        %v765 = vpack.c.b16 %v756, %v755
        %v766 = vpack.c.b16 %v758, %v757
        %775 = vmatpush.bf16.msra.mxu0 %v766
        %776 = vmatpush.bf16.msra.mxu0 %v765
        %777 = vmatpush.bf16.msra.mxu0 %v764
        %778 = vmatpush.bf16.msra.mxu0 %v763
        %779 = vmatpush.bf16.msra.mxu0 %v762
        %780 = vmatpush.bf16.msra.mxu0 %v761
        %781 = vmatpush.bf16.msra.mxu0 %v760
        %782 = vmatpush.bf16.msra.mxu0 %v759
        %783 = vmatmul.bf16.gmra.mxu0 %v723
        %v784 = vpop.f32.mrf.mxu0
        %v785 = vadd.f32 0.0, %v784
        %v786 = vpop.f32.mrf.mxu0
        %v787 = vadd.f32 0.0, %v786
        %788 = vmatmul.bf16.gmra.mxu0 %v724
        %v789 = vpop.f32.mrf.mxu0
        %v790 = vadd.f32 0.0, %v789
        %v791 = vpop.f32.mrf.mxu0
        %v792 = vadd.f32 0.0, %v791
        %793 = vdwg.mxu0
        %v798 = vunpack.c.l.b16 %v672
        %v799 = vunpack.c.l.b16 %v673
        %v800 = vunpack.c.l.b16 %v674
        %v801 = vunpack.c.l.b16 %v675
        %v802 = vpack.c.b16 %v799, %v798
        %v803 = vpack.c.b16 %v801, %v800
        %v822 = vunpack.c.l.b16 %v677
        %v823 = vunpack.c.l.b16 %v678
        %v824 = vunpack.c.l.b16 %v679
        %v825 = vunpack.c.l.b16 %v680
        %v826 = vunpack.c.l.b16 %v681
        %v827 = vunpack.c.l.b16 %v682
        %v828 = vunpack.c.l.b16 %v683
        %v829 = vunpack.c.l.b16 %v684
        %v830 = vunpack.c.l.b16 %v685
        %v831 = vunpack.c.l.b16 %v686
        %v832 = vunpack.c.l.b16 %v687
        %v833 = vunpack.c.l.b16 %v688
        %v834 = vunpack.c.l.b16 %v689
        %v835 = vunpack.c.l.b16 %v690
        %v836 = vunpack.c.l.b16 %v691
        %v837 = vunpack.c.l.b16 %v692
        %v838 = vpack.c.b16 %v823, %v822
        %v839 = vpack.c.b16 %v825, %v824
        %v840 = vpack.c.b16 %v827, %v826
        %v841 = vpack.c.b16 %v829, %v828
        %v842 = vpack.c.b16 %v831, %v830
        %v843 = vpack.c.b16 %v833, %v832
        %v844 = vpack.c.b16 %v835, %v834
        %v845 = vpack.c.b16 %v837, %v836
        %854 = vmatpush.bf16.msra.mxu0 %v845
        %855 = vmatpush.bf16.msra.mxu0 %v844
        %856 = vmatpush.bf16.msra.mxu0 %v843
        %857 = vmatpush.bf16.msra.mxu0 %v842
        %858 = vmatpush.bf16.msra.mxu0 %v841
        %859 = vmatpush.bf16.msra.mxu0 %v840
        %860 = vmatpush.bf16.msra.mxu0 %v839
        %861 = vmatpush.bf16.msra.mxu0 %v838
        %862 = vmatmul.bf16.gmra.mxu0 %v802
        %v863 = vpop.f32.mrf.mxu0
        %v864 = vadd.f32 %v785, %v863
        %v865 = vpop.f32.mrf.mxu0
        %v866 = vadd.f32 %v787, %v865
        %867 = vmatmul.bf16.gmra.mxu0 %v803
        %v868 = vpop.f32.mrf.mxu0
        %v869 = vadd.f32 %v790, %v868
        %v870 = vpop.f32.mrf.mxu0
        %v871 = vadd.f32 %v792, %v870
        %872 = vdwg.mxu0
        %v873 = vadd.f32 %v864, %v571
        %v874 = vadd.f32 %v866, %v571
        %v875 = vadd.f32 %v869, %v571
        %v876 = vadd.f32 %v871, %v571
        %v877 = vmax.f32 %v873, 0.0
        %v878 = vmax.f32 %v874, 0.0
        %v879 = vmax.f32 %v875, 0.0
        %v880 = vmax.f32 %v876, 0.0
        %v881 = vld [vmem:[%s486] sm:$0xf]
        %s882 = scalar_lea.vmem %s486, 4 [#allocation5]
        %v883 = vld [vmem:[%s882] sm:$0xf]
        %884 = vmatpush.bf16.msra.mxu0 %v766
        %885 = vmatpush.bf16.msra.mxu0 %v765
        %886 = vmatpush.bf16.msra.mxu0 %v764
        %887 = vmatpush.bf16.msra.mxu0 %v763
        %888 = vmatpush.bf16.msra.mxu0 %v762
        %889 = vmatpush.bf16.msra.mxu0 %v761
        %890 = vmatpush.bf16.msra.mxu0 %v760
        %891 = vmatpush.bf16.msra.mxu0 %v759
        %892 = vmatmul.bf16.gmra.mxu0 %v883
        %v893 = vpop.f32.mrf.mxu0
        %v894 = vadd.f32 0.0, %v893
        %v895 = vpop.f32.mrf.mxu0
        %896 = vdwg.mxu0
        %897 = vmatpush.bf16.msra.mxu0 %v845
        %898 = vmatpush.bf16.msra.mxu0 %v844
        %899 = vmatpush.bf16.msra.mxu0 %v843
        %900 = vmatpush.bf16.msra.mxu0 %v842
        %901 = vmatpush.bf16.msra.mxu0 %v841
        %902 = vmatpush.bf16.msra.mxu0 %v840
        %903 = vmatpush.bf16.msra.mxu0 %v839
        %904 = vmatpush.bf16.msra.mxu0 %v838
        %905 = vmatmul.bf16.gmra.mxu0 %v881
        %v906 = vpop.f32.mrf.mxu0
        %v907 = vadd.f32 %v894, %v906
        %v908 = vpop.f32.mrf.mxu0
        %909 = vdwg.mxu0
        %v910 = vadd.f32 %v907, %v571
        %v911 = vmax.f32 %v910, 0.0
        %s912 = scalar_select %p567, 1, 0
        %v913 = vstv %s912
        %vm914 = vcmp.eq.s32.totalorder %v913, 1
        %v915 = vsel %vm914, 0.0, %v911
        %v916 = vld [vmem:[%s496] sm:$0xf]
        %s917 = scalar_lea.vmem %s496, 4 [#allocation7]
        %v918 = vld [vmem:[%s917] sm:$0xf]
        %919 = vmatpush.bf16.msra.mxu0 %v766
        %920 = vmatpush.bf16.msra.mxu0 %v765
        %921 = vmatpush.bf16.msra.mxu0 %v764
        %922 = vmatpush.bf16.msra.mxu0 %v763
        %923 = vmatpush.bf16.msra.mxu0 %v762
        %924 = vmatpush.bf16.msra.mxu0 %v761
        %925 = vmatpush.bf16.msra.mxu0 %v760
        %926 = vmatpush.bf16.msra.mxu0 %v759
        %927 = vmatmul.bf16.gmra.mxu0 %v918
        %v928 = vpop.f32.mrf.mxu0
        %v929 = vadd.f32 0.0, %v928
        %v930 = vpop.f32.mrf.mxu0
        %931 = vdwg.mxu0
        %932 = vmatpush.bf16.msra.mxu0 %v845
        %933 = vmatpush.bf16.msra.mxu0 %v844
        %934 = vmatpush.bf16.msra.mxu0 %v843
        %935 = vmatpush.bf16.msra.mxu0 %v842
        %936 = vmatpush.bf16.msra.mxu0 %v841
        %937 = vmatpush.bf16.msra.mxu0 %v840
        %938 = vmatpush.bf16.msra.mxu0 %v839
        %939 = vmatpush.bf16.msra.mxu0 %v838
        %940 = vmatmul.bf16.gmra.mxu0 %v916
        %v941 = vpop.f32.mrf.mxu0
        %v942 = vadd.f32 %v929, %v941
        %v943 = vpop.f32.mrf.mxu0
        %944 = vdwg.mxu0
        %v945 = vadd.f32 %v942, %v571
        %v946 = vmax.f32 %v945, 0.0
        %s947 = scalar_select %p568, 1, 0
        %v948 = vstv %s947
        %vm949 = vcmp.eq.s32.totalorder %v948, 1
        %v950 = vsel %vm949, 0.0, %v946
        %vm957 = vcmask 1040384
        %v958 = vrot.slane %v915, 7
        %v959 = vrot.slane %v877, 7
        %v960 = vsel %vm957, %v958, %v959
        %v961 = vrot.slane %v878, 7
        %v962 = vsel %vm957, %v959, %v961
        %v963 = vrot.slane %v879, 7
        %v964 = vsel %vm957, %v961, %v963
        %v965 = vrot.slane %v880, 7
        %v966 = vsel %vm957, %v963, %v965
        %v967 = vrot.slane %v950, 7
        %v968 = vsel %vm957, %v965, %v967
        %v975 = vsel %vm957, 0.0, %v958
        %v976 = vsel %vm660, %v975, 0.0
        %v977 = vsel %vm661, %v960, 0.0
        %v978 = vsel %vm662, %v962, 0.0
        %v979 = vsel %vm663, %v964, 0.0
        %v980 = vsel %vm664, %v966, 0.0
        %v981 = vsel %vm665, %v968, 0.0
        %vm982 = vcmask 1046528
        %v983 = vrot.slane %v915, 1
        %v984 = vrot.slane %v877, 1
        %v985 = vsel %vm982, %v983, %v984
        %v986 = vrot.slane %v878, 1
        %v987 = vsel %vm982, %v984, %v986
        %v988 = vrot.slane %v879, 1
        %v989 = vsel %vm982, %v986, %v988
        %v990 = vrot.slane %v880, 1
        %v991 = vsel %vm982, %v988, %v990
        %v992 = vrot.slane %v950, 1
        %v993 = vsel %vm982, %v990, %v992
        %v1000 = vsel %vm982, %v992, 0.0
        %v1001 = vsel %vm666, %v985, 0.0
        %v1002 = vsel %vm667, %v987, 0.0
        %v1003 = vsel %vm668, %v989, 0.0
        %v1004 = vsel %vm669, %v991, 0.0
        %v1005 = vsel %vm670, %v993, 0.0
        %v1006 = vsel %vm671, %v1000, 0.0
        %v1007 = vpack.c.bf16 %v915, %v976
        %v1008 = vpack.c.bf16 %v1001, %v1001
        %v1009 = vpack.c.bf16 %v877, %v977
        %v1010 = vpack.c.bf16 %v1002, %v1002
        %v1011 = vpack.c.bf16 %v878, %v978
        %v1012 = vpack.c.bf16 %v1003, %v1003
        %v1013 = vpack.c.bf16 %v879, %v979
        %v1014 = vpack.c.bf16 %v1004, %v1004
        %v1015 = vpack.c.bf16 %v880, %v980
        %v1016 = vpack.c.bf16 %v1005, %v1005
        %v1017 = vpack.c.bf16 %v950, %v981
        %v1018 = vpack.c.bf16 %v1006, %v1006
        %v1019 = vld [vmem:[#allocation10] sm:$0xf]
        %v1020 = vld [vmem:[#allocation10 + $0x4] sm:$0xf]
        %v1021 = vld [vmem:[#allocation10 + $0x8] sm:$0xf]
        %v1022 = vld [vmem:[#allocation10 + $0xc] sm:$0xf]
        %v1023 = vld [vmem:[#allocation10 + $0x10] sm:$0xf]
        %v1024 = vld [vmem:[#allocation10 + $0x14] sm:$0xf]
        %v1025 = vld [vmem:[#allocation10 + $0x18] sm:$0xf]
        %v1026 = vld [vmem:[#allocation10 + $0x1c] sm:$0xf]
        %v1027 = vld [vmem:[#allocation10 + $0x20] sm:$0xf]
        %v1028 = vld [vmem:[#allocation10 + $0x24] sm:$0xf]
        %v1029 = vld [vmem:[#allocation10 + $0x28] sm:$0xf]
        %v1030 = vld [vmem:[#allocation10 + $0x2c] sm:$0xf]
        %v1031 = vld [vmem:[#allocation10 + $0x30] sm:$0xf]
        %v1032 = vld [vmem:[#allocation10 + $0x34] sm:$0xf]
        %v1033 = vld [vmem:[#allocation10 + $0x38] sm:$0xf]
        %v1034 = vld [vmem:[#allocation10 + $0x3c] sm:$0xf]
        %v1035 = vld [vmem:[#allocation10 + $0x40] sm:$0xf]
        %v1036 = vld [vmem:[#allocation10 + $0x44] sm:$0xf]
        %v1037 = vld [vmem:[#allocation10 + $0x48] sm:$0xf]
        %v1038 = vld [vmem:[#allocation10 + $0x4c] sm:$0xf]
        %v1039 = vld [vmem:[#allocation10 + $0x50] sm:$0xf]
        %v1040 = vld [vmem:[#allocation10 + $0x54] sm:$0xf]
        %v1041 = vld [vmem:[#allocation10 + $0x58] sm:$0xf]
        %v1042 = vld [vmem:[#allocation10 + $0x5c] sm:$0xf]
        %v1043 = vld [vmem:[#allocation10 + $0x60] sm:$0xf]
        %v1044 = vld [vmem:[#allocation10 + $0x64] sm:$0xf]
        %v1045 = vld [vmem:[#allocation10 + $0x68] sm:$0xf]
        %v1046 = vld [vmem:[#allocation10 + $0x6c] sm:$0xf]
        %v1047 = vld [vmem:[#allocation10 + $0x70] sm:$0xf]
        %v1048 = vld [vmem:[#allocation10 + $0x74] sm:$0xf]
        %v1049 = vld [vmem:[#allocation10 + $0x78] sm:$0xf]
        %v1050 = vld [vmem:[#allocation10 + $0x7c] sm:$0xf]
        %v1051 = vld [vmem:[#allocation10 + $0x80] sm:$0xf]
        %v1052 = vld [vmem:[#allocation10 + $0x84] sm:$0xf]
        %v1053 = vld [vmem:[#allocation10 + $0x88] sm:$0xf]
        %v1054 = vld [vmem:[#allocation10 + $0x8c] sm:$0xf]
        %v1055 = vld [vmem:[#allocation10 + $0x90] sm:$0xf]
        %v1056 = vld [vmem:[#allocation10 + $0x94] sm:$0xf]
        %v1057 = vld [vmem:[#allocation10 + $0x98] sm:$0xf]
        %v1058 = vld [vmem:[#allocation10 + $0x9c] sm:$0xf]
        %v1059 = vld [vmem:[#allocation10 + $0xa0] sm:$0xf]
        %v1060 = vld [vmem:[#allocation10 + $0xa4] sm:$0xf]
        %v1061 = vld [vmem:[#allocation10 + $0xa8] sm:$0xf]
        %v1062 = vld [vmem:[#allocation10 + $0xac] sm:$0xf]
        %v1063 = vld [vmem:[#allocation10 + $0xb0] sm:$0xf]
        %v1064 = vld [vmem:[#allocation10 + $0xb4] sm:$0xf]
        %v1065 = vld [vmem:[#allocation10 + $0xb8] sm:$0xf]
        %v1066 = vld [vmem:[#allocation10 + $0xbc] sm:$0xf]
        %s1067 = scalar_lea.vmem [#allocation10], 192
        %v1068 = vld [vmem:[%s1067] sm:$0xf]
        %v1069 = vld [vmem:[%s1067 + $0x4] sm:$0xf]
        %v1070 = vld [vmem:[%s1067 + $0x8] sm:$0xf]
        %v1071 = vld [vmem:[%s1067 + $0xc] sm:$0xf]
        %v1072 = vld [vmem:[%s1067 + $0x10] sm:$0xf]
        %v1073 = vld [vmem:[%s1067 + $0x14] sm:$0xf]
        %v1074 = vld [vmem:[%s1067 + $0x18] sm:$0xf]
        %v1075 = vld [vmem:[%s1067 + $0x1c] sm:$0xf]
        %v1076 = vld [vmem:[%s1067 + $0x20] sm:$0xf]
        %v1077 = vld [vmem:[%s1067 + $0x24] sm:$0xf]
        %v1078 = vld [vmem:[%s1067 + $0x28] sm:$0xf]
        %v1079 = vld [vmem:[%s1067 + $0x2c] sm:$0xf]
        %v1080 = vld [vmem:[%s1067 + $0x30] sm:$0xf]
        %v1081 = vld [vmem:[%s1067 + $0x34] sm:$0xf]
        %v1082 = vld [vmem:[%s1067 + $0x38] sm:$0xf]
        %v1083 = vld [vmem:[%s1067 + $0x3c] sm:$0xf]
        %v1084 = vld [vmem:[%s1067 + $0x40] sm:$0xf]
        %v1085 = vld [vmem:[%s1067 + $0x44] sm:$0xf]
        %v1086 = vld [vmem:[%s1067 + $0x48] sm:$0xf]
        %v1087 = vld [vmem:[%s1067 + $0x4c] sm:$0xf]
        %v1088 = vld [vmem:[%s1067 + $0x50] sm:$0xf]
        %v1089 = vld [vmem:[%s1067 + $0x54] sm:$0xf]
        %v1090 = vld [vmem:[%s1067 + $0x58] sm:$0xf]
        %v1091 = vld [vmem:[%s1067 + $0x5c] sm:$0xf]
        %v1092 = vld [vmem:[%s1067 + $0x60] sm:$0xf]
        %v1093 = vld [vmem:[%s1067 + $0x64] sm:$0xf]
        %v1094 = vld [vmem:[%s1067 + $0x68] sm:$0xf]
        %v1095 = vld [vmem:[%s1067 + $0x6c] sm:$0xf]
        %v1096 = vld [vmem:[%s1067 + $0x70] sm:$0xf]
        %v1097 = vld [vmem:[%s1067 + $0x74] sm:$0xf]
        %v1098 = vld [vmem:[%s1067 + $0x78] sm:$0xf]
        %v1099 = vld [vmem:[%s1067 + $0x7c] sm:$0xf]
        %v1100 = vld [vmem:[%s1067 + $0x80] sm:$0xf]
        %v1101 = vld [vmem:[%s1067 + $0x84] sm:$0xf]
        %v1102 = vld [vmem:[%s1067 + $0x88] sm:$0xf]
        %v1103 = vld [vmem:[%s1067 + $0x8c] sm:$0xf]
        %v1104 = vld [vmem:[%s1067 + $0x90] sm:$0xf]
        %v1105 = vld [vmem:[%s1067 + $0x94] sm:$0xf]
        %v1106 = vld [vmem:[%s1067 + $0x98] sm:$0xf]
        %v1107 = vld [vmem:[%s1067 + $0x9c] sm:$0xf]
        %v1108 = vld [vmem:[%s1067 + $0xa0] sm:$0xf]
        %v1109 = vld [vmem:[%s1067 + $0xa4] sm:$0xf]
        %v1110 = vld [vmem:[%s1067 + $0xa8] sm:$0xf]
        %v1111 = vld [vmem:[%s1067 + $0xac] sm:$0xf]
        %v1112 = vld [vmem:[%s1067 + $0xb0] sm:$0xf]
        %v1113 = vld [vmem:[%s1067 + $0xb4] sm:$0xf]
        %v1114 = vld [vmem:[%s1067 + $0xb8] sm:$0xf]
        %v1115 = vld [vmem:[%s1067 + $0xbc] sm:$0xf]
        %v1124 = vunpack.c.l.b16 %v1009
        %v1125 = vunpack.c.h.b16 %v1009
        %v1126 = vunpack.c.l.b16 %v1010
        %v1127 = vunpack.c.l.b16 %v1011
        %v1128 = vunpack.c.h.b16 %v1011
        %v1129 = vunpack.c.l.b16 %v1012
        %v1130 = vunpack.c.l.b16 %v1013
        %v1131 = vunpack.c.h.b16 %v1013
        %v1132 = vunpack.c.l.b16 %v1014
        %v1133 = vunpack.c.l.b16 %v1015
        %v1134 = vunpack.c.h.b16 %v1015
        %v1135 = vunpack.c.l.b16 %v1016
        %v1136 = vpack.c.b16 %v1127, %v1124
        %v1137 = vpack.c.b16 %v1128, %v1125
        %v1138 = vpack.c.b16 %v1129, %v1126
        %v1139 = vpack.c.b16 %v1133, %v1130
        %v1140 = vpack.c.b16 %v1134, %v1131
        %v1141 = vpack.c.b16 %v1135, %v1132
        %v1196 = vunpack.c.l.b16 %v1068
        %v1197 = vunpack.c.l.b16 %v1069
        %v1198 = vunpack.c.l.b16 %v1070
        %v1199 = vunpack.c.l.b16 %v1071
        %v1200 = vunpack.c.l.b16 %v1072
        %v1201 = vunpack.c.l.b16 %v1073
        %v1202 = vunpack.c.l.b16 %v1074
        %v1203 = vunpack.c.l.b16 %v1075
        %v1204 = vunpack.c.l.b16 %v1076
        %v1205 = vunpack.c.l.b16 %v1077
        %v1206 = vunpack.c.l.b16 %v1078
        %v1207 = vunpack.c.l.b16 %v1079
        %v1208 = vunpack.c.l.b16 %v1080
        %v1209 = vunpack.c.l.b16 %v1081
        %v1210 = vunpack.c.l.b16 %v1082
        %v1211 = vunpack.c.l.b16 %v1083
        %v1212 = vunpack.c.l.b16 %v1084
        %v1213 = vunpack.c.l.b16 %v1085
        %v1214 = vunpack.c.l.b16 %v1086
        %v1215 = vunpack.c.l.b16 %v1087
        %v1216 = vunpack.c.l.b16 %v1088
        %v1217 = vunpack.c.l.b16 %v1089
        %v1218 = vunpack.c.l.b16 %v1090
        %v1219 = vunpack.c.l.b16 %v1091
        %v1220 = vunpack.c.l.b16 %v1092
        %v1221 = vunpack.c.l.b16 %v1093
        %v1222 = vunpack.c.l.b16 %v1094
        %v1223 = vunpack.c.l.b16 %v1095
        %v1224 = vunpack.c.l.b16 %v1096
        %v1225 = vunpack.c.l.b16 %v1097
        %v1226 = vunpack.c.l.b16 %v1098
        %v1227 = vunpack.c.l.b16 %v1099
        %v1228 = vunpack.c.l.b16 %v1100
        %v1229 = vunpack.c.l.b16 %v1101
        %v1230 = vunpack.c.l.b16 %v1102
        %v1231 = vunpack.c.l.b16 %v1103
        %v1232 = vunpack.c.l.b16 %v1104
        %v1233 = vunpack.c.l.b16 %v1105
        %v1234 = vunpack.c.l.b16 %v1106
        %v1235 = vunpack.c.l.b16 %v1107
        %v1236 = vunpack.c.l.b16 %v1108
        %v1237 = vunpack.c.l.b16 %v1109
        %v1238 = vunpack.c.l.b16 %v1110
        %v1239 = vunpack.c.l.b16 %v1111
        %v1240 = vunpack.c.l.b16 %v1112
        %v1241 = vunpack.c.l.b16 %v1113
        %v1242 = vunpack.c.l.b16 %v1114
        %v1243 = vunpack.c.l.b16 %v1115
        %v1244 = vpack.c.b16 %v1197, %v1196
        %v1245 = vpack.c.b16 %v1199, %v1198
        %v1246 = vpack.c.b16 %v1201, %v1200
        %v1247 = vpack.c.b16 %v1203, %v1202
        %v1248 = vpack.c.b16 %v1205, %v1204
        %v1249 = vpack.c.b16 %v1207, %v1206
        %v1250 = vpack.c.b16 %v1209, %v1208
        %v1251 = vpack.c.b16 %v1211, %v1210
        %v1252 = vpack.c.b16 %v1213, %v1212
        %v1253 = vpack.c.b16 %v1215, %v1214
        %v1254 = vpack.c.b16 %v1217, %v1216
        %v1255 = vpack.c.b16 %v1219, %v1218
        %v1256 = vpack.c.b16 %v1221, %v1220
        %v1257 = vpack.c.b16 %v1223, %v1222
        %v1258 = vpack.c.b16 %v1225, %v1224
        %v1259 = vpack.c.b16 %v1227, %v1226
        %v1260 = vpack.c.b16 %v1229, %v1228
        %v1261 = vpack.c.b16 %v1231, %v1230
        %v1262 = vpack.c.b16 %v1233, %v1232
        %v1263 = vpack.c.b16 %v1235, %v1234
        %v1264 = vpack.c.b16 %v1237, %v1236
        %v1265 = vpack.c.b16 %v1239, %v1238
        %v1266 = vpack.c.b16 %v1241, %v1240
        %v1267 = vpack.c.b16 %v1243, %v1242
        %1292 = vmatpush.bf16.msra.mxu0 %v1251
        %1293 = vmatpush.bf16.msra.mxu0 %v1250
        %1294 = vmatpush.bf16.msra.mxu0 %v1249
        %1295 = vmatpush.bf16.msra.mxu0 %v1248
        %1296 = vmatpush.bf16.msra.mxu0 %v1247
        %1297 = vmatpush.bf16.msra.mxu0 %v1246
        %1298 = vmatpush.bf16.msra.mxu0 %v1245
        %1299 = vmatpush.bf16.msra.mxu0 %v1244
        %1300 = vmatmul.bf16.gmra.mxu0 %v1136
        %v1301 = vpop.f32.mrf.mxu0
        %v1302 = vadd.f32 0.0, %v1301
        %v1303 = vpop.f32.mrf.mxu0
        %v1304 = vadd.f32 0.0, %v1303
        %1305 = vmatmul.bf16.gmra.mxu0 %v1139
        %v1306 = vpop.f32.mrf.mxu0
        %v1307 = vadd.f32 0.0, %v1306
        %v1308 = vpop.f32.mrf.mxu0
        %v1309 = vadd.f32 0.0, %v1308
        %1310 = vdwg.mxu0
        %1311 = vmatpush.bf16.msra.mxu0 %v1259
        %1312 = vmatpush.bf16.msra.mxu0 %v1258
        %1313 = vmatpush.bf16.msra.mxu0 %v1257
        %1314 = vmatpush.bf16.msra.mxu0 %v1256
        %1315 = vmatpush.bf16.msra.mxu0 %v1255
        %1316 = vmatpush.bf16.msra.mxu0 %v1254
        %1317 = vmatpush.bf16.msra.mxu0 %v1253
        %1318 = vmatpush.bf16.msra.mxu0 %v1252
        %1319 = vmatmul.bf16.gmra.mxu0 %v1137
        %v1320 = vpop.f32.mrf.mxu0
        %v1321 = vadd.f32 %v1302, %v1320
        %v1322 = vpop.f32.mrf.mxu0
        %v1323 = vadd.f32 %v1304, %v1322
        %1324 = vmatmul.bf16.gmra.mxu0 %v1140
        %v1325 = vpop.f32.mrf.mxu0
        %v1326 = vadd.f32 %v1307, %v1325
        %v1327 = vpop.f32.mrf.mxu0
        %v1328 = vadd.f32 %v1309, %v1327
        %1329 = vdwg.mxu0
        %1330 = vmatpush.bf16.msra.mxu0 %v1267
        %1331 = vmatpush.bf16.msra.mxu0 %v1266
        %1332 = vmatpush.bf16.msra.mxu0 %v1265
        %1333 = vmatpush.bf16.msra.mxu0 %v1264
        %1334 = vmatpush.bf16.msra.mxu0 %v1263
        %1335 = vmatpush.bf16.msra.mxu0 %v1262
        %1336 = vmatpush.bf16.msra.mxu0 %v1261
        %1337 = vmatpush.bf16.msra.mxu0 %v1260
        %1338 = vmatmul.bf16.gmra.mxu0 %v1138
        %v1339 = vpop.f32.mrf.mxu0
        %v1340 = vadd.f32 %v1321, %v1339
        %v1341 = vpop.f32.mrf.mxu0
        %v1342 = vadd.f32 %v1323, %v1341
        %1343 = vmatmul.bf16.gmra.mxu0 %v1141
        %v1344 = vpop.f32.mrf.mxu0
        %v1345 = vadd.f32 %v1326, %v1344
        %v1346 = vpop.f32.mrf.mxu0
        %v1347 = vadd.f32 %v1328, %v1346
        %1348 = vdwg.mxu0
        %v1351 = vunpack.c.l.b16 %v1007
        %v1352 = vunpack.c.h.b16 %v1007
        %v1353 = vunpack.c.l.b16 %v1008
        %v1354 = vpack.c.b16 %v1124, %v1351
        %v1355 = vpack.c.b16 %v1125, %v1352
        %v1356 = vpack.c.b16 %v1126, %v1353
        %v1357 = vpack.c.b16 %v1130, %v1127
        %v1358 = vpack.c.b16 %v1131, %v1128
        %v1359 = vpack.c.b16 %v1132, %v1129
        %v1414 = vunpack.c.l.b16 %v1019
        %v1415 = vunpack.c.l.b16 %v1020
        %v1416 = vunpack.c.l.b16 %v1021
        %v1417 = vunpack.c.l.b16 %v1022
        %v1418 = vunpack.c.l.b16 %v1023
        %v1419 = vunpack.c.l.b16 %v1024
        %v1420 = vunpack.c.l.b16 %v1025
        %v1421 = vunpack.c.l.b16 %v1026
        %v1422 = vunpack.c.l.b16 %v1027
        %v1423 = vunpack.c.l.b16 %v1028
        %v1424 = vunpack.c.l.b16 %v1029
        %v1425 = vunpack.c.l.b16 %v1030
        %v1426 = vunpack.c.l.b16 %v1031
        %v1427 = vunpack.c.l.b16 %v1032
        %v1428 = vunpack.c.l.b16 %v1033
        %v1429 = vunpack.c.l.b16 %v1034
        %v1430 = vunpack.c.l.b16 %v1035
        %v1431 = vunpack.c.l.b16 %v1036
        %v1432 = vunpack.c.l.b16 %v1037
        %v1433 = vunpack.c.l.b16 %v1038
        %v1434 = vunpack.c.l.b16 %v1039
        %v1435 = vunpack.c.l.b16 %v1040
        %v1436 = vunpack.c.l.b16 %v1041
        %v1437 = vunpack.c.l.b16 %v1042
        %v1438 = vunpack.c.l.b16 %v1043
        %v1439 = vunpack.c.l.b16 %v1044
        %v1440 = vunpack.c.l.b16 %v1045
        %v1441 = vunpack.c.l.b16 %v1046
        %v1442 = vunpack.c.l.b16 %v1047
        %v1443 = vunpack.c.l.b16 %v1048
        %v1444 = vunpack.c.l.b16 %v1049
        %v1445 = vunpack.c.l.b16 %v1050
        %v1446 = vunpack.c.l.b16 %v1051
        %v1447 = vunpack.c.l.b16 %v1052
        %v1448 = vunpack.c.l.b16 %v1053
        %v1449 = vunpack.c.l.b16 %v1054
        %v1450 = vunpack.c.l.b16 %v1055
        %v1451 = vunpack.c.l.b16 %v1056
        %v1452 = vunpack.c.l.b16 %v1057
        %v1453 = vunpack.c.l.b16 %v1058
        %v1454 = vunpack.c.l.b16 %v1059
        %v1455 = vunpack.c.l.b16 %v1060
        %v1456 = vunpack.c.l.b16 %v1061
        %v1457 = vunpack.c.l.b16 %v1062
        %v1458 = vunpack.c.l.b16 %v1063
        %v1459 = vunpack.c.l.b16 %v1064
        %v1460 = vunpack.c.l.b16 %v1065
        %v1461 = vunpack.c.l.b16 %v1066
        %v1462 = vpack.c.b16 %v1415, %v1414
        %v1463 = vpack.c.b16 %v1417, %v1416
        %v1464 = vpack.c.b16 %v1419, %v1418
        %v1465 = vpack.c.b16 %v1421, %v1420
        %v1466 = vpack.c.b16 %v1423, %v1422
        %v1467 = vpack.c.b16 %v1425, %v1424
        %v1468 = vpack.c.b16 %v1427, %v1426
        %v1469 = vpack.c.b16 %v1429, %v1428
        %v1470 = vpack.c.b16 %v1431, %v1430
        %v1471 = vpack.c.b16 %v1433, %v1432
        %v1472 = vpack.c.b16 %v1435, %v1434
        %v1473 = vpack.c.b16 %v1437, %v1436
        %v1474 = vpack.c.b16 %v1439, %v1438
        %v1475 = vpack.c.b16 %v1441, %v1440
        %v1476 = vpack.c.b16 %v1443, %v1442
        %v1477 = vpack.c.b16 %v1445, %v1444
        %v1478 = vpack.c.b16 %v1447, %v1446
        %v1479 = vpack.c.b16 %v1449, %v1448
        %v1480 = vpack.c.b16 %v1451, %v1450
        %v1481 = vpack.c.b16 %v1453, %v1452
        %v1482 = vpack.c.b16 %v1455, %v1454
        %v1483 = vpack.c.b16 %v1457, %v1456
        %v1484 = vpack.c.b16 %v1459, %v1458
        %v1485 = vpack.c.b16 %v1461, %v1460
        %1510 = vmatpush.bf16.msra.mxu0 %v1469
        %1511 = vmatpush.bf16.msra.mxu0 %v1468
        %1512 = vmatpush.bf16.msra.mxu0 %v1467
        %1513 = vmatpush.bf16.msra.mxu0 %v1466
        %1514 = vmatpush.bf16.msra.mxu0 %v1465
        %1515 = vmatpush.bf16.msra.mxu0 %v1464
        %1516 = vmatpush.bf16.msra.mxu0 %v1463
        %1517 = vmatpush.bf16.msra.mxu0 %v1462
        %1518 = vmatmul.bf16.gmra.mxu0 %v1354
        %v1519 = vpop.f32.mrf.mxu0
        %v1520 = vadd.f32 %v1340, %v1519
        %v1521 = vpop.f32.mrf.mxu0
        %v1522 = vadd.f32 %v1342, %v1521
        %1523 = vmatmul.bf16.gmra.mxu0 %v1357
        %v1524 = vpop.f32.mrf.mxu0
        %v1525 = vadd.f32 %v1345, %v1524
        %v1526 = vpop.f32.mrf.mxu0
        %v1527 = vadd.f32 %v1347, %v1526
        %1528 = vdwg.mxu0
        %1529 = vmatpush.bf16.msra.mxu0 %v1477
        %1530 = vmatpush.bf16.msra.mxu0 %v1476
        %1531 = vmatpush.bf16.msra.mxu0 %v1475
        %1532 = vmatpush.bf16.msra.mxu0 %v1474
        %1533 = vmatpush.bf16.msra.mxu0 %v1473
        %1534 = vmatpush.bf16.msra.mxu0 %v1472
        %1535 = vmatpush.bf16.msra.mxu0 %v1471
        %1536 = vmatpush.bf16.msra.mxu0 %v1470
        %1537 = vmatmul.bf16.gmra.mxu0 %v1355
        %v1538 = vpop.f32.mrf.mxu0
        %v1539 = vadd.f32 %v1520, %v1538
        %v1540 = vpop.f32.mrf.mxu0
        %v1541 = vadd.f32 %v1522, %v1540
        %1542 = vmatmul.bf16.gmra.mxu0 %v1358
        %v1543 = vpop.f32.mrf.mxu0
        %v1544 = vadd.f32 %v1525, %v1543
        %v1545 = vpop.f32.mrf.mxu0
        %v1546 = vadd.f32 %v1527, %v1545
        %1547 = vdwg.mxu0
        %1548 = vmatpush.bf16.msra.mxu0 %v1485
        %1549 = vmatpush.bf16.msra.mxu0 %v1484
        %1550 = vmatpush.bf16.msra.mxu0 %v1483
        %1551 = vmatpush.bf16.msra.mxu0 %v1482
        %1552 = vmatpush.bf16.msra.mxu0 %v1481
        %1553 = vmatpush.bf16.msra.mxu0 %v1480
        %1554 = vmatpush.bf16.msra.mxu0 %v1479
        %1555 = vmatpush.bf16.msra.mxu0 %v1478
        %1556 = vmatmul.bf16.gmra.mxu0 %v1356
        %v1557 = vpop.f32.mrf.mxu0
        %v1558 = vadd.f32 %v1539, %v1557
        %v1559 = vpop.f32.mrf.mxu0
        %v1560 = vadd.f32 %v1541, %v1559
        %1561 = vmatmul.bf16.gmra.mxu0 %v1359
        %v1562 = vpop.f32.mrf.mxu0
        %v1563 = vadd.f32 %v1544, %v1562
        %v1564 = vpop.f32.mrf.mxu0
        %v1565 = vadd.f32 %v1546, %v1564
        %1566 = vdwg.mxu0
        %s1567 = scalar_lea.vmem [#allocation10], 384
        %v1568 = vld [vmem:[%s1567] sm:$0xf]
        %v1569 = vld [vmem:[%s1567 + $0x4] sm:$0xf]
        %v1570 = vld [vmem:[%s1567 + $0x8] sm:$0xf]
        %v1571 = vld [vmem:[%s1567 + $0xc] sm:$0xf]
        %v1572 = vld [vmem:[%s1567 + $0x10] sm:$0xf]
        %v1573 = vld [vmem:[%s1567 + $0x14] sm:$0xf]
        %v1574 = vld [vmem:[%s1567 + $0x18] sm:$0xf]
        %v1575 = vld [vmem:[%s1567 + $0x1c] sm:$0xf]
        %v1576 = vld [vmem:[%s1567 + $0x20] sm:$0xf]
        %v1577 = vld [vmem:[%s1567 + $0x24] sm:$0xf]
        %v1578 = vld [vmem:[%s1567 + $0x28] sm:$0xf]
        %v1579 = vld [vmem:[%s1567 + $0x2c] sm:$0xf]
        %v1580 = vld [vmem:[%s1567 + $0x30] sm:$0xf]
        %v1581 = vld [vmem:[%s1567 + $0x34] sm:$0xf]
        %v1582 = vld [vmem:[%s1567 + $0x38] sm:$0xf]
        %v1583 = vld [vmem:[%s1567 + $0x3c] sm:$0xf]
        %v1584 = vld [vmem:[%s1567 + $0x40] sm:$0xf]
        %v1585 = vld [vmem:[%s1567 + $0x44] sm:$0xf]
        %v1586 = vld [vmem:[%s1567 + $0x48] sm:$0xf]
        %v1587 = vld [vmem:[%s1567 + $0x4c] sm:$0xf]
        %v1588 = vld [vmem:[%s1567 + $0x50] sm:$0xf]
        %v1589 = vld [vmem:[%s1567 + $0x54] sm:$0xf]
        %v1590 = vld [vmem:[%s1567 + $0x58] sm:$0xf]
        %v1591 = vld [vmem:[%s1567 + $0x5c] sm:$0xf]
        %v1592 = vld [vmem:[%s1567 + $0x60] sm:$0xf]
        %v1593 = vld [vmem:[%s1567 + $0x64] sm:$0xf]
        %v1594 = vld [vmem:[%s1567 + $0x68] sm:$0xf]
        %v1595 = vld [vmem:[%s1567 + $0x6c] sm:$0xf]
        %v1596 = vld [vmem:[%s1567 + $0x70] sm:$0xf]
        %v1597 = vld [vmem:[%s1567 + $0x74] sm:$0xf]
        %v1598 = vld [vmem:[%s1567 + $0x78] sm:$0xf]
        %v1599 = vld [vmem:[%s1567 + $0x7c] sm:$0xf]
        %v1600 = vld [vmem:[%s1567 + $0x80] sm:$0xf]
        %v1601 = vld [vmem:[%s1567 + $0x84] sm:$0xf]
        %v1602 = vld [vmem:[%s1567 + $0x88] sm:$0xf]
        %v1603 = vld [vmem:[%s1567 + $0x8c] sm:$0xf]
        %v1604 = vld [vmem:[%s1567 + $0x90] sm:$0xf]
        %v1605 = vld [vmem:[%s1567 + $0x94] sm:$0xf]
        %v1606 = vld [vmem:[%s1567 + $0x98] sm:$0xf]
        %v1607 = vld [vmem:[%s1567 + $0x9c] sm:$0xf]
        %v1608 = vld [vmem:[%s1567 + $0xa0] sm:$0xf]
        %v1609 = vld [vmem:[%s1567 + $0xa4] sm:$0xf]
        %v1610 = vld [vmem:[%s1567 + $0xa8] sm:$0xf]
        %v1611 = vld [vmem:[%s1567 + $0xac] sm:$0xf]
        %v1612 = vld [vmem:[%s1567 + $0xb0] sm:$0xf]
        %v1613 = vld [vmem:[%s1567 + $0xb4] sm:$0xf]
        %v1614 = vld [vmem:[%s1567 + $0xb8] sm:$0xf]
        %v1615 = vld [vmem:[%s1567 + $0xbc] sm:$0xf]
        %v1618 = vunpack.c.l.b16 %v1017
        %v1619 = vunpack.c.h.b16 %v1017
        %v1620 = vunpack.c.l.b16 %v1018
        %v1621 = vpack.c.b16 %v1618, %v1133
        %v1622 = vpack.c.b16 %v1619, %v1134
        %v1623 = vpack.c.b16 %v1620, %v1135
        %v1675 = vunpack.c.l.b16 %v1568
        %v1676 = vunpack.c.l.b16 %v1569
        %v1677 = vunpack.c.l.b16 %v1570
        %v1678 = vunpack.c.l.b16 %v1571
        %v1679 = vunpack.c.l.b16 %v1572
        %v1680 = vunpack.c.l.b16 %v1573
        %v1681 = vunpack.c.l.b16 %v1574
        %v1682 = vunpack.c.l.b16 %v1575
        %v1683 = vunpack.c.l.b16 %v1576
        %v1684 = vunpack.c.l.b16 %v1577
        %v1685 = vunpack.c.l.b16 %v1578
        %v1686 = vunpack.c.l.b16 %v1579
        %v1687 = vunpack.c.l.b16 %v1580
        %v1688 = vunpack.c.l.b16 %v1581
        %v1689 = vunpack.c.l.b16 %v1582
        %v1690 = vunpack.c.l.b16 %v1583
        %v1691 = vunpack.c.l.b16 %v1584
        %v1692 = vunpack.c.l.b16 %v1585
        %v1693 = vunpack.c.l.b16 %v1586
        %v1694 = vunpack.c.l.b16 %v1587
        %v1695 = vunpack.c.l.b16 %v1588
        %v1696 = vunpack.c.l.b16 %v1589
        %v1697 = vunpack.c.l.b16 %v1590
        %v1698 = vunpack.c.l.b16 %v1591
        %v1699 = vunpack.c.l.b16 %v1592
        %v1700 = vunpack.c.l.b16 %v1593
        %v1701 = vunpack.c.l.b16 %v1594
        %v1702 = vunpack.c.l.b16 %v1595
        %v1703 = vunpack.c.l.b16 %v1596
        %v1704 = vunpack.c.l.b16 %v1597
        %v1705 = vunpack.c.l.b16 %v1598
        %v1706 = vunpack.c.l.b16 %v1599
        %v1707 = vunpack.c.l.b16 %v1600
        %v1708 = vunpack.c.l.b16 %v1601
        %v1709 = vunpack.c.l.b16 %v1602
        %v1710 = vunpack.c.l.b16 %v1603
        %v1711 = vunpack.c.l.b16 %v1604
        %v1712 = vunpack.c.l.b16 %v1605
        %v1713 = vunpack.c.l.b16 %v1606
        %v1714 = vunpack.c.l.b16 %v1607
        %v1715 = vunpack.c.l.b16 %v1608
        %v1716 = vunpack.c.l.b16 %v1609
        %v1717 = vunpack.c.l.b16 %v1610
        %v1718 = vunpack.c.l.b16 %v1611
        %v1719 = vunpack.c.l.b16 %v1612
        %v1720 = vunpack.c.l.b16 %v1613
        %v1721 = vunpack.c.l.b16 %v1614
        %v1722 = vunpack.c.l.b16 %v1615
        %v1723 = vpack.c.b16 %v1676, %v1675
        %v1724 = vpack.c.b16 %v1678, %v1677
        %v1725 = vpack.c.b16 %v1680, %v1679
        %v1726 = vpack.c.b16 %v1682, %v1681
        %v1727 = vpack.c.b16 %v1684, %v1683
        %v1728 = vpack.c.b16 %v1686, %v1685
        %v1729 = vpack.c.b16 %v1688, %v1687
        %v1730 = vpack.c.b16 %v1690, %v1689
        %v1731 = vpack.c.b16 %v1692, %v1691
        %v1732 = vpack.c.b16 %v1694, %v1693
        %v1733 = vpack.c.b16 %v1696, %v1695
        %v1734 = vpack.c.b16 %v1698, %v1697
        %v1735 = vpack.c.b16 %v1700, %v1699
        %v1736 = vpack.c.b16 %v1702, %v1701
        %v1737 = vpack.c.b16 %v1704, %v1703
        %v1738 = vpack.c.b16 %v1706, %v1705
        %v1739 = vpack.c.b16 %v1708, %v1707
        %v1740 = vpack.c.b16 %v1710, %v1709
        %v1741 = vpack.c.b16 %v1712, %v1711
        %v1742 = vpack.c.b16 %v1714, %v1713
        %v1743 = vpack.c.b16 %v1716, %v1715
        %v1744 = vpack.c.b16 %v1718, %v1717
        %v1745 = vpack.c.b16 %v1720, %v1719
        %v1746 = vpack.c.b16 %v1722, %v1721
        %1771 = vmatpush.bf16.msra.mxu0 %v1730
        %1772 = vmatpush.bf16.msra.mxu0 %v1729
        %1773 = vmatpush.bf16.msra.mxu0 %v1728
        %1774 = vmatpush.bf16.msra.mxu0 %v1727
        %1775 = vmatpush.bf16.msra.mxu0 %v1726
        %1776 = vmatpush.bf16.msra.mxu0 %v1725
        %1777 = vmatpush.bf16.msra.mxu0 %v1724
        %1778 = vmatpush.bf16.msra.mxu0 %v1723
        %1779 = vmatmul.bf16.gmra.mxu0 %v1357
        %v1780 = vpop.f32.mrf.mxu0
        %v1781 = vadd.f32 0.0, %v1780
        %v1782 = vpop.f32.mrf.mxu0
        %v1783 = vadd.f32 0.0, %v1782
        %1784 = vmatmul.bf16.gmra.mxu0 %v1621
        %v1785 = vpop.f32.mrf.mxu0
        %v1786 = vadd.f32 0.0, %v1785
        %v1787 = vpop.f32.mrf.mxu0
        %v1788 = vadd.f32 0.0, %v1787
        %1789 = vdwg.mxu0
        %1790 = vmatpush.bf16.msra.mxu0 %v1738
        %1791 = vmatpush.bf16.msra.mxu0 %v1737
        %1792 = vmatpush.bf16.msra.mxu0 %v1736
        %1793 = vmatpush.bf16.msra.mxu0 %v1735
        %1794 = vmatpush.bf16.msra.mxu0 %v1734
        %1795 = vmatpush.bf16.msra.mxu0 %v1733
        %1796 = vmatpush.bf16.msra.mxu0 %v1732
        %1797 = vmatpush.bf16.msra.mxu0 %v1731
        %1798 = vmatmul.bf16.gmra.mxu0 %v1358
        %v1799 = vpop.f32.mrf.mxu0
        %v1800 = vadd.f32 %v1781, %v1799
        %v1801 = vpop.f32.mrf.mxu0
        %v1802 = vadd.f32 %v1783, %v1801
        %1803 = vmatmul.bf16.gmra.mxu0 %v1622
        %v1804 = vpop.f32.mrf.mxu0
        %v1805 = vadd.f32 %v1786, %v1804
        %v1806 = vpop.f32.mrf.mxu0
        %v1807 = vadd.f32 %v1788, %v1806
        %1808 = vdwg.mxu0
        %1809 = vmatpush.bf16.msra.mxu0 %v1746
        %1810 = vmatpush.bf16.msra.mxu0 %v1745
        %1811 = vmatpush.bf16.msra.mxu0 %v1744
        %1812 = vmatpush.bf16.msra.mxu0 %v1743
        %1813 = vmatpush.bf16.msra.mxu0 %v1742
        %1814 = vmatpush.bf16.msra.mxu0 %v1741
        %1815 = vmatpush.bf16.msra.mxu0 %v1740
        %1816 = vmatpush.bf16.msra.mxu0 %v1739
        %1817 = vmatmul.bf16.gmra.mxu0 %v1359
        %v1818 = vpop.f32.mrf.mxu0
        %v1819 = vadd.f32 %v1800, %v1818
        %v1820 = vpop.f32.mrf.mxu0
        %v1821 = vadd.f32 %v1802, %v1820
        %1822 = vmatmul.bf16.gmra.mxu0 %v1623
        %v1823 = vpop.f32.mrf.mxu0
        %v1824 = vadd.f32 %v1805, %v1823
        %v1825 = vpop.f32.mrf.mxu0
        %v1826 = vadd.f32 %v1807, %v1825
        %1827 = vdwg.mxu0
        %v1828 = vadd.f32 %v1558, %v1819
        %v1829 = vadd.f32 %v1560, %v1821
        %v1830 = vadd.f32 %v1563, %v1824
        %v1831 = vadd.f32 %v1565, %v1826
        %v1832 = vadd.f32 %v1828, %v575
        %v1833 = vadd.f32 %v1829, %v575
        %v1834 = vadd.f32 %v1830, %v575
        %v1835 = vadd.f32 %v1831, %v575
        %v1836 = vmax.f32 %v1832, 0.0
        %v1837 = vmax.f32 %v1833, 0.0
        %v1838 = vmax.f32 %v1834, 0.0
        %v1839 = vmax.f32 %v1835, 0.0
        %v1840 = vpack.c.bf16 %v1837, %v1836
        %v1841 = vpack.c.bf16 %v1839, %v1838
        %v1842 = vld [vmem:[#allocation11] sm:$0xf]
        %v1843 = vld [vmem:[#allocation11 + $0x4] sm:$0xf]
        %v1844 = vld [vmem:[#allocation11 + $0x8] sm:$0xf]
        %v1845 = vld [vmem:[#allocation11 + $0xc] sm:$0xf]
        %v1846 = vld [vmem:[#allocation11 + $0x10] sm:$0xf]
        %v1847 = vld [vmem:[#allocation11 + $0x14] sm:$0xf]
        %v1848 = vld [vmem:[#allocation11 + $0x18] sm:$0xf]
        %v1849 = vld [vmem:[#allocation11 + $0x1c] sm:$0xf]
        %v1850 = vld [vmem:[#allocation11 + $0x20] sm:$0xf]
        %v1851 = vld [vmem:[#allocation11 + $0x24] sm:$0xf]
        %v1852 = vld [vmem:[#allocation11 + $0x28] sm:$0xf]
        %v1853 = vld [vmem:[#allocation11 + $0x2c] sm:$0xf]
        %v1854 = vld [vmem:[#allocation11 + $0x30] sm:$0xf]
        %v1855 = vld [vmem:[#allocation11 + $0x34] sm:$0xf]
        %v1856 = vld [vmem:[#allocation11 + $0x38] sm:$0xf]
        %v1857 = vld [vmem:[#allocation11 + $0x3c] sm:$0xf]
        %v1874 = vunpack.c.l.b16 %v1842
        %v1875 = vunpack.c.l.b16 %v1843
        %v1876 = vunpack.c.l.b16 %v1844
        %v1877 = vunpack.c.l.b16 %v1845
        %v1878 = vunpack.c.l.b16 %v1846
        %v1879 = vunpack.c.l.b16 %v1847
        %v1880 = vunpack.c.l.b16 %v1848
        %v1881 = vunpack.c.l.b16 %v1849
        %v1882 = vunpack.c.l.b16 %v1850
        %v1883 = vunpack.c.l.b16 %v1851
        %v1884 = vunpack.c.l.b16 %v1852
        %v1885 = vunpack.c.l.b16 %v1853
        %v1886 = vunpack.c.l.b16 %v1854
        %v1887 = vunpack.c.l.b16 %v1855
        %v1888 = vunpack.c.l.b16 %v1856
        %v1889 = vunpack.c.l.b16 %v1857
        %v1890 = vpack.c.b16 %v1875, %v1874
        %v1891 = vpack.c.b16 %v1877, %v1876
        %v1892 = vpack.c.b16 %v1879, %v1878
        %v1893 = vpack.c.b16 %v1881, %v1880
        %v1894 = vpack.c.b16 %v1883, %v1882
        %v1895 = vpack.c.b16 %v1885, %v1884
        %v1896 = vpack.c.b16 %v1887, %v1886
        %v1897 = vpack.c.b16 %v1889, %v1888
        %1906 = vmatpush.bf16.msra.mxu0 %v1897
        %1907 = vmatpush.bf16.msra.mxu0 %v1896
        %1908 = vmatpush.bf16.msra.mxu0 %v1895
        %1909 = vmatpush.bf16.msra.mxu0 %v1894
        %1910 = vmatpush.bf16.msra.mxu0 %v1893
        %1911 = vmatpush.bf16.msra.mxu0 %v1892
        %1912 = vmatpush.bf16.msra.mxu0 %v1891
        %1913 = vmatpush.bf16.msra.mxu0 %v1890
        %1914 = vmatmul.bf16.gmra.mxu0 %v1840
        %v1915 = vpop.f32.mrf.mxu0
        %v1916 = vadd.f32 %v579, %v1915
        %v1917 = vpop.f32.mrf.mxu0
        %v1918 = vadd.f32 %v579, %v1917
        %1919 = vmatmul.bf16.gmra.mxu0 %v1841
        %v1920 = vpop.f32.mrf.mxu0
        %v1921 = vadd.f32 %v579, %v1920
        %v1922 = vpop.f32.mrf.mxu0
        %v1923 = vadd.f32 %v579, %v1922
        %1924 = vdwg.mxu0
        %v1925 = vunpack.c.l.bf16 %v672
        %v1926 = vunpack.c.l.bf16 %v673
        %v1927 = vunpack.c.l.bf16 %v674
        %v1928 = vunpack.c.l.bf16 %v675
        %v1929 = vadd.f32 %v1916, %v1925
        %v1930 = vadd.f32 %v1918, %v1926
        %v1931 = vadd.f32 %v1921, %v1927
        %v1932 = vadd.f32 %v1923, %v1928
        %v1933 = vmax.f32 %v1929, 0.0
        %v1934 = vmax.f32 %v1930, 0.0
        %v1935 = vmax.f32 %v1931, 0.0
        %v1936 = vmax.f32 %v1932, 0.0
        %v1937 = vpack.c.bf16 %v1933, %v1933
        %v1938 = vpack.c.bf16 %v1934, %v1934
        %v1939 = vpack.c.bf16 %v1935, %v1935
        %v1940 = vpack.c.bf16 %v1936, %v1936
        %1941 = vst [vmem:[%s556] sm:$0xf] %v1937
        %1942 = vst [vmem:[%s556 + $0x4] sm:$0xf] %v1938
        %1943 = vst [vmem:[%s556 + $0x8] sm:$0xf] %v1939
        %1944 = vst [vmem:[%s556 + $0xc] sm:$0xf] %v1940
        %v1945 = vld [vmem:[%s693] sm:$0xf]
        %v1946 = vld [vmem:[%s693 + $0x4] sm:$0xf]
        %v1947 = vld [vmem:[%s693 + $0x8] sm:$0xf]
        %v1948 = vld [vmem:[%s693 + $0xc] sm:$0xf]
        %v1949 = vld [vmem:[%s676] sm:$0xf]
        %v1950 = vld [vmem:[%s676 + $0x4] sm:$0xf]
        %v1951 = vld [vmem:[%s676 + $0x8] sm:$0xf]
        %v1952 = vld [vmem:[%s676 + $0xc] sm:$0xf]
        %v1953 = vld [vmem:[%s676 + $0x10] sm:$0xf]
        %v1954 = vld [vmem:[%s676 + $0x14] sm:$0xf]
        %v1955 = vld [vmem:[%s676 + $0x18] sm:$0xf]
        %v1956 = vld [vmem:[%s676 + $0x1c] sm:$0xf]
        %v1957 = vld [vmem:[%s676 + $0x20] sm:$0xf]
        %v1958 = vld [vmem:[%s676 + $0x24] sm:$0xf]
        %v1959 = vld [vmem:[%s676 + $0x28] sm:$0xf]
        %v1960 = vld [vmem:[%s676 + $0x2c] sm:$0xf]
        %v1961 = vld [vmem:[%s676 + $0x30] sm:$0xf]
        %v1962 = vld [vmem:[%s676 + $0x34] sm:$0xf]
        %v1963 = vld [vmem:[%s676 + $0x38] sm:$0xf]
        %v1964 = vld [vmem:[%s676 + $0x3c] sm:$0xf]
        %v1965 = vld [vmem:[%s476] sm:$0xf]
        %v1966 = vld [vmem:[%s476 + $0x4] sm:$0xf]
        %v1967 = vld [vmem:[%s476 + $0x8] sm:$0xf]
        %v1968 = vld [vmem:[%s476 + $0xc] sm:$0xf]
        %v1969 = vld [vmem:[#allocation8] sm:$0xf]
        %v1970 = vld [vmem:[#allocation8 + $0x4] sm:$0xf]
        %v1971 = vld [vmem:[#allocation8 + $0x8] sm:$0xf]
        %v1972 = vld [vmem:[#allocation8 + $0xc] sm:$0xf]
        %v1973 = vld [vmem:[#allocation8 + $0x10] sm:$0xf]
        %v1974 = vld [vmem:[#allocation8 + $0x14] sm:$0xf]
        %v1975 = vld [vmem:[#allocation8 + $0x18] sm:$0xf]
        %v1976 = vld [vmem:[#allocation8 + $0x1c] sm:$0xf]
        %v1977 = vld [vmem:[#allocation8 + $0x20] sm:$0xf]
        %v1978 = vld [vmem:[#allocation8 + $0x24] sm:$0xf]
        %v1979 = vld [vmem:[#allocation8 + $0x28] sm:$0xf]
        %v1980 = vld [vmem:[#allocation8 + $0x2c] sm:$0xf]
        %v1981 = vld [vmem:[#allocation8 + $0x30] sm:$0xf]
        %v1982 = vld [vmem:[#allocation8 + $0x34] sm:$0xf]
        %v1983 = vld [vmem:[#allocation8 + $0x38] sm:$0xf]
        %v1984 = vld [vmem:[#allocation8 + $0x3c] sm:$0xf]
        %v1989 = vunpack.c.l.b16 %v1965
        %v1990 = vunpack.c.l.b16 %v1966
        %v1991 = vunpack.c.l.b16 %v1967
        %v1992 = vunpack.c.l.b16 %v1968
        %v1993 = vpack.c.b16 %v1990, %v1989
        %v1994 = vpack.c.b16 %v1992, %v1991
        %v2013 = vunpack.c.l.b16 %v1969
        %v2014 = vunpack.c.l.b16 %v1970
        %v2015 = vunpack.c.l.b16 %v1971
        %v2016 = vunpack.c.l.b16 %v1972
        %v2017 = vunpack.c.l.b16 %v1973
        %v2018 = vunpack.c.l.b16 %v1974
        %v2019 = vunpack.c.l.b16 %v1975
        %v2020 = vunpack.c.l.b16 %v1976
        %v2021 = vunpack.c.l.b16 %v1977
        %v2022 = vunpack.c.l.b16 %v1978
        %v2023 = vunpack.c.l.b16 %v1979
        %v2024 = vunpack.c.l.b16 %v1980
        %v2025 = vunpack.c.l.b16 %v1981
        %v2026 = vunpack.c.l.b16 %v1982
        %v2027 = vunpack.c.l.b16 %v1983
        %v2028 = vunpack.c.l.b16 %v1984
        %v2029 = vpack.c.b16 %v2014, %v2013
        %v2030 = vpack.c.b16 %v2016, %v2015
        %v2031 = vpack.c.b16 %v2018, %v2017
        %v2032 = vpack.c.b16 %v2020, %v2019
        %v2033 = vpack.c.b16 %v2022, %v2021
        %v2034 = vpack.c.b16 %v2024, %v2023
        %v2035 = vpack.c.b16 %v2026, %v2025
        %v2036 = vpack.c.b16 %v2028, %v2027
        %2045 = vmatpush.bf16.msra.mxu0 %v2036
        %2046 = vmatpush.bf16.msra.mxu0 %v2035
        %2047 = vmatpush.bf16.msra.mxu0 %v2034
        %2048 = vmatpush.bf16.msra.mxu0 %v2033
        %2049 = vmatpush.bf16.msra.mxu0 %v2032
        %2050 = vmatpush.bf16.msra.mxu0 %v2031
        %2051 = vmatpush.bf16.msra.mxu0 %v2030
        %2052 = vmatpush.bf16.msra.mxu0 %v2029
        %2053 = vmatmul.bf16.gmra.mxu0 %v1993
        %v2054 = vpop.f32.mrf.mxu0
        %v2055 = vadd.f32 0.0, %v2054
        %v2056 = vpop.f32.mrf.mxu0
        %v2057 = vadd.f32 0.0, %v2056
        %2058 = vmatmul.bf16.gmra.mxu0 %v1994
        %v2059 = vpop.f32.mrf.mxu0
        %v2060 = vadd.f32 0.0, %v2059
        %v2061 = vpop.f32.mrf.mxu0
        %v2062 = vadd.f32 0.0, %v2061
        %2063 = vdwg.mxu0
        %v2068 = vunpack.c.l.b16 %v1945
        %v2069 = vunpack.c.l.b16 %v1946
        %v2070 = vunpack.c.l.b16 %v1947
        %v2071 = vunpack.c.l.b16 %v1948
        %v2072 = vpack.c.b16 %v2069, %v2068
        %v2073 = vpack.c.b16 %v2071, %v2070
        %v2092 = vunpack.c.l.b16 %v1949
        %v2093 = vunpack.c.l.b16 %v1950
        %v2094 = vunpack.c.l.b16 %v1951
        %v2095 = vunpack.c.l.b16 %v1952
        %v2096 = vunpack.c.l.b16 %v1953
        %v2097 = vunpack.c.l.b16 %v1954
        %v2098 = vunpack.c.l.b16 %v1955
        %v2099 = vunpack.c.l.b16 %v1956
        %v2100 = vunpack.c.l.b16 %v1957
        %v2101 = vunpack.c.l.b16 %v1958
        %v2102 = vunpack.c.l.b16 %v1959
        %v2103 = vunpack.c.l.b16 %v1960
        %v2104 = vunpack.c.l.b16 %v1961
        %v2105 = vunpack.c.l.b16 %v1962
        %v2106 = vunpack.c.l.b16 %v1963
        %v2107 = vunpack.c.l.b16 %v1964
        %v2108 = vpack.c.b16 %v2093, %v2092
        %v2109 = vpack.c.b16 %v2095, %v2094
        %v2110 = vpack.c.b16 %v2097, %v2096
        %v2111 = vpack.c.b16 %v2099, %v2098
        %v2112 = vpack.c.b16 %v2101, %v2100
        %v2113 = vpack.c.b16 %v2103, %v2102
        %v2114 = vpack.c.b16 %v2105, %v2104
        %v2115 = vpack.c.b16 %v2107, %v2106
        %2124 = vmatpush.bf16.msra.mxu0 %v2115
        %2125 = vmatpush.bf16.msra.mxu0 %v2114
        %2126 = vmatpush.bf16.msra.mxu0 %v2113
        %2127 = vmatpush.bf16.msra.mxu0 %v2112
        %2128 = vmatpush.bf16.msra.mxu0 %v2111
        %2129 = vmatpush.bf16.msra.mxu0 %v2110
        %2130 = vmatpush.bf16.msra.mxu0 %v2109
        %2131 = vmatpush.bf16.msra.mxu0 %v2108
        %2132 = vmatmul.bf16.gmra.mxu0 %v2072
        %v2133 = vpop.f32.mrf.mxu0
        %v2134 = vadd.f32 %v2055, %v2133
        %v2135 = vpop.f32.mrf.mxu0
        %v2136 = vadd.f32 %v2057, %v2135
        %2137 = vmatmul.bf16.gmra.mxu0 %v2073
        %v2138 = vpop.f32.mrf.mxu0
        %v2139 = vadd.f32 %v2060, %v2138
        %v2140 = vpop.f32.mrf.mxu0
        %v2141 = vadd.f32 %v2062, %v2140
        %2142 = vdwg.mxu0
        %s2143 = scalar_lea.vmem %s476, 32 [#allocation2]
        %v2144 = vld [vmem:[%s2143] sm:$0xf]
        %v2145 = vld [vmem:[%s2143 + $0x4] sm:$0xf]
        %v2146 = vld [vmem:[%s2143 + $0x8] sm:$0xf]
        %v2147 = vld [vmem:[%s2143 + $0xc] sm:$0xf]
        %v2148 = vld [vmem:[%s698] sm:$0xf]
        %v2149 = vld [vmem:[%s698 + $0x4] sm:$0xf]
        %v2150 = vld [vmem:[%s698 + $0x8] sm:$0xf]
        %v2151 = vld [vmem:[%s698 + $0xc] sm:$0xf]
        %v2152 = vld [vmem:[%s698 + $0x10] sm:$0xf]
        %v2153 = vld [vmem:[%s698 + $0x14] sm:$0xf]
        %v2154 = vld [vmem:[%s698 + $0x18] sm:$0xf]
        %v2155 = vld [vmem:[%s698 + $0x1c] sm:$0xf]
        %v2156 = vld [vmem:[%s698 + $0x20] sm:$0xf]
        %v2157 = vld [vmem:[%s698 + $0x24] sm:$0xf]
        %v2158 = vld [vmem:[%s698 + $0x28] sm:$0xf]
        %v2159 = vld [vmem:[%s698 + $0x2c] sm:$0xf]
        %v2160 = vld [vmem:[%s698 + $0x30] sm:$0xf]
        %v2161 = vld [vmem:[%s698 + $0x34] sm:$0xf]
        %v2162 = vld [vmem:[%s698 + $0x38] sm:$0xf]
        %v2163 = vld [vmem:[%s698 + $0x3c] sm:$0xf]
        %v2168 = vunpack.c.l.b16 %v2144
        %v2169 = vunpack.c.l.b16 %v2145
        %v2170 = vunpack.c.l.b16 %v2146
        %v2171 = vunpack.c.l.b16 %v2147
        %v2172 = vpack.c.b16 %v2169, %v2168
        %v2173 = vpack.c.b16 %v2171, %v2170
        %v2192 = vunpack.c.l.b16 %v2148
        %v2193 = vunpack.c.l.b16 %v2149
        %v2194 = vunpack.c.l.b16 %v2150
        %v2195 = vunpack.c.l.b16 %v2151
        %v2196 = vunpack.c.l.b16 %v2152
        %v2197 = vunpack.c.l.b16 %v2153
        %v2198 = vunpack.c.l.b16 %v2154
        %v2199 = vunpack.c.l.b16 %v2155
        %v2200 = vunpack.c.l.b16 %v2156
        %v2201 = vunpack.c.l.b16 %v2157
        %v2202 = vunpack.c.l.b16 %v2158
        %v2203 = vunpack.c.l.b16 %v2159
        %v2204 = vunpack.c.l.b16 %v2160
        %v2205 = vunpack.c.l.b16 %v2161
        %v2206 = vunpack.c.l.b16 %v2162
        %v2207 = vunpack.c.l.b16 %v2163
        %v2208 = vpack.c.b16 %v2193, %v2192
        %v2209 = vpack.c.b16 %v2195, %v2194
        %v2210 = vpack.c.b16 %v2197, %v2196
        %v2211 = vpack.c.b16 %v2199, %v2198
        %v2212 = vpack.c.b16 %v2201, %v2200
        %v2213 = vpack.c.b16 %v2203, %v2202
        %v2214 = vpack.c.b16 %v2205, %v2204
        %v2215 = vpack.c.b16 %v2207, %v2206
        %2224 = vmatpush.bf16.msra.mxu0 %v2215
        %2225 = vmatpush.bf16.msra.mxu0 %v2214
        %2226 = vmatpush.bf16.msra.mxu0 %v2213
        %2227 = vmatpush.bf16.msra.mxu0 %v2212
        %2228 = vmatpush.bf16.msra.mxu0 %v2211
        %2229 = vmatpush.bf16.msra.mxu0 %v2210
        %2230 = vmatpush.bf16.msra.mxu0 %v2209
        %2231 = vmatpush.bf16.msra.mxu0 %v2208
        %2232 = vmatmul.bf16.gmra.mxu0 %v2172
        %v2233 = vpop.f32.mrf.mxu0
        %v2234 = vadd.f32 0.0, %v2233
        %v2235 = vpop.f32.mrf.mxu0
        %v2236 = vadd.f32 0.0, %v2235
        %2237 = vmatmul.bf16.gmra.mxu0 %v2173
        %v2238 = vpop.f32.mrf.mxu0
        %v2239 = vadd.f32 0.0, %v2238
        %v2240 = vpop.f32.mrf.mxu0
        %v2241 = vadd.f32 0.0, %v2240
        %2242 = vdwg.mxu0
        %v2243 = vadd.f32 %v2134, %v2234
        %v2244 = vadd.f32 %v2136, %v2236
        %v2245 = vadd.f32 %v2139, %v2239
        %v2246 = vadd.f32 %v2141, %v2241
        %v2247 = vadd.f32 %v2243, %v571
        %v2248 = vadd.f32 %v2244, %v571
        %v2249 = vadd.f32 %v2245, %v571
        %v2250 = vadd.f32 %v2246, %v571
        %v2251 = vmax.f32 %v2247, 0.0
        %v2252 = vmax.f32 %v2248, 0.0
        %v2253 = vmax.f32 %v2249, 0.0
        %v2254 = vmax.f32 %v2250, 0.0
        %v2255 = vld [vmem:[%s882] sm:$0xf]
        %v2256 = vld [vmem:[%s486] sm:$0xf]
        %2257 = vmatpush.bf16.msra.mxu0 %v2036
        %2258 = vmatpush.bf16.msra.mxu0 %v2035
        %2259 = vmatpush.bf16.msra.mxu0 %v2034
        %2260 = vmatpush.bf16.msra.mxu0 %v2033
        %2261 = vmatpush.bf16.msra.mxu0 %v2032
        %2262 = vmatpush.bf16.msra.mxu0 %v2031
        %2263 = vmatpush.bf16.msra.mxu0 %v2030
        %2264 = vmatpush.bf16.msra.mxu0 %v2029
        %2265 = vmatmul.bf16.gmra.mxu0 %v2256
        %v2266 = vpop.f32.mrf.mxu0
        %v2267 = vadd.f32 0.0, %v2266
        %v2268 = vpop.f32.mrf.mxu0
        %2269 = vdwg.mxu0
        %2270 = vmatpush.bf16.msra.mxu0 %v2115
        %2271 = vmatpush.bf16.msra.mxu0 %v2114
        %2272 = vmatpush.bf16.msra.mxu0 %v2113
        %2273 = vmatpush.bf16.msra.mxu0 %v2112
        %2274 = vmatpush.bf16.msra.mxu0 %v2111
        %2275 = vmatpush.bf16.msra.mxu0 %v2110
        %2276 = vmatpush.bf16.msra.mxu0 %v2109
        %2277 = vmatpush.bf16.msra.mxu0 %v2108
        %2278 = vmatmul.bf16.gmra.mxu0 %v2255
        %v2279 = vpop.f32.mrf.mxu0
        %v2280 = vadd.f32 %v2267, %v2279
        %v2281 = vpop.f32.mrf.mxu0
        %2282 = vdwg.mxu0
        %s2283 = scalar_lea.vmem %s486, 8 [#allocation5]
        %v2284 = vld [vmem:[%s2283] sm:$0xf]
        %2285 = vmatpush.bf16.msra.mxu0 %v2215
        %2286 = vmatpush.bf16.msra.mxu0 %v2214
        %2287 = vmatpush.bf16.msra.mxu0 %v2213
        %2288 = vmatpush.bf16.msra.mxu0 %v2212
        %2289 = vmatpush.bf16.msra.mxu0 %v2211
        %2290 = vmatpush.bf16.msra.mxu0 %v2210
        %2291 = vmatpush.bf16.msra.mxu0 %v2209
        %2292 = vmatpush.bf16.msra.mxu0 %v2208
        %2293 = vmatmul.bf16.gmra.mxu0 %v2284
        %v2294 = vpop.f32.mrf.mxu0
        %v2295 = vadd.f32 0.0, %v2294
        %v2296 = vpop.f32.mrf.mxu0
        %2297 = vdwg.mxu0
        %v2298 = vadd.f32 %v2280, %v2295
        %v2299 = vadd.f32 %v2298, %v571
        %v2300 = vmax.f32 %v2299, 0.0
        %v2301 = vsel %vm914, 0.0, %v2300
        %v2302 = vld [vmem:[%s917] sm:$0xf]
        %v2303 = vld [vmem:[%s496] sm:$0xf]
        %2304 = vmatpush.bf16.msra.mxu0 %v2036
        %2305 = vmatpush.bf16.msra.mxu0 %v2035
        %2306 = vmatpush.bf16.msra.mxu0 %v2034
        %2307 = vmatpush.bf16.msra.mxu0 %v2033
        %2308 = vmatpush.bf16.msra.mxu0 %v2032
        %2309 = vmatpush.bf16.msra.mxu0 %v2031
        %2310 = vmatpush.bf16.msra.mxu0 %v2030
        %2311 = vmatpush.bf16.msra.mxu0 %v2029
        %2312 = vmatmul.bf16.gmra.mxu0 %v2303
        %v2313 = vpop.f32.mrf.mxu0
        %v2314 = vadd.f32 0.0, %v2313
        %v2315 = vpop.f32.mrf.mxu0
        %2316 = vdwg.mxu0
        %2317 = vmatpush.bf16.msra.mxu0 %v2115
        %2318 = vmatpush.bf16.msra.mxu0 %v2114
        %2319 = vmatpush.bf16.msra.mxu0 %v2113
        %2320 = vmatpush.bf16.msra.mxu0 %v2112
        %2321 = vmatpush.bf16.msra.mxu0 %v2111
        %2322 = vmatpush.bf16.msra.mxu0 %v2110
        %2323 = vmatpush.bf16.msra.mxu0 %v2109
        %2324 = vmatpush.bf16.msra.mxu0 %v2108
        %2325 = vmatmul.bf16.gmra.mxu0 %v2302
        %v2326 = vpop.f32.mrf.mxu0
        %v2327 = vadd.f32 %v2314, %v2326
        %v2328 = vpop.f32.mrf.mxu0
        %2329 = vdwg.mxu0
        %s2330 = scalar_lea.vmem %s496, 8 [#allocation7]
        %v2331 = vld [vmem:[%s2330] sm:$0xf]
        %2332 = vmatpush.bf16.msra.mxu0 %v2215
        %2333 = vmatpush.bf16.msra.mxu0 %v2214
        %2334 = vmatpush.bf16.msra.mxu0 %v2213
        %2335 = vmatpush.bf16.msra.mxu0 %v2212
        %2336 = vmatpush.bf16.msra.mxu0 %v2211
        %2337 = vmatpush.bf16.msra.mxu0 %v2210
        %2338 = vmatpush.bf16.msra.mxu0 %v2209
        %2339 = vmatpush.bf16.msra.mxu0 %v2208
        %2340 = vmatmul.bf16.gmra.mxu0 %v2331
        %v2341 = vpop.f32.mrf.mxu0
        %v2342 = vadd.f32 0.0, %v2341
        %v2343 = vpop.f32.mrf.mxu0
        %2344 = vdwg.mxu0
        %v2345 = vadd.f32 %v2327, %v2342
        %v2346 = vadd.f32 %v2345, %v571
        %v2347 = vmax.f32 %v2346, 0.0
        %v2348 = vsel %vm949, 0.0, %v2347
        %v2355 = vrot.slane %v2301, 7
        %v2356 = vrot.slane %v2251, 7
        %v2357 = vsel %vm957, %v2355, %v2356
        %v2358 = vrot.slane %v2252, 7
        %v2359 = vsel %vm957, %v2356, %v2358
        %v2360 = vrot.slane %v2253, 7
        %v2361 = vsel %vm957, %v2358, %v2360
        %v2362 = vrot.slane %v2254, 7
        %v2363 = vsel %vm957, %v2360, %v2362
        %v2364 = vrot.slane %v2348, 7
        %v2365 = vsel %vm957, %v2362, %v2364
        %v2372 = vsel %vm957, 0.0, %v2355
        %v2373 = vsel %vm660, %v2372, 0.0
        %v2374 = vsel %vm661, %v2357, 0.0
        %v2375 = vsel %vm662, %v2359, 0.0
        %v2376 = vsel %vm663, %v2361, 0.0
        %v2377 = vsel %vm664, %v2363, 0.0
        %v2378 = vsel %vm665, %v2365, 0.0
        %v2379 = vrot.slane %v2301, 1
        %v2380 = vrot.slane %v2251, 1
        %v2381 = vsel %vm982, %v2379, %v2380
        %v2382 = vrot.slane %v2252, 1
        %v2383 = vsel %vm982, %v2380, %v2382
        %v2384 = vrot.slane %v2253, 1
        %v2385 = vsel %vm982, %v2382, %v2384
        %v2386 = vrot.slane %v2254, 1
        %v2387 = vsel %vm982, %v2384, %v2386
        %v2388 = vrot.slane %v2348, 1
        %v2389 = vsel %vm982, %v2386, %v2388
        %v2396 = vsel %vm982, %v2388, 0.0
        %v2397 = vsel %vm666, %v2381, 0.0
        %v2398 = vsel %vm667, %v2383, 0.0
        %v2399 = vsel %vm668, %v2385, 0.0
        %v2400 = vsel %vm669, %v2387, 0.0
        %v2401 = vsel %vm670, %v2389, 0.0
        %v2402 = vsel %vm671, %v2396, 0.0
        %v2403 = vpack.c.bf16 %v2301, %v2373
        %v2404 = vpack.c.bf16 %v2397, %v2397
        %v2405 = vpack.c.bf16 %v2251, %v2374
        %v2406 = vpack.c.bf16 %v2398, %v2398
        %v2407 = vpack.c.bf16 %v2252, %v2375
        %v2408 = vpack.c.bf16 %v2399, %v2399
        %v2409 = vpack.c.bf16 %v2253, %v2376
        %v2410 = vpack.c.bf16 %v2400, %v2400
        %v2411 = vpack.c.bf16 %v2254, %v2377
        %v2412 = vpack.c.bf16 %v2401, %v2401
        %v2413 = vpack.c.bf16 %v2348, %v2378
        %v2414 = vpack.c.bf16 %v2402, %v2402
        %v2415 = vld [vmem:[#allocation10] sm:$0xf]
        %v2416 = vld [vmem:[#allocation10 + $0x4] sm:$0xf]
        %v2417 = vld [vmem:[#allocation10 + $0x8] sm:$0xf]
        %v2418 = vld [vmem:[#allocation10 + $0xc] sm:$0xf]
        %v2419 = vld [vmem:[#allocation10 + $0x10] sm:$0xf]
        %v2420 = vld [vmem:[#allocation10 + $0x14] sm:$0xf]
        %v2421 = vld [vmem:[#allocation10 + $0x18] sm:$0xf]
        %v2422 = vld [vmem:[#allocation10 + $0x1c] sm:$0xf]
        %v2423 = vld [vmem:[#allocation10 + $0x20] sm:$0xf]
        %v2424 = vld [vmem:[#allocation10 + $0x24] sm:$0xf]
        %v2425 = vld [vmem:[#allocation10 + $0x28] sm:$0xf]
        %v2426 = vld [vmem:[#allocation10 + $0x2c] sm:$0xf]
        %v2427 = vld [vmem:[#allocation10 + $0x30] sm:$0xf]
        %v2428 = vld [vmem:[#allocation10 + $0x34] sm:$0xf]
        %v2429 = vld [vmem:[#allocation10 + $0x38] sm:$0xf]
        %v2430 = vld [vmem:[#allocation10 + $0x3c] sm:$0xf]
        %v2431 = vld [vmem:[#allocation10 + $0x40] sm:$0xf]
        %v2432 = vld [vmem:[#allocation10 + $0x44] sm:$0xf]
        %v2433 = vld [vmem:[#allocation10 + $0x48] sm:$0xf]
        %v2434 = vld [vmem:[#allocation10 + $0x4c] sm:$0xf]
        %v2435 = vld [vmem:[#allocation10 + $0x50] sm:$0xf]
        %v2436 = vld [vmem:[#allocation10 + $0x54] sm:$0xf]
        %v2437 = vld [vmem:[#allocation10 + $0x58] sm:$0xf]
        %v2438 = vld [vmem:[#allocation10 + $0x5c] sm:$0xf]
        %v2439 = vld [vmem:[#allocation10 + $0x60] sm:$0xf]
        %v2440 = vld [vmem:[#allocation10 + $0x64] sm:$0xf]
        %v2441 = vld [vmem:[#allocation10 + $0x68] sm:$0xf]
        %v2442 = vld [vmem:[#allocation10 + $0x6c] sm:$0xf]
        %v2443 = vld [vmem:[#allocation10 + $0x70] sm:$0xf]
        %v2444 = vld [vmem:[#allocation10 + $0x74] sm:$0xf]
        %v2445 = vld [vmem:[#allocation10 + $0x78] sm:$0xf]
        %v2446 = vld [vmem:[#allocation10 + $0x7c] sm:$0xf]
        %v2447 = vld [vmem:[#allocation10 + $0x80] sm:$0xf]
        %v2448 = vld [vmem:[#allocation10 + $0x84] sm:$0xf]
        %v2449 = vld [vmem:[#allocation10 + $0x88] sm:$0xf]
        %v2450 = vld [vmem:[#allocation10 + $0x8c] sm:$0xf]
        %v2451 = vld [vmem:[#allocation10 + $0x90] sm:$0xf]
        %v2452 = vld [vmem:[#allocation10 + $0x94] sm:$0xf]
        %v2453 = vld [vmem:[#allocation10 + $0x98] sm:$0xf]
        %v2454 = vld [vmem:[#allocation10 + $0x9c] sm:$0xf]
        %v2455 = vld [vmem:[#allocation10 + $0xa0] sm:$0xf]
        %v2456 = vld [vmem:[#allocation10 + $0xa4] sm:$0xf]
        %v2457 = vld [vmem:[#allocation10 + $0xa8] sm:$0xf]
        %v2458 = vld [vmem:[#allocation10 + $0xac] sm:$0xf]
        %v2459 = vld [vmem:[#allocation10 + $0xb0] sm:$0xf]
        %v2460 = vld [vmem:[#allocation10 + $0xb4] sm:$0xf]
        %v2461 = vld [vmem:[#allocation10 + $0xb8] sm:$0xf]
        %v2462 = vld [vmem:[#allocation10 + $0xbc] sm:$0xf]
        %v2463 = vld [vmem:[%s1067] sm:$0xf]
        %v2464 = vld [vmem:[%s1067 + $0x4] sm:$0xf]
        %v2465 = vld [vmem:[%s1067 + $0x8] sm:$0xf]
        %v2466 = vld [vmem:[%s1067 + $0xc] sm:$0xf]
        %v2467 = vld [vmem:[%s1067 + $0x10] sm:$0xf]
        %v2468 = vld [vmem:[%s1067 + $0x14] sm:$0xf]
        %v2469 = vld [vmem:[%s1067 + $0x18] sm:$0xf]
        %v2470 = vld [vmem:[%s1067 + $0x1c] sm:$0xf]
        %v2471 = vld [vmem:[%s1067 + $0x20] sm:$0xf]
        %v2472 = vld [vmem:[%s1067 + $0x24] sm:$0xf]
        %v2473 = vld [vmem:[%s1067 + $0x28] sm:$0xf]
        %v2474 = vld [vmem:[%s1067 + $0x2c] sm:$0xf]
        %v2475 = vld [vmem:[%s1067 + $0x30] sm:$0xf]
        %v2476 = vld [vmem:[%s1067 + $0x34] sm:$0xf]
        %v2477 = vld [vmem:[%s1067 + $0x38] sm:$0xf]
        %v2478 = vld [vmem:[%s1067 + $0x3c] sm:$0xf]
        %v2479 = vld [vmem:[%s1067 + $0x40] sm:$0xf]
        %v2480 = vld [vmem:[%s1067 + $0x44] sm:$0xf]
        %v2481 = vld [vmem:[%s1067 + $0x48] sm:$0xf]
        %v2482 = vld [vmem:[%s1067 + $0x4c] sm:$0xf]
        %v2483 = vld [vmem:[%s1067 + $0x50] sm:$0xf]
        %v2484 = vld [vmem:[%s1067 + $0x54] sm:$0xf]
        %v2485 = vld [vmem:[%s1067 + $0x58] sm:$0xf]
        %v2486 = vld [vmem:[%s1067 + $0x5c] sm:$0xf]
        %v2487 = vld [vmem:[%s1067 + $0x60] sm:$0xf]
        %v2488 = vld [vmem:[%s1067 + $0x64] sm:$0xf]
        %v2489 = vld [vmem:[%s1067 + $0x68] sm:$0xf]
        %v2490 = vld [vmem:[%s1067 + $0x6c] sm:$0xf]
        %v2491 = vld [vmem:[%s1067 + $0x70] sm:$0xf]
        %v2492 = vld [vmem:[%s1067 + $0x74] sm:$0xf]
        %v2493 = vld [vmem:[%s1067 + $0x78] sm:$0xf]
        %v2494 = vld [vmem:[%s1067 + $0x7c] sm:$0xf]
        %v2495 = vld [vmem:[%s1067 + $0x80] sm:$0xf]
        %v2496 = vld [vmem:[%s1067 + $0x84] sm:$0xf]
        %v2497 = vld [vmem:[%s1067 + $0x88] sm:$0xf]
        %v2498 = vld [vmem:[%s1067 + $0x8c] sm:$0xf]
        %v2499 = vld [vmem:[%s1067 + $0x90] sm:$0xf]
        %v2500 = vld [vmem:[%s1067 + $0x94] sm:$0xf]
        %v2501 = vld [vmem:[%s1067 + $0x98] sm:$0xf]
        %v2502 = vld [vmem:[%s1067 + $0x9c] sm:$0xf]
        %v2503 = vld [vmem:[%s1067 + $0xa0] sm:$0xf]
        %v2504 = vld [vmem:[%s1067 + $0xa4] sm:$0xf]
        %v2505 = vld [vmem:[%s1067 + $0xa8] sm:$0xf]
        %v2506 = vld [vmem:[%s1067 + $0xac] sm:$0xf]
        %v2507 = vld [vmem:[%s1067 + $0xb0] sm:$0xf]
        %v2508 = vld [vmem:[%s1067 + $0xb4] sm:$0xf]
        %v2509 = vld [vmem:[%s1067 + $0xb8] sm:$0xf]
        %v2510 = vld [vmem:[%s1067 + $0xbc] sm:$0xf]
        %v2519 = vunpack.c.l.b16 %v2405
        %v2520 = vunpack.c.h.b16 %v2405
        %v2521 = vunpack.c.l.b16 %v2406
        %v2522 = vunpack.c.l.b16 %v2407
        %v2523 = vunpack.c.h.b16 %v2407
        %v2524 = vunpack.c.l.b16 %v2408
        %v2525 = vunpack.c.l.b16 %v2409
        %v2526 = vunpack.c.h.b16 %v2409
        %v2527 = vunpack.c.l.b16 %v2410
        %v2528 = vunpack.c.l.b16 %v2411
        %v2529 = vunpack.c.h.b16 %v2411
        %v2530 = vunpack.c.l.b16 %v2412
        %v2531 = vpack.c.b16 %v2522, %v2519
        %v2532 = vpack.c.b16 %v2523, %v2520
        %v2533 = vpack.c.b16 %v2524, %v2521
        %v2534 = vpack.c.b16 %v2528, %v2525
        %v2535 = vpack.c.b16 %v2529, %v2526
        %v2536 = vpack.c.b16 %v2530, %v2527
        %v2591 = vunpack.c.l.b16 %v2463
        %v2592 = vunpack.c.l.b16 %v2464
        %v2593 = vunpack.c.l.b16 %v2465
        %v2594 = vunpack.c.l.b16 %v2466
        %v2595 = vunpack.c.l.b16 %v2467
        %v2596 = vunpack.c.l.b16 %v2468
        %v2597 = vunpack.c.l.b16 %v2469
        %v2598 = vunpack.c.l.b16 %v2470
        %v2599 = vunpack.c.l.b16 %v2471
        %v2600 = vunpack.c.l.b16 %v2472
        %v2601 = vunpack.c.l.b16 %v2473
        %v2602 = vunpack.c.l.b16 %v2474
        %v2603 = vunpack.c.l.b16 %v2475
        %v2604 = vunpack.c.l.b16 %v2476
        %v2605 = vunpack.c.l.b16 %v2477
        %v2606 = vunpack.c.l.b16 %v2478
        %v2607 = vunpack.c.l.b16 %v2479
        %v2608 = vunpack.c.l.b16 %v2480
        %v2609 = vunpack.c.l.b16 %v2481
        %v2610 = vunpack.c.l.b16 %v2482
        %v2611 = vunpack.c.l.b16 %v2483
        %v2612 = vunpack.c.l.b16 %v2484
        %v2613 = vunpack.c.l.b16 %v2485
        %v2614 = vunpack.c.l.b16 %v2486
        %v2615 = vunpack.c.l.b16 %v2487
        %v2616 = vunpack.c.l.b16 %v2488
        %v2617 = vunpack.c.l.b16 %v2489
        %v2618 = vunpack.c.l.b16 %v2490
        %v2619 = vunpack.c.l.b16 %v2491
        %v2620 = vunpack.c.l.b16 %v2492
        %v2621 = vunpack.c.l.b16 %v2493
        %v2622 = vunpack.c.l.b16 %v2494
        %v2623 = vunpack.c.l.b16 %v2495
        %v2624 = vunpack.c.l.b16 %v2496
        %v2625 = vunpack.c.l.b16 %v2497
        %v2626 = vunpack.c.l.b16 %v2498
        %v2627 = vunpack.c.l.b16 %v2499
        %v2628 = vunpack.c.l.b16 %v2500
        %v2629 = vunpack.c.l.b16 %v2501
        %v2630 = vunpack.c.l.b16 %v2502
        %v2631 = vunpack.c.l.b16 %v2503
        %v2632 = vunpack.c.l.b16 %v2504
        %v2633 = vunpack.c.l.b16 %v2505
        %v2634 = vunpack.c.l.b16 %v2506
        %v2635 = vunpack.c.l.b16 %v2507
        %v2636 = vunpack.c.l.b16 %v2508
        %v2637 = vunpack.c.l.b16 %v2509
        %v2638 = vunpack.c.l.b16 %v2510
        %v2639 = vpack.c.b16 %v2592, %v2591
        %v2640 = vpack.c.b16 %v2594, %v2593
        %v2641 = vpack.c.b16 %v2596, %v2595
        %v2642 = vpack.c.b16 %v2598, %v2597
        %v2643 = vpack.c.b16 %v2600, %v2599
        %v2644 = vpack.c.b16 %v2602, %v2601
        %v2645 = vpack.c.b16 %v2604, %v2603
        %v2646 = vpack.c.b16 %v2606, %v2605
        %v2647 = vpack.c.b16 %v2608, %v2607
        %v2648 = vpack.c.b16 %v2610, %v2609
        %v2649 = vpack.c.b16 %v2612, %v2611
        %v2650 = vpack.c.b16 %v2614, %v2613
        %v2651 = vpack.c.b16 %v2616, %v2615
        %v2652 = vpack.c.b16 %v2618, %v2617
        %v2653 = vpack.c.b16 %v2620, %v2619
        %v2654 = vpack.c.b16 %v2622, %v2621
        %v2655 = vpack.c.b16 %v2624, %v2623
        %v2656 = vpack.c.b16 %v2626, %v2625
        %v2657 = vpack.c.b16 %v2628, %v2627
        %v2658 = vpack.c.b16 %v2630, %v2629
        %v2659 = vpack.c.b16 %v2632, %v2631
        %v2660 = vpack.c.b16 %v2634, %v2633
        %v2661 = vpack.c.b16 %v2636, %v2635
        %v2662 = vpack.c.b16 %v2638, %v2637
        %2687 = vmatpush.bf16.msra.mxu0 %v2646
        %2688 = vmatpush.bf16.msra.mxu0 %v2645
        %2689 = vmatpush.bf16.msra.mxu0 %v2644
        %2690 = vmatpush.bf16.msra.mxu0 %v2643
        %2691 = vmatpush.bf16.msra.mxu0 %v2642
        %2692 = vmatpush.bf16.msra.mxu0 %v2641
        %2693 = vmatpush.bf16.msra.mxu0 %v2640
        %2694 = vmatpush.bf16.msra.mxu0 %v2639
        %2695 = vmatmul.bf16.gmra.mxu0 %v2531
        %v2696 = vpop.f32.mrf.mxu0
        %v2697 = vadd.f32 0.0, %v2696
        %v2698 = vpop.f32.mrf.mxu0
        %v2699 = vadd.f32 0.0, %v2698
        %2700 = vmatmul.bf16.gmra.mxu0 %v2534
        %v2701 = vpop.f32.mrf.mxu0
        %v2702 = vadd.f32 0.0, %v2701
        %v2703 = vpop.f32.mrf.mxu0
        %v2704 = vadd.f32 0.0, %v2703
        %2705 = vdwg.mxu0
        %2706 = vmatpush.bf16.msra.mxu0 %v2654
        %2707 = vmatpush.bf16.msra.mxu0 %v2653
        %2708 = vmatpush.bf16.msra.mxu0 %v2652
        %2709 = vmatpush.bf16.msra.mxu0 %v2651
        %2710 = vmatpush.bf16.msra.mxu0 %v2650
        %2711 = vmatpush.bf16.msra.mxu0 %v2649
        %2712 = vmatpush.bf16.msra.mxu0 %v2648
        %2713 = vmatpush.bf16.msra.mxu0 %v2647
        %2714 = vmatmul.bf16.gmra.mxu0 %v2532
        %v2715 = vpop.f32.mrf.mxu0
        %v2716 = vadd.f32 %v2697, %v2715
        %v2717 = vpop.f32.mrf.mxu0
        %v2718 = vadd.f32 %v2699, %v2717
        %2719 = vmatmul.bf16.gmra.mxu0 %v2535
        %v2720 = vpop.f32.mrf.mxu0
        %v2721 = vadd.f32 %v2702, %v2720
        %v2722 = vpop.f32.mrf.mxu0
        %v2723 = vadd.f32 %v2704, %v2722
        %2724 = vdwg.mxu0
        %2725 = vmatpush.bf16.msra.mxu0 %v2662
        %2726 = vmatpush.bf16.msra.mxu0 %v2661
        %2727 = vmatpush.bf16.msra.mxu0 %v2660
        %2728 = vmatpush.bf16.msra.mxu0 %v2659
        %2729 = vmatpush.bf16.msra.mxu0 %v2658
        %2730 = vmatpush.bf16.msra.mxu0 %v2657
        %2731 = vmatpush.bf16.msra.mxu0 %v2656
        %2732 = vmatpush.bf16.msra.mxu0 %v2655
        %2733 = vmatmul.bf16.gmra.mxu0 %v2533
        %v2734 = vpop.f32.mrf.mxu0
        %v2735 = vadd.f32 %v2716, %v2734
        %v2736 = vpop.f32.mrf.mxu0
        %v2737 = vadd.f32 %v2718, %v2736
        %2738 = vmatmul.bf16.gmra.mxu0 %v2536
        %v2739 = vpop.f32.mrf.mxu0
        %v2740 = vadd.f32 %v2721, %v2739
        %v2741 = vpop.f32.mrf.mxu0
        %v2742 = vadd.f32 %v2723, %v2741
        %2743 = vdwg.mxu0
        %v2746 = vunpack.c.l.b16 %v2403
        %v2747 = vunpack.c.h.b16 %v2403
        %v2748 = vunpack.c.l.b16 %v2404
        %v2749 = vpack.c.b16 %v2519, %v2746
        %v2750 = vpack.c.b16 %v2520, %v2747
        %v2751 = vpack.c.b16 %v2521, %v2748
        %v2752 = vpack.c.b16 %v2525, %v2522
        %v2753 = vpack.c.b16 %v2526, %v2523
        %v2754 = vpack.c.b16 %v2527, %v2524
        %v2809 = vunpack.c.l.b16 %v2415
        %v2810 = vunpack.c.l.b16 %v2416
        %v2811 = vunpack.c.l.b16 %v2417
        %v2812 = vunpack.c.l.b16 %v2418
        %v2813 = vunpack.c.l.b16 %v2419
        %v2814 = vunpack.c.l.b16 %v2420
        %v2815 = vunpack.c.l.b16 %v2421
        %v2816 = vunpack.c.l.b16 %v2422
        %v2817 = vunpack.c.l.b16 %v2423
        %v2818 = vunpack.c.l.b16 %v2424
        %v2819 = vunpack.c.l.b16 %v2425
        %v2820 = vunpack.c.l.b16 %v2426
        %v2821 = vunpack.c.l.b16 %v2427
        %v2822 = vunpack.c.l.b16 %v2428
        %v2823 = vunpack.c.l.b16 %v2429
        %v2824 = vunpack.c.l.b16 %v2430
        %v2825 = vunpack.c.l.b16 %v2431
        %v2826 = vunpack.c.l.b16 %v2432
        %v2827 = vunpack.c.l.b16 %v2433
        %v2828 = vunpack.c.l.b16 %v2434
        %v2829 = vunpack.c.l.b16 %v2435
        %v2830 = vunpack.c.l.b16 %v2436
        %v2831 = vunpack.c.l.b16 %v2437
        %v2832 = vunpack.c.l.b16 %v2438
        %v2833 = vunpack.c.l.b16 %v2439
        %v2834 = vunpack.c.l.b16 %v2440
        %v2835 = vunpack.c.l.b16 %v2441
        %v2836 = vunpack.c.l.b16 %v2442
        %v2837 = vunpack.c.l.b16 %v2443
        %v2838 = vunpack.c.l.b16 %v2444
        %v2839 = vunpack.c.l.b16 %v2445
        %v2840 = vunpack.c.l.b16 %v2446
        %v2841 = vunpack.c.l.b16 %v2447
        %v2842 = vunpack.c.l.b16 %v2448
        %v2843 = vunpack.c.l.b16 %v2449
        %v2844 = vunpack.c.l.b16 %v2450
        %v2845 = vunpack.c.l.b16 %v2451
        %v2846 = vunpack.c.l.b16 %v2452
        %v2847 = vunpack.c.l.b16 %v2453
        %v2848 = vunpack.c.l.b16 %v2454
        %v2849 = vunpack.c.l.b16 %v2455
        %v2850 = vunpack.c.l.b16 %v2456
        %v2851 = vunpack.c.l.b16 %v2457
        %v2852 = vunpack.c.l.b16 %v2458
        %v2853 = vunpack.c.l.b16 %v2459
        %v2854 = vunpack.c.l.b16 %v2460
        %v2855 = vunpack.c.l.b16 %v2461
        %v2856 = vunpack.c.l.b16 %v2462
        %v2857 = vpack.c.b16 %v2810, %v2809
        %v2858 = vpack.c.b16 %v2812, %v2811
        %v2859 = vpack.c.b16 %v2814, %v2813
        %v2860 = vpack.c.b16 %v2816, %v2815
        %v2861 = vpack.c.b16 %v2818, %v2817
        %v2862 = vpack.c.b16 %v2820, %v2819
        %v2863 = vpack.c.b16 %v2822, %v2821
        %v2864 = vpack.c.b16 %v2824, %v2823
        %v2865 = vpack.c.b16 %v2826, %v2825
        %v2866 = vpack.c.b16 %v2828, %v2827
        %v2867 = vpack.c.b16 %v2830, %v2829
        %v2868 = vpack.c.b16 %v2832, %v2831
        %v2869 = vpack.c.b16 %v2834, %v2833
        %v2870 = vpack.c.b16 %v2836, %v2835
        %v2871 = vpack.c.b16 %v2838, %v2837
        %v2872 = vpack.c.b16 %v2840, %v2839
        %v2873 = vpack.c.b16 %v2842, %v2841
        %v2874 = vpack.c.b16 %v2844, %v2843
        %v2875 = vpack.c.b16 %v2846, %v2845
        %v2876 = vpack.c.b16 %v2848, %v2847
        %v2877 = vpack.c.b16 %v2850, %v2849
        %v2878 = vpack.c.b16 %v2852, %v2851
        %v2879 = vpack.c.b16 %v2854, %v2853
        %v2880 = vpack.c.b16 %v2856, %v2855
        %2905 = vmatpush.bf16.msra.mxu0 %v2864
        %2906 = vmatpush.bf16.msra.mxu0 %v2863
        %2907 = vmatpush.bf16.msra.mxu0 %v2862
        %2908 = vmatpush.bf16.msra.mxu0 %v2861
        %2909 = vmatpush.bf16.msra.mxu0 %v2860
        %2910 = vmatpush.bf16.msra.mxu0 %v2859
        %2911 = vmatpush.bf16.msra.mxu0 %v2858
        %2912 = vmatpush.bf16.msra.mxu0 %v2857
        %2913 = vmatmul.bf16.gmra.mxu0 %v2749
        %v2914 = vpop.f32.mrf.mxu0
        %v2915 = vadd.f32 %v2735, %v2914
        %v2916 = vpop.f32.mrf.mxu0
        %v2917 = vadd.f32 %v2737, %v2916
        %2918 = vmatmul.bf16.gmra.mxu0 %v2752
        %v2919 = vpop.f32.mrf.mxu0
        %v2920 = vadd.f32 %v2740, %v2919
        %v2921 = vpop.f32.mrf.mxu0
        %v2922 = vadd.f32 %v2742, %v2921
        %2923 = vdwg.mxu0
        %2924 = vmatpush.bf16.msra.mxu0 %v2872
        %2925 = vmatpush.bf16.msra.mxu0 %v2871
        %2926 = vmatpush.bf16.msra.mxu0 %v2870
        %2927 = vmatpush.bf16.msra.mxu0 %v2869
        %2928 = vmatpush.bf16.msra.mxu0 %v2868
        %2929 = vmatpush.bf16.msra.mxu0 %v2867
        %2930 = vmatpush.bf16.msra.mxu0 %v2866
        %2931 = vmatpush.bf16.msra.mxu0 %v2865
        %2932 = vmatmul.bf16.gmra.mxu0 %v2750
        %v2933 = vpop.f32.mrf.mxu0
        %v2934 = vadd.f32 %v2915, %v2933
        %v2935 = vpop.f32.mrf.mxu0
        %v2936 = vadd.f32 %v2917, %v2935
        %2937 = vmatmul.bf16.gmra.mxu0 %v2753
        %v2938 = vpop.f32.mrf.mxu0
        %v2939 = vadd.f32 %v2920, %v2938
        %v2940 = vpop.f32.mrf.mxu0
        %v2941 = vadd.f32 %v2922, %v2940
        %2942 = vdwg.mxu0
        %2943 = vmatpush.bf16.msra.mxu0 %v2880
        %2944 = vmatpush.bf16.msra.mxu0 %v2879
        %2945 = vmatpush.bf16.msra.mxu0 %v2878
        %2946 = vmatpush.bf16.msra.mxu0 %v2877
        %2947 = vmatpush.bf16.msra.mxu0 %v2876
        %2948 = vmatpush.bf16.msra.mxu0 %v2875
        %2949 = vmatpush.bf16.msra.mxu0 %v2874
        %2950 = vmatpush.bf16.msra.mxu0 %v2873
        %2951 = vmatmul.bf16.gmra.mxu0 %v2751
        %v2952 = vpop.f32.mrf.mxu0
        %v2953 = vadd.f32 %v2934, %v2952
        %v2954 = vpop.f32.mrf.mxu0
        %v2955 = vadd.f32 %v2936, %v2954
        %2956 = vmatmul.bf16.gmra.mxu0 %v2754
        %v2957 = vpop.f32.mrf.mxu0
        %v2958 = vadd.f32 %v2939, %v2957
        %v2959 = vpop.f32.mrf.mxu0
        %v2960 = vadd.f32 %v2941, %v2959
        %2961 = vdwg.mxu0
        %v2962 = vld [vmem:[%s1567] sm:$0xf]
        %v2963 = vld [vmem:[%s1567 + $0x4] sm:$0xf]
        %v2964 = vld [vmem:[%s1567 + $0x8] sm:$0xf]
        %v2965 = vld [vmem:[%s1567 + $0xc] sm:$0xf]
        %v2966 = vld [vmem:[%s1567 + $0x10] sm:$0xf]
        %v2967 = vld [vmem:[%s1567 + $0x14] sm:$0xf]
        %v2968 = vld [vmem:[%s1567 + $0x18] sm:$0xf]
        %v2969 = vld [vmem:[%s1567 + $0x1c] sm:$0xf]
        %v2970 = vld [vmem:[%s1567 + $0x20] sm:$0xf]
        %v2971 = vld [vmem:[%s1567 + $0x24] sm:$0xf]
        %v2972 = vld [vmem:[%s1567 + $0x28] sm:$0xf]
        %v2973 = vld [vmem:[%s1567 + $0x2c] sm:$0xf]
        %v2974 = vld [vmem:[%s1567 + $0x30] sm:$0xf]
        %v2975 = vld [vmem:[%s1567 + $0x34] sm:$0xf]
        %v2976 = vld [vmem:[%s1567 + $0x38] sm:$0xf]
        %v2977 = vld [vmem:[%s1567 + $0x3c] sm:$0xf]
        %v2978 = vld [vmem:[%s1567 + $0x40] sm:$0xf]
        %v2979 = vld [vmem:[%s1567 + $0x44] sm:$0xf]
        %v2980 = vld [vmem:[%s1567 + $0x48] sm:$0xf]
        %v2981 = vld [vmem:[%s1567 + $0x4c] sm:$0xf]
        %v2982 = vld [vmem:[%s1567 + $0x50] sm:$0xf]
        %v2983 = vld [vmem:[%s1567 + $0x54] sm:$0xf]
        %v2984 = vld [vmem:[%s1567 + $0x58] sm:$0xf]
        %v2985 = vld [vmem:[%s1567 + $0x5c] sm:$0xf]
        %v2986 = vld [vmem:[%s1567 + $0x60] sm:$0xf]
        %v2987 = vld [vmem:[%s1567 + $0x64] sm:$0xf]
        %v2988 = vld [vmem:[%s1567 + $0x68] sm:$0xf]
        %v2989 = vld [vmem:[%s1567 + $0x6c] sm:$0xf]
        %v2990 = vld [vmem:[%s1567 + $0x70] sm:$0xf]
        %v2991 = vld [vmem:[%s1567 + $0x74] sm:$0xf]
        %v2992 = vld [vmem:[%s1567 + $0x78] sm:$0xf]
        %v2993 = vld [vmem:[%s1567 + $0x7c] sm:$0xf]
        %v2994 = vld [vmem:[%s1567 + $0x80] sm:$0xf]
        %v2995 = vld [vmem:[%s1567 + $0x84] sm:$0xf]
        %v2996 = vld [vmem:[%s1567 + $0x88] sm:$0xf]
        %v2997 = vld [vmem:[%s1567 + $0x8c] sm:$0xf]
        %v2998 = vld [vmem:[%s1567 + $0x90] sm:$0xf]
        %v2999 = vld [vmem:[%s1567 + $0x94] sm:$0xf]
        %v3000 = vld [vmem:[%s1567 + $0x98] sm:$0xf]
        %v3001 = vld [vmem:[%s1567 + $0x9c] sm:$0xf]
        %v3002 = vld [vmem:[%s1567 + $0xa0] sm:$0xf]
        %v3003 = vld [vmem:[%s1567 + $0xa4] sm:$0xf]
        %v3004 = vld [vmem:[%s1567 + $0xa8] sm:$0xf]
        %v3005 = vld [vmem:[%s1567 + $0xac] sm:$0xf]
        %v3006 = vld [vmem:[%s1567 + $0xb0] sm:$0xf]
        %v3007 = vld [vmem:[%s1567 + $0xb4] sm:$0xf]
        %v3008 = vld [vmem:[%s1567 + $0xb8] sm:$0xf]
        %v3009 = vld [vmem:[%s1567 + $0xbc] sm:$0xf]
        %v3012 = vunpack.c.l.b16 %v2413
        %v3013 = vunpack.c.h.b16 %v2413
        %v3014 = vunpack.c.l.b16 %v2414
        %v3015 = vpack.c.b16 %v3012, %v2528
        %v3016 = vpack.c.b16 %v3013, %v2529
        %v3017 = vpack.c.b16 %v3014, %v2530
        %v3069 = vunpack.c.l.b16 %v2962
        %v3070 = vunpack.c.l.b16 %v2963
        %v3071 = vunpack.c.l.b16 %v2964
        %v3072 = vunpack.c.l.b16 %v2965
        %v3073 = vunpack.c.l.b16 %v2966
        %v3074 = vunpack.c.l.b16 %v2967
        %v3075 = vunpack.c.l.b16 %v2968
        %v3076 = vunpack.c.l.b16 %v2969
        %v3077 = vunpack.c.l.b16 %v2970
        %v3078 = vunpack.c.l.b16 %v2971
        %v3079 = vunpack.c.l.b16 %v2972
        %v3080 = vunpack.c.l.b16 %v2973
        %v3081 = vunpack.c.l.b16 %v2974
        %v3082 = vunpack.c.l.b16 %v2975
        %v3083 = vunpack.c.l.b16 %v2976
        %v3084 = vunpack.c.l.b16 %v2977
        %v3085 = vunpack.c.l.b16 %v2978
        %v3086 = vunpack.c.l.b16 %v2979
        %v3087 = vunpack.c.l.b16 %v2980
        %v3088 = vunpack.c.l.b16 %v2981
        %v3089 = vunpack.c.l.b16 %v2982
        %v3090 = vunpack.c.l.b16 %v2983
        %v3091 = vunpack.c.l.b16 %v2984
        %v3092 = vunpack.c.l.b16 %v2985
        %v3093 = vunpack.c.l.b16 %v2986
        %v3094 = vunpack.c.l.b16 %v2987
        %v3095 = vunpack.c.l.b16 %v2988
        %v3096 = vunpack.c.l.b16 %v2989
        %v3097 = vunpack.c.l.b16 %v2990
        %v3098 = vunpack.c.l.b16 %v2991
        %v3099 = vunpack.c.l.b16 %v2992
        %v3100 = vunpack.c.l.b16 %v2993
        %v3101 = vunpack.c.l.b16 %v2994
        %v3102 = vunpack.c.l.b16 %v2995
        %v3103 = vunpack.c.l.b16 %v2996
        %v3104 = vunpack.c.l.b16 %v2997
        %v3105 = vunpack.c.l.b16 %v2998
        %v3106 = vunpack.c.l.b16 %v2999
        %v3107 = vunpack.c.l.b16 %v3000
        %v3108 = vunpack.c.l.b16 %v3001
        %v3109 = vunpack.c.l.b16 %v3002
        %v3110 = vunpack.c.l.b16 %v3003
        %v3111 = vunpack.c.l.b16 %v3004
        %v3112 = vunpack.c.l.b16 %v3005
        %v3113 = vunpack.c.l.b16 %v3006
        %v3114 = vunpack.c.l.b16 %v3007
        %v3115 = vunpack.c.l.b16 %v3008
        %v3116 = vunpack.c.l.b16 %v3009
        %v3117 = vpack.c.b16 %v3070, %v3069
        %v3118 = vpack.c.b16 %v3072, %v3071
        %v3119 = vpack.c.b16 %v3074, %v3073
        %v3120 = vpack.c.b16 %v3076, %v3075
        %v3121 = vpack.c.b16 %v3078, %v3077
        %v3122 = vpack.c.b16 %v3080, %v3079
        %v3123 = vpack.c.b16 %v3082, %v3081
        %v3124 = vpack.c.b16 %v3084, %v3083
        %v3125 = vpack.c.b16 %v3086, %v3085
        %v3126 = vpack.c.b16 %v3088, %v3087
        %v3127 = vpack.c.b16 %v3090, %v3089
        %v3128 = vpack.c.b16 %v3092, %v3091
        %v3129 = vpack.c.b16 %v3094, %v3093
        %v3130 = vpack.c.b16 %v3096, %v3095
        %v3131 = vpack.c.b16 %v3098, %v3097
        %v3132 = vpack.c.b16 %v3100, %v3099
        %v3133 = vpack.c.b16 %v3102, %v3101
        %v3134 = vpack.c.b16 %v3104, %v3103
        %v3135 = vpack.c.b16 %v3106, %v3105
        %v3136 = vpack.c.b16 %v3108, %v3107
        %v3137 = vpack.c.b16 %v3110, %v3109
        %v3138 = vpack.c.b16 %v3112, %v3111
        %v3139 = vpack.c.b16 %v3114, %v3113
        %v3140 = vpack.c.b16 %v3116, %v3115
        %3165 = vmatpush.bf16.msra.mxu0 %v3124
        %3166 = vmatpush.bf16.msra.mxu0 %v3123
        %3167 = vmatpush.bf16.msra.mxu0 %v3122
        %3168 = vmatpush.bf16.msra.mxu0 %v3121
        %3169 = vmatpush.bf16.msra.mxu0 %v3120
        %3170 = vmatpush.bf16.msra.mxu0 %v3119
        %3171 = vmatpush.bf16.msra.mxu0 %v3118
        %3172 = vmatpush.bf16.msra.mxu0 %v3117
        %3173 = vmatmul.bf16.gmra.mxu0 %v2752
        %v3174 = vpop.f32.mrf.mxu0
        %v3175 = vadd.f32 0.0, %v3174
        %v3176 = vpop.f32.mrf.mxu0
        %v3177 = vadd.f32 0.0, %v3176
        %3178 = vmatmul.bf16.gmra.mxu0 %v3015
        %v3179 = vpop.f32.mrf.mxu0
        %v3180 = vadd.f32 0.0, %v3179
        %v3181 = vpop.f32.mrf.mxu0
        %v3182 = vadd.f32 0.0, %v3181
        %3183 = vdwg.mxu0
        %3184 = vmatpush.bf16.msra.mxu0 %v3132
        %3185 = vmatpush.bf16.msra.mxu0 %v3131
        %3186 = vmatpush.bf16.msra.mxu0 %v3130
        %3187 = vmatpush.bf16.msra.mxu0 %v3129
        %3188 = vmatpush.bf16.msra.mxu0 %v3128
        %3189 = vmatpush.bf16.msra.mxu0 %v3127
        %3190 = vmatpush.bf16.msra.mxu0 %v3126
        %3191 = vmatpush.bf16.msra.mxu0 %v3125
        %3192 = vmatmul.bf16.gmra.mxu0 %v2753
        %v3193 = vpop.f32.mrf.mxu0
        %v3194 = vadd.f32 %v3175, %v3193
        %v3195 = vpop.f32.mrf.mxu0
        %v3196 = vadd.f32 %v3177, %v3195
        %3197 = vmatmul.bf16.gmra.mxu0 %v3016
        %v3198 = vpop.f32.mrf.mxu0
        %v3199 = vadd.f32 %v3180, %v3198
        %v3200 = vpop.f32.mrf.mxu0
        %v3201 = vadd.f32 %v3182, %v3200
        %3202 = vdwg.mxu0
        %3203 = vmatpush.bf16.msra.mxu0 %v3140
        %3204 = vmatpush.bf16.msra.mxu0 %v3139
        %3205 = vmatpush.bf16.msra.mxu0 %v3138
        %3206 = vmatpush.bf16.msra.mxu0 %v3137
        %3207 = vmatpush.bf16.msra.mxu0 %v3136
        %3208 = vmatpush.bf16.msra.mxu0 %v3135
        %3209 = vmatpush.bf16.msra.mxu0 %v3134
        %3210 = vmatpush.bf16.msra.mxu0 %v3133
        %3211 = vmatmul.bf16.gmra.mxu0 %v2754
        %v3212 = vpop.f32.mrf.mxu0
        %v3213 = vadd.f32 %v3194, %v3212
        %v3214 = vpop.f32.mrf.mxu0
        %v3215 = vadd.f32 %v3196, %v3214
        %3216 = vmatmul.bf16.gmra.mxu0 %v3017
        %v3217 = vpop.f32.mrf.mxu0
        %v3218 = vadd.f32 %v3199, %v3217
        %v3219 = vpop.f32.mrf.mxu0
        %v3220 = vadd.f32 %v3201, %v3219
        %3221 = vdwg.mxu0
        %v3222 = vadd.f32 %v2953, %v3213
        %v3223 = vadd.f32 %v2955, %v3215
        %v3224 = vadd.f32 %v2958, %v3218
        %v3225 = vadd.f32 %v2960, %v3220
        %v3226 = vadd.f32 %v3222, %v575
        %v3227 = vadd.f32 %v3223, %v575
        %v3228 = vadd.f32 %v3224, %v575
        %v3229 = vadd.f32 %v3225, %v575
        %v3230 = vmax.f32 %v3226, 0.0
        %v3231 = vmax.f32 %v3227, 0.0
        %v3232 = vmax.f32 %v3228, 0.0
        %v3233 = vmax.f32 %v3229, 0.0
        %v3234 = vpack.c.bf16 %v3231, %v3230
        %v3235 = vpack.c.bf16 %v3233, %v3232
        %v3236 = vld [vmem:[#allocation11] sm:$0xf]
        %v3237 = vld [vmem:[#allocation11 + $0x4] sm:$0xf]
        %v3238 = vld [vmem:[#allocation11 + $0x8] sm:$0xf]
        %v3239 = vld [vmem:[#allocation11 + $0xc] sm:$0xf]
        %v3240 = vld [vmem:[#allocation11 + $0x10] sm:$0xf]
        %v3241 = vld [vmem:[#allocation11 + $0x14] sm:$0xf]
        %v3242 = vld [vmem:[#allocation11 + $0x18] sm:$0xf]
        %v3243 = vld [vmem:[#allocation11 + $0x1c] sm:$0xf]
        %v3244 = vld [vmem:[#allocation11 + $0x20] sm:$0xf]
        %v3245 = vld [vmem:[#allocation11 + $0x24] sm:$0xf]
        %v3246 = vld [vmem:[#allocation11 + $0x28] sm:$0xf]
        %v3247 = vld [vmem:[#allocation11 + $0x2c] sm:$0xf]
        %v3248 = vld [vmem:[#allocation11 + $0x30] sm:$0xf]
        %v3249 = vld [vmem:[#allocation11 + $0x34] sm:$0xf]
        %v3250 = vld [vmem:[#allocation11 + $0x38] sm:$0xf]
        %v3251 = vld [vmem:[#allocation11 + $0x3c] sm:$0xf]
        %v3268 = vunpack.c.l.b16 %v3236
        %v3269 = vunpack.c.l.b16 %v3237
        %v3270 = vunpack.c.l.b16 %v3238
        %v3271 = vunpack.c.l.b16 %v3239
        %v3272 = vunpack.c.l.b16 %v3240
        %v3273 = vunpack.c.l.b16 %v3241
        %v3274 = vunpack.c.l.b16 %v3242
        %v3275 = vunpack.c.l.b16 %v3243
        %v3276 = vunpack.c.l.b16 %v3244
        %v3277 = vunpack.c.l.b16 %v3245
        %v3278 = vunpack.c.l.b16 %v3246
        %v3279 = vunpack.c.l.b16 %v3247
        %v3280 = vunpack.c.l.b16 %v3248
        %v3281 = vunpack.c.l.b16 %v3249
        %v3282 = vunpack.c.l.b16 %v3250
        %v3283 = vunpack.c.l.b16 %v3251
        %v3284 = vpack.c.b16 %v3269, %v3268
        %v3285 = vpack.c.b16 %v3271, %v3270
        %v3286 = vpack.c.b16 %v3273, %v3272
        %v3287 = vpack.c.b16 %v3275, %v3274
        %v3288 = vpack.c.b16 %v3277, %v3276
        %v3289 = vpack.c.b16 %v3279, %v3278
        %v3290 = vpack.c.b16 %v3281, %v3280
        %v3291 = vpack.c.b16 %v3283, %v3282
        %3300 = vmatpush.bf16.msra.mxu0 %v3291
        %3301 = vmatpush.bf16.msra.mxu0 %v3290
        %3302 = vmatpush.bf16.msra.mxu0 %v3289
        %3303 = vmatpush.bf16.msra.mxu0 %v3288
        %3304 = vmatpush.bf16.msra.mxu0 %v3287
        %3305 = vmatpush.bf16.msra.mxu0 %v3286
        %3306 = vmatpush.bf16.msra.mxu0 %v3285
        %3307 = vmatpush.bf16.msra.mxu0 %v3284
        %3308 = vmatmul.bf16.gmra.mxu0 %v3234
        %v3309 = vpop.f32.mrf.mxu0
        %v3310 = vadd.f32 %v579, %v3309
        %v3311 = vpop.f32.mrf.mxu0
        %v3312 = vadd.f32 %v579, %v3311
        %3313 = vmatmul.bf16.gmra.mxu0 %v3235
        %v3314 = vpop.f32.mrf.mxu0
        %v3315 = vadd.f32 %v579, %v3314
        %v3316 = vpop.f32.mrf.mxu0
        %v3317 = vadd.f32 %v579, %v3316
        %3318 = vdwg.mxu0
        %v3319 = vunpack.c.l.bf16 %v1945
        %v3320 = vunpack.c.l.bf16 %v1946
        %v3321 = vunpack.c.l.bf16 %v1947
        %v3322 = vunpack.c.l.bf16 %v1948
        %v3323 = vadd.f32 %v3310, %v3319
        %v3324 = vadd.f32 %v3312, %v3320
        %v3325 = vadd.f32 %v3315, %v3321
        %v3326 = vadd.f32 %v3317, %v3322
        %v3327 = vmax.f32 %v3323, 0.0
        %v3328 = vmax.f32 %v3324, 0.0
        %v3329 = vmax.f32 %v3325, 0.0
        %v3330 = vmax.f32 %v3326, 0.0
        %v3331 = vpack.c.bf16 %v3327, %v3327
        %v3332 = vpack.c.bf16 %v3328, %v3328
        %v3333 = vpack.c.bf16 %v3329, %v3329
        %v3334 = vpack.c.bf16 %v3330, %v3330
        %s3335 = scalar_lea.vmem %s556, 16 [#allocation13]
        %3336 = vst [vmem:[%s3335] sm:$0xf] %v3331
        %3337 = vst [vmem:[%s3335 + $0x4] sm:$0xf] %v3332
        %3338 = vst [vmem:[%s3335 + $0x8] sm:$0xf] %v3333
        %3339 = vst [vmem:[%s3335 + $0xc] sm:$0xf] %v3334
        %v3340 = vld [vmem:[%s2143] sm:$0xf]
        %v3341 = vld [vmem:[%s2143 + $0x4] sm:$0xf]
        %v3342 = vld [vmem:[%s2143 + $0x8] sm:$0xf]
        %v3343 = vld [vmem:[%s2143 + $0xc] sm:$0xf]
        %v3344 = vld [vmem:[%s676] sm:$0xf]
        %v3345 = vld [vmem:[%s676 + $0x4] sm:$0xf]
        %v3346 = vld [vmem:[%s676 + $0x8] sm:$0xf]
        %v3347 = vld [vmem:[%s676 + $0xc] sm:$0xf]
        %v3348 = vld [vmem:[%s676 + $0x10] sm:$0xf]
        %v3349 = vld [vmem:[%s676 + $0x14] sm:$0xf]
        %v3350 = vld [vmem:[%s676 + $0x18] sm:$0xf]
        %v3351 = vld [vmem:[%s676 + $0x1c] sm:$0xf]
        %v3352 = vld [vmem:[%s676 + $0x20] sm:$0xf]
        %v3353 = vld [vmem:[%s676 + $0x24] sm:$0xf]
        %v3354 = vld [vmem:[%s676 + $0x28] sm:$0xf]
        %v3355 = vld [vmem:[%s676 + $0x2c] sm:$0xf]
        %v3356 = vld [vmem:[%s676 + $0x30] sm:$0xf]
        %v3357 = vld [vmem:[%s676 + $0x34] sm:$0xf]
        %v3358 = vld [vmem:[%s676 + $0x38] sm:$0xf]
        %v3359 = vld [vmem:[%s676 + $0x3c] sm:$0xf]
        %v3360 = vld [vmem:[%s693] sm:$0xf]
        %v3361 = vld [vmem:[%s693 + $0x4] sm:$0xf]
        %v3362 = vld [vmem:[%s693 + $0x8] sm:$0xf]
        %v3363 = vld [vmem:[%s693 + $0xc] sm:$0xf]
        %v3364 = vld [vmem:[#allocation8] sm:$0xf]
        %v3365 = vld [vmem:[#allocation8 + $0x4] sm:$0xf]
        %v3366 = vld [vmem:[#allocation8 + $0x8] sm:$0xf]
        %v3367 = vld [vmem:[#allocation8 + $0xc] sm:$0xf]
        %v3368 = vld [vmem:[#allocation8 + $0x10] sm:$0xf]
        %v3369 = vld [vmem:[#allocation8 + $0x14] sm:$0xf]
        %v3370 = vld [vmem:[#allocation8 + $0x18] sm:$0xf]
        %v3371 = vld [vmem:[#allocation8 + $0x1c] sm:$0xf]
        %v3372 = vld [vmem:[#allocation8 + $0x20] sm:$0xf]
        %v3373 = vld [vmem:[#allocation8 + $0x24] sm:$0xf]
        %v3374 = vld [vmem:[#allocation8 + $0x28] sm:$0xf]
        %v3375 = vld [vmem:[#allocation8 + $0x2c] sm:$0xf]
        %v3376 = vld [vmem:[#allocation8 + $0x30] sm:$0xf]
        %v3377 = vld [vmem:[#allocation8 + $0x34] sm:$0xf]
        %v3378 = vld [vmem:[#allocation8 + $0x38] sm:$0xf]
        %v3379 = vld [vmem:[#allocation8 + $0x3c] sm:$0xf]
        %v3384 = vunpack.c.l.b16 %v3360
        %v3385 = vunpack.c.l.b16 %v3361
        %v3386 = vunpack.c.l.b16 %v3362
        %v3387 = vunpack.c.l.b16 %v3363
        %v3388 = vpack.c.b16 %v3385, %v3384
        %v3389 = vpack.c.b16 %v3387, %v3386
        %v3408 = vunpack.c.l.b16 %v3364
        %v3409 = vunpack.c.l.b16 %v3365
        %v3410 = vunpack.c.l.b16 %v3366
        %v3411 = vunpack.c.l.b16 %v3367
        %v3412 = vunpack.c.l.b16 %v3368
        %v3413 = vunpack.c.l.b16 %v3369
        %v3414 = vunpack.c.l.b16 %v3370
        %v3415 = vunpack.c.l.b16 %v3371
        %v3416 = vunpack.c.l.b16 %v3372
        %v3417 = vunpack.c.l.b16 %v3373
        %v3418 = vunpack.c.l.b16 %v3374
        %v3419 = vunpack.c.l.b16 %v3375
        %v3420 = vunpack.c.l.b16 %v3376
        %v3421 = vunpack.c.l.b16 %v3377
        %v3422 = vunpack.c.l.b16 %v3378
        %v3423 = vunpack.c.l.b16 %v3379
        %v3424 = vpack.c.b16 %v3409, %v3408
        %v3425 = vpack.c.b16 %v3411, %v3410
        %v3426 = vpack.c.b16 %v3413, %v3412
        %v3427 = vpack.c.b16 %v3415, %v3414
        %v3428 = vpack.c.b16 %v3417, %v3416
        %v3429 = vpack.c.b16 %v3419, %v3418
        %v3430 = vpack.c.b16 %v3421, %v3420
        %v3431 = vpack.c.b16 %v3423, %v3422
        %3440 = vmatpush.bf16.msra.mxu0 %v3431
        %3441 = vmatpush.bf16.msra.mxu0 %v3430
        %3442 = vmatpush.bf16.msra.mxu0 %v3429
        %3443 = vmatpush.bf16.msra.mxu0 %v3428
        %3444 = vmatpush.bf16.msra.mxu0 %v3427
        %3445 = vmatpush.bf16.msra.mxu0 %v3426
        %3446 = vmatpush.bf16.msra.mxu0 %v3425
        %3447 = vmatpush.bf16.msra.mxu0 %v3424
        %3448 = vmatmul.bf16.gmra.mxu0 %v3388
        %v3449 = vpop.f32.mrf.mxu0
        %v3450 = vadd.f32 0.0, %v3449
        %v3451 = vpop.f32.mrf.mxu0
        %v3452 = vadd.f32 0.0, %v3451
        %3453 = vmatmul.bf16.gmra.mxu0 %v3389
        %v3454 = vpop.f32.mrf.mxu0
        %v3455 = vadd.f32 0.0, %v3454
        %v3456 = vpop.f32.mrf.mxu0
        %v3457 = vadd.f32 0.0, %v3456
        %3458 = vdwg.mxu0
        %v3463 = vunpack.c.l.b16 %v3340
        %v3464 = vunpack.c.l.b16 %v3341
        %v3465 = vunpack.c.l.b16 %v3342
        %v3466 = vunpack.c.l.b16 %v3343
        %v3467 = vpack.c.b16 %v3464, %v3463
        %v3468 = vpack.c.b16 %v3466, %v3465
        %v3487 = vunpack.c.l.b16 %v3344
        %v3488 = vunpack.c.l.b16 %v3345
        %v3489 = vunpack.c.l.b16 %v3346
        %v3490 = vunpack.c.l.b16 %v3347
        %v3491 = vunpack.c.l.b16 %v3348
        %v3492 = vunpack.c.l.b16 %v3349
        %v3493 = vunpack.c.l.b16 %v3350
        %v3494 = vunpack.c.l.b16 %v3351
        %v3495 = vunpack.c.l.b16 %v3352
        %v3496 = vunpack.c.l.b16 %v3353
        %v3497 = vunpack.c.l.b16 %v3354
        %v3498 = vunpack.c.l.b16 %v3355
        %v3499 = vunpack.c.l.b16 %v3356
        %v3500 = vunpack.c.l.b16 %v3357
        %v3501 = vunpack.c.l.b16 %v3358
        %v3502 = vunpack.c.l.b16 %v3359
        %v3503 = vpack.c.b16 %v3488, %v3487
        %v3504 = vpack.c.b16 %v3490, %v3489
        %v3505 = vpack.c.b16 %v3492, %v3491
        %v3506 = vpack.c.b16 %v3494, %v3493
        %v3507 = vpack.c.b16 %v3496, %v3495
        %v3508 = vpack.c.b16 %v3498, %v3497
        %v3509 = vpack.c.b16 %v3500, %v3499
        %v3510 = vpack.c.b16 %v3502, %v3501
        %3519 = vmatpush.bf16.msra.mxu0 %v3510
        %3520 = vmatpush.bf16.msra.mxu0 %v3509
        %3521 = vmatpush.bf16.msra.mxu0 %v3508
        %3522 = vmatpush.bf16.msra.mxu0 %v3507
        %3523 = vmatpush.bf16.msra.mxu0 %v3506
        %3524 = vmatpush.bf16.msra.mxu0 %v3505
        %3525 = vmatpush.bf16.msra.mxu0 %v3504
        %3526 = vmatpush.bf16.msra.mxu0 %v3503
        %3527 = vmatmul.bf16.gmra.mxu0 %v3467
        %v3528 = vpop.f32.mrf.mxu0
        %v3529 = vadd.f32 %v3450, %v3528
        %v3530 = vpop.f32.mrf.mxu0
        %v3531 = vadd.f32 %v3452, %v3530
        %3532 = vmatmul.bf16.gmra.mxu0 %v3468
        %v3533 = vpop.f32.mrf.mxu0
        %v3534 = vadd.f32 %v3455, %v3533
        %v3535 = vpop.f32.mrf.mxu0
        %v3536 = vadd.f32 %v3457, %v3535
        %3537 = vdwg.mxu0
        %s3538 = scalar_lea.vmem %s476, 48 [#allocation2]
        %v3539 = vld [vmem:[%s3538] sm:$0xf]
        %v3540 = vld [vmem:[%s3538 + $0x4] sm:$0xf]
        %v3541 = vld [vmem:[%s3538 + $0x8] sm:$0xf]
        %v3542 = vld [vmem:[%s3538 + $0xc] sm:$0xf]
        %v3543 = vld [vmem:[%s698] sm:$0xf]
        %v3544 = vld [vmem:[%s698 + $0x4] sm:$0xf]
        %v3545 = vld [vmem:[%s698 + $0x8] sm:$0xf]
        %v3546 = vld [vmem:[%s698 + $0xc] sm:$0xf]
        %v3547 = vld [vmem:[%s698 + $0x10] sm:$0xf]
        %v3548 = vld [vmem:[%s698 + $0x14] sm:$0xf]
        %v3549 = vld [vmem:[%s698 + $0x18] sm:$0xf]
        %v3550 = vld [vmem:[%s698 + $0x1c] sm:$0xf]
        %v3551 = vld [vmem:[%s698 + $0x20] sm:$0xf]
        %v3552 = vld [vmem:[%s698 + $0x24] sm:$0xf]
        %v3553 = vld [vmem:[%s698 + $0x28] sm:$0xf]
        %v3554 = vld [vmem:[%s698 + $0x2c] sm:$0xf]
        %v3555 = vld [vmem:[%s698 + $0x30] sm:$0xf]
        %v3556 = vld [vmem:[%s698 + $0x34] sm:$0xf]
        %v3557 = vld [vmem:[%s698 + $0x38] sm:$0xf]
        %v3558 = vld [vmem:[%s698 + $0x3c] sm:$0xf]
        %v3563 = vunpack.c.l.b16 %v3539
        %v3564 = vunpack.c.l.b16 %v3540
        %v3565 = vunpack.c.l.b16 %v3541
        %v3566 = vunpack.c.l.b16 %v3542
        %v3567 = vpack.c.b16 %v3564, %v3563
        %v3568 = vpack.c.b16 %v3566, %v3565
        %v3587 = vunpack.c.l.b16 %v3543
        %v3588 = vunpack.c.l.b16 %v3544
        %v3589 = vunpack.c.l.b16 %v3545
        %v3590 = vunpack.c.l.b16 %v3546
        %v3591 = vunpack.c.l.b16 %v3547
        %v3592 = vunpack.c.l.b16 %v3548
        %v3593 = vunpack.c.l.b16 %v3549
        %v3594 = vunpack.c.l.b16 %v3550
        %v3595 = vunpack.c.l.b16 %v3551
        %v3596 = vunpack.c.l.b16 %v3552
        %v3597 = vunpack.c.l.b16 %v3553
        %v3598 = vunpack.c.l.b16 %v3554
        %v3599 = vunpack.c.l.b16 %v3555
        %v3600 = vunpack.c.l.b16 %v3556
        %v3601 = vunpack.c.l.b16 %v3557
        %v3602 = vunpack.c.l.b16 %v3558
        %v3603 = vpack.c.b16 %v3588, %v3587
        %v3604 = vpack.c.b16 %v3590, %v3589
        %v3605 = vpack.c.b16 %v3592, %v3591
        %v3606 = vpack.c.b16 %v3594, %v3593
        %v3607 = vpack.c.b16 %v3596, %v3595
        %v3608 = vpack.c.b16 %v3598, %v3597
        %v3609 = vpack.c.b16 %v3600, %v3599
        %v3610 = vpack.c.b16 %v3602, %v3601
        %3619 = vmatpush.bf16.msra.mxu0 %v3610
        %3620 = vmatpush.bf16.msra.mxu0 %v3609
        %3621 = vmatpush.bf16.msra.mxu0 %v3608
        %3622 = vmatpush.bf16.msra.mxu0 %v3607
        %3623 = vmatpush.bf16.msra.mxu0 %v3606
        %3624 = vmatpush.bf16.msra.mxu0 %v3605
        %3625 = vmatpush.bf16.msra.mxu0 %v3604
        %3626 = vmatpush.bf16.msra.mxu0 %v3603
        %3627 = vmatmul.bf16.gmra.mxu0 %v3567
        %v3628 = vpop.f32.mrf.mxu0
        %v3629 = vadd.f32 0.0, %v3628
        %v3630 = vpop.f32.mrf.mxu0
        %v3631 = vadd.f32 0.0, %v3630
        %3632 = vmatmul.bf16.gmra.mxu0 %v3568
        %v3633 = vpop.f32.mrf.mxu0
        %v3634 = vadd.f32 0.0, %v3633
        %v3635 = vpop.f32.mrf.mxu0
        %v3636 = vadd.f32 0.0, %v3635
        %3637 = vdwg.mxu0
        %v3638 = vadd.f32 %v3529, %v3629
        %v3639 = vadd.f32 %v3531, %v3631
        %v3640 = vadd.f32 %v3534, %v3634
        %v3641 = vadd.f32 %v3536, %v3636
        %v3642 = vadd.f32 %v3638, %v571
        %v3643 = vadd.f32 %v3639, %v571
        %v3644 = vadd.f32 %v3640, %v571
        %v3645 = vadd.f32 %v3641, %v571
        %v3646 = vmax.f32 %v3642, 0.0
        %v3647 = vmax.f32 %v3643, 0.0
        %v3648 = vmax.f32 %v3644, 0.0
        %v3649 = vmax.f32 %v3645, 0.0
        %v3650 = vld [vmem:[%s2283] sm:$0xf]
        %v3651 = vld [vmem:[%s882] sm:$0xf]
        %3652 = vmatpush.bf16.msra.mxu0 %v3431
        %3653 = vmatpush.bf16.msra.mxu0 %v3430
        %3654 = vmatpush.bf16.msra.mxu0 %v3429
        %3655 = vmatpush.bf16.msra.mxu0 %v3428
        %3656 = vmatpush.bf16.msra.mxu0 %v3427
        %3657 = vmatpush.bf16.msra.mxu0 %v3426
        %3658 = vmatpush.bf16.msra.mxu0 %v3425
        %3659 = vmatpush.bf16.msra.mxu0 %v3424
        %3660 = vmatmul.bf16.gmra.mxu0 %v3651
        %v3661 = vpop.f32.mrf.mxu0
        %v3662 = vadd.f32 0.0, %v3661
        %v3663 = vpop.f32.mrf.mxu0
        %3664 = vdwg.mxu0
        %3665 = vmatpush.bf16.msra.mxu0 %v3510
        %3666 = vmatpush.bf16.msra.mxu0 %v3509
        %3667 = vmatpush.bf16.msra.mxu0 %v3508
        %3668 = vmatpush.bf16.msra.mxu0 %v3507
        %3669 = vmatpush.bf16.msra.mxu0 %v3506
        %3670 = vmatpush.bf16.msra.mxu0 %v3505
        %3671 = vmatpush.bf16.msra.mxu0 %v3504
        %3672 = vmatpush.bf16.msra.mxu0 %v3503
        %3673 = vmatmul.bf16.gmra.mxu0 %v3650
        %v3674 = vpop.f32.mrf.mxu0
        %v3675 = vadd.f32 %v3662, %v3674
        %v3676 = vpop.f32.mrf.mxu0
        %3677 = vdwg.mxu0
        %s3678 = scalar_lea.vmem %s486, 12 [#allocation5]
        %v3679 = vld [vmem:[%s3678] sm:$0xf]
        %3680 = vmatpush.bf16.msra.mxu0 %v3610
        %3681 = vmatpush.bf16.msra.mxu0 %v3609
        %3682 = vmatpush.bf16.msra.mxu0 %v3608
        %3683 = vmatpush.bf16.msra.mxu0 %v3607
        %3684 = vmatpush.bf16.msra.mxu0 %v3606
        %3685 = vmatpush.bf16.msra.mxu0 %v3605
        %3686 = vmatpush.bf16.msra.mxu0 %v3604
        %3687 = vmatpush.bf16.msra.mxu0 %v3603
        %3688 = vmatmul.bf16.gmra.mxu0 %v3679
        %v3689 = vpop.f32.mrf.mxu0
        %v3690 = vadd.f32 0.0, %v3689
        %v3691 = vpop.f32.mrf.mxu0
        %3692 = vdwg.mxu0
        %v3693 = vadd.f32 %v3675, %v3690
        %v3694 = vadd.f32 %v3693, %v571
        %v3695 = vmax.f32 %v3694, 0.0
        %v3696 = vsel %vm914, 0.0, %v3695
        %v3697 = vld [vmem:[%s2330] sm:$0xf]
        %v3698 = vld [vmem:[%s917] sm:$0xf]
        %3699 = vmatpush.bf16.msra.mxu0 %v3431
        %3700 = vmatpush.bf16.msra.mxu0 %v3430
        %3701 = vmatpush.bf16.msra.mxu0 %v3429
        %3702 = vmatpush.bf16.msra.mxu0 %v3428
        %3703 = vmatpush.bf16.msra.mxu0 %v3427
        %3704 = vmatpush.bf16.msra.mxu0 %v3426
        %3705 = vmatpush.bf16.msra.mxu0 %v3425
        %3706 = vmatpush.bf16.msra.mxu0 %v3424
        %3707 = vmatmul.bf16.gmra.mxu0 %v3698
        %v3708 = vpop.f32.mrf.mxu0
        %v3709 = vadd.f32 0.0, %v3708
        %v3710 = vpop.f32.mrf.mxu0
        %3711 = vdwg.mxu0
        %3712 = vmatpush.bf16.msra.mxu0 %v3510
        %3713 = vmatpush.bf16.msra.mxu0 %v3509
        %3714 = vmatpush.bf16.msra.mxu0 %v3508
        %3715 = vmatpush.bf16.msra.mxu0 %v3507
        %3716 = vmatpush.bf16.msra.mxu0 %v3506
        %3717 = vmatpush.bf16.msra.mxu0 %v3505
        %3718 = vmatpush.bf16.msra.mxu0 %v3504
        %3719 = vmatpush.bf16.msra.mxu0 %v3503
        %3720 = vmatmul.bf16.gmra.mxu0 %v3697
        %v3721 = vpop.f32.mrf.mxu0
        %v3722 = vadd.f32 %v3709, %v3721
        %v3723 = vpop.f32.mrf.mxu0
        %3724 = vdwg.mxu0
        %s3725 = scalar_lea.vmem %s496, 12 [#allocation7]
        %v3726 = vld [vmem:[%s3725] sm:$0xf]
        %3727 = vmatpush.bf16.msra.mxu0 %v3610
        %3728 = vmatpush.bf16.msra.mxu0 %v3609
        %3729 = vmatpush.bf16.msra.mxu0 %v3608
        %3730 = vmatpush.bf16.msra.mxu0 %v3607
        %3731 = vmatpush.bf16.msra.mxu0 %v3606
        %3732 = vmatpush.bf16.msra.mxu0 %v3605
        %3733 = vmatpush.bf16.msra.mxu0 %v3604
        %3734 = vmatpush.bf16.msra.mxu0 %v3603
        %3735 = vmatmul.bf16.gmra.mxu0 %v3726
        %v3736 = vpop.f32.mrf.mxu0
        %v3737 = vadd.f32 0.0, %v3736
        %v3738 = vpop.f32.mrf.mxu0
        %3739 = vdwg.mxu0
        %v3740 = vadd.f32 %v3722, %v3737
        %v3741 = vadd.f32 %v3740, %v571
        %v3742 = vmax.f32 %v3741, 0.0
        %v3743 = vsel %vm949, 0.0, %v3742
        %v3750 = vrot.slane %v3696, 7
        %v3751 = vrot.slane %v3646, 7
        %v3752 = vsel %vm957, %v3750, %v3751
        %v3753 = vrot.slane %v3647, 7
        %v3754 = vsel %vm957, %v3751, %v3753
        %v3755 = vrot.slane %v3648, 7
        %v3756 = vsel %vm957, %v3753, %v3755
        %v3757 = vrot.slane %v3649, 7
        %v3758 = vsel %vm957, %v3755, %v3757
        %v3759 = vrot.slane %v3743, 7
        %v3760 = vsel %vm957, %v3757, %v3759
        %v3767 = vsel %vm957, 0.0, %v3750
        %v3768 = vsel %vm660, %v3767, 0.0
        %v3769 = vsel %vm661, %v3752, 0.0
        %v3770 = vsel %vm662, %v3754, 0.0
        %v3771 = vsel %vm663, %v3756, 0.0
        %v3772 = vsel %vm664, %v3758, 0.0
        %v3773 = vsel %vm665, %v3760, 0.0
        %v3774 = vrot.slane %v3696, 1
        %v3775 = vrot.slane %v3646, 1
        %v3776 = vsel %vm982, %v3774, %v3775
        %v3777 = vrot.slane %v3647, 1
        %v3778 = vsel %vm982, %v3775, %v3777
        %v3779 = vrot.slane %v3648, 1
        %v3780 = vsel %vm982, %v3777, %v3779
        %v3781 = vrot.slane %v3649, 1
        %v3782 = vsel %vm982, %v3779, %v3781
        %v3783 = vrot.slane %v3743, 1
        %v3784 = vsel %vm982, %v3781, %v3783
        %v3791 = vsel %vm982, %v3783, 0.0
        %v3792 = vsel %vm666, %v3776, 0.0
        %v3793 = vsel %vm667, %v3778, 0.0
        %v3794 = vsel %vm668, %v3780, 0.0
        %v3795 = vsel %vm669, %v3782, 0.0
        %v3796 = vsel %vm670, %v3784, 0.0
        %v3797 = vsel %vm671, %v3791, 0.0
        %v3798 = vpack.c.bf16 %v3696, %v3768
        %v3799 = vpack.c.bf16 %v3792, %v3792
        %v3800 = vpack.c.bf16 %v3646, %v3769
        %v3801 = vpack.c.bf16 %v3793, %v3793
        %v3802 = vpack.c.bf16 %v3647, %v3770
        %v3803 = vpack.c.bf16 %v3794, %v3794
        %v3804 = vpack.c.bf16 %v3648, %v3771
        %v3805 = vpack.c.bf16 %v3795, %v3795
        %v3806 = vpack.c.bf16 %v3649, %v3772
        %v3807 = vpack.c.bf16 %v3796, %v3796
        %v3808 = vpack.c.bf16 %v3743, %v3773
        %v3809 = vpack.c.bf16 %v3797, %v3797
        %v3810 = vld [vmem:[#allocation10] sm:$0xf]
        %v3811 = vld [vmem:[#allocation10 + $0x4] sm:$0xf]
        %v3812 = vld [vmem:[#allocation10 + $0x8] sm:$0xf]
        %v3813 = vld [vmem:[#allocation10 + $0xc] sm:$0xf]
        %v3814 = vld [vmem:[#allocation10 + $0x10] sm:$0xf]
        %v3815 = vld [vmem:[#allocation10 + $0x14] sm:$0xf]
        %v3816 = vld [vmem:[#allocation10 + $0x18] sm:$0xf]
        %v3817 = vld [vmem:[#allocation10 + $0x1c] sm:$0xf]
        %v3818 = vld [vmem:[#allocation10 + $0x20] sm:$0xf]
        %v3819 = vld [vmem:[#allocation10 + $0x24] sm:$0xf]
        %v3820 = vld [vmem:[#allocation10 + $0x28] sm:$0xf]
        %v3821 = vld [vmem:[#allocation10 + $0x2c] sm:$0xf]
        %v3822 = vld [vmem:[#allocation10 + $0x30] sm:$0xf]
        %v3823 = vld [vmem:[#allocation10 + $0x34] sm:$0xf]
        %v3824 = vld [vmem:[#allocation10 + $0x38] sm:$0xf]
        %v3825 = vld [vmem:[#allocation10 + $0x3c] sm:$0xf]
        %v3826 = vld [vmem:[#allocation10 + $0x40] sm:$0xf]
        %v3827 = vld [vmem:[#allocation10 + $0x44] sm:$0xf]
        %v3828 = vld [vmem:[#allocation10 + $0x48] sm:$0xf]
        %v3829 = vld [vmem:[#allocation10 + $0x4c] sm:$0xf]
        %v3830 = vld [vmem:[#allocation10 + $0x50] sm:$0xf]
        %v3831 = vld [vmem:[#allocation10 + $0x54] sm:$0xf]
        %v3832 = vld [vmem:[#allocation10 + $0x58] sm:$0xf]
        %v3833 = vld [vmem:[#allocation10 + $0x5c] sm:$0xf]
        %v3834 = vld [vmem:[#allocation10 + $0x60] sm:$0xf]
        %v3835 = vld [vmem:[#allocation10 + $0x64] sm:$0xf]
        %v3836 = vld [vmem:[#allocation10 + $0x68] sm:$0xf]
        %v3837 = vld [vmem:[#allocation10 + $0x6c] sm:$0xf]
        %v3838 = vld [vmem:[#allocation10 + $0x70] sm:$0xf]
        %v3839 = vld [vmem:[#allocation10 + $0x74] sm:$0xf]
        %v3840 = vld [vmem:[#allocation10 + $0x78] sm:$0xf]
        %v3841 = vld [vmem:[#allocation10 + $0x7c] sm:$0xf]
        %v3842 = vld [vmem:[#allocation10 + $0x80] sm:$0xf]
        %v3843 = vld [vmem:[#allocation10 + $0x84] sm:$0xf]
        %v3844 = vld [vmem:[#allocation10 + $0x88] sm:$0xf]
        %v3845 = vld [vmem:[#allocation10 + $0x8c] sm:$0xf]
        %v3846 = vld [vmem:[#allocation10 + $0x90] sm:$0xf]
        %v3847 = vld [vmem:[#allocation10 + $0x94] sm:$0xf]
        %v3848 = vld [vmem:[#allocation10 + $0x98] sm:$0xf]
        %v3849 = vld [vmem:[#allocation10 + $0x9c] sm:$0xf]
        %v3850 = vld [vmem:[#allocation10 + $0xa0] sm:$0xf]
        %v3851 = vld [vmem:[#allocation10 + $0xa4] sm:$0xf]
        %v3852 = vld [vmem:[#allocation10 + $0xa8] sm:$0xf]
        %v3853 = vld [vmem:[#allocation10 + $0xac] sm:$0xf]
        %v3854 = vld [vmem:[#allocation10 + $0xb0] sm:$0xf]
        %v3855 = vld [vmem:[#allocation10 + $0xb4] sm:$0xf]
        %v3856 = vld [vmem:[#allocation10 + $0xb8] sm:$0xf]
        %v3857 = vld [vmem:[#allocation10 + $0xbc] sm:$0xf]
        %v3858 = vld [vmem:[%s1067] sm:$0xf]
        %v3859 = vld [vmem:[%s1067 + $0x4] sm:$0xf]
        %v3860 = vld [vmem:[%s1067 + $0x8] sm:$0xf]
        %v3861 = vld [vmem:[%s1067 + $0xc] sm:$0xf]
        %v3862 = vld [vmem:[%s1067 + $0x10] sm:$0xf]
        %v3863 = vld [vmem:[%s1067 + $0x14] sm:$0xf]
        %v3864 = vld [vmem:[%s1067 + $0x18] sm:$0xf]
        %v3865 = vld [vmem:[%s1067 + $0x1c] sm:$0xf]
        %v3866 = vld [vmem:[%s1067 + $0x20] sm:$0xf]
        %v3867 = vld [vmem:[%s1067 + $0x24] sm:$0xf]
        %v3868 = vld [vmem:[%s1067 + $0x28] sm:$0xf]
        %v3869 = vld [vmem:[%s1067 + $0x2c] sm:$0xf]
        %v3870 = vld [vmem:[%s1067 + $0x30] sm:$0xf]
        %v3871 = vld [vmem:[%s1067 + $0x34] sm:$0xf]
        %v3872 = vld [vmem:[%s1067 + $0x38] sm:$0xf]
        %v3873 = vld [vmem:[%s1067 + $0x3c] sm:$0xf]
        %v3874 = vld [vmem:[%s1067 + $0x40] sm:$0xf]
        %v3875 = vld [vmem:[%s1067 + $0x44] sm:$0xf]
        %v3876 = vld [vmem:[%s1067 + $0x48] sm:$0xf]
        %v3877 = vld [vmem:[%s1067 + $0x4c] sm:$0xf]
        %v3878 = vld [vmem:[%s1067 + $0x50] sm:$0xf]
        %v3879 = vld [vmem:[%s1067 + $0x54] sm:$0xf]
        %v3880 = vld [vmem:[%s1067 + $0x58] sm:$0xf]
        %v3881 = vld [vmem:[%s1067 + $0x5c] sm:$0xf]
        %v3882 = vld [vmem:[%s1067 + $0x60] sm:$0xf]
        %v3883 = vld [vmem:[%s1067 + $0x64] sm:$0xf]
        %v3884 = vld [vmem:[%s1067 + $0x68] sm:$0xf]
        %v3885 = vld [vmem:[%s1067 + $0x6c] sm:$0xf]
        %v3886 = vld [vmem:[%s1067 + $0x70] sm:$0xf]
        %v3887 = vld [vmem:[%s1067 + $0x74] sm:$0xf]
        %v3888 = vld [vmem:[%s1067 + $0x78] sm:$0xf]
        %v3889 = vld [vmem:[%s1067 + $0x7c] sm:$0xf]
        %v3890 = vld [vmem:[%s1067 + $0x80] sm:$0xf]
        %v3891 = vld [vmem:[%s1067 + $0x84] sm:$0xf]
        %v3892 = vld [vmem:[%s1067 + $0x88] sm:$0xf]
        %v3893 = vld [vmem:[%s1067 + $0x8c] sm:$0xf]
        %v3894 = vld [vmem:[%s1067 + $0x90] sm:$0xf]
        %v3895 = vld [vmem:[%s1067 + $0x94] sm:$0xf]
        %v3896 = vld [vmem:[%s1067 + $0x98] sm:$0xf]
        %v3897 = vld [vmem:[%s1067 + $0x9c] sm:$0xf]
        %v3898 = vld [vmem:[%s1067 + $0xa0] sm:$0xf]
        %v3899 = vld [vmem:[%s1067 + $0xa4] sm:$0xf]
        %v3900 = vld [vmem:[%s1067 + $0xa8] sm:$0xf]
        %v3901 = vld [vmem:[%s1067 + $0xac] sm:$0xf]
        %v3902 = vld [vmem:[%s1067 + $0xb0] sm:$0xf]
        %v3903 = vld [vmem:[%s1067 + $0xb4] sm:$0xf]
        %v3904 = vld [vmem:[%s1067 + $0xb8] sm:$0xf]
        %v3905 = vld [vmem:[%s1067 + $0xbc] sm:$0xf]
        %v3914 = vunpack.c.l.b16 %v3800
        %v3915 = vunpack.c.h.b16 %v3800
        %v3916 = vunpack.c.l.b16 %v3801
        %v3917 = vunpack.c.l.b16 %v3802
        %v3918 = vunpack.c.h.b16 %v3802
        %v3919 = vunpack.c.l.b16 %v3803
        %v3920 = vunpack.c.l.b16 %v3804
        %v3921 = vunpack.c.h.b16 %v3804
        %v3922 = vunpack.c.l.b16 %v3805
        %v3923 = vunpack.c.l.b16 %v3806
        %v3924 = vunpack.c.h.b16 %v3806
        %v3925 = vunpack.c.l.b16 %v3807
        %v3926 = vpack.c.b16 %v3917, %v3914
        %v3927 = vpack.c.b16 %v3918, %v3915
        %v3928 = vpack.c.b16 %v3919, %v3916
        %v3929 = vpack.c.b16 %v3923, %v3920
        %v3930 = vpack.c.b16 %v3924, %v3921
        %v3931 = vpack.c.b16 %v3925, %v3922
        %v3986 = vunpack.c.l.b16 %v3858
        %v3987 = vunpack.c.l.b16 %v3859
        %v3988 = vunpack.c.l.b16 %v3860
        %v3989 = vunpack.c.l.b16 %v3861
        %v3990 = vunpack.c.l.b16 %v3862
        %v3991 = vunpack.c.l.b16 %v3863
        %v3992 = vunpack.c.l.b16 %v3864
        %v3993 = vunpack.c.l.b16 %v3865
        %v3994 = vunpack.c.l.b16 %v3866
        %v3995 = vunpack.c.l.b16 %v3867
        %v3996 = vunpack.c.l.b16 %v3868
        %v3997 = vunpack.c.l.b16 %v3869
        %v3998 = vunpack.c.l.b16 %v3870
        %v3999 = vunpack.c.l.b16 %v3871
        %v4000 = vunpack.c.l.b16 %v3872
        %v4001 = vunpack.c.l.b16 %v3873
        %v4002 = vunpack.c.l.b16 %v3874
        %v4003 = vunpack.c.l.b16 %v3875
        %v4004 = vunpack.c.l.b16 %v3876
        %v4005 = vunpack.c.l.b16 %v3877
        %v4006 = vunpack.c.l.b16 %v3878
        %v4007 = vunpack.c.l.b16 %v3879
        %v4008 = vunpack.c.l.b16 %v3880
        %v4009 = vunpack.c.l.b16 %v3881
        %v4010 = vunpack.c.l.b16 %v3882
        %v4011 = vunpack.c.l.b16 %v3883
        %v4012 = vunpack.c.l.b16 %v3884
        %v4013 = vunpack.c.l.b16 %v3885
        %v4014 = vunpack.c.l.b16 %v3886
        %v4015 = vunpack.c.l.b16 %v3887
        %v4016 = vunpack.c.l.b16 %v3888
        %v4017 = vunpack.c.l.b16 %v3889
        %v4018 = vunpack.c.l.b16 %v3890
        %v4019 = vunpack.c.l.b16 %v3891
        %v4020 = vunpack.c.l.b16 %v3892
        %v4021 = vunpack.c.l.b16 %v3893
        %v4022 = vunpack.c.l.b16 %v3894
        %v4023 = vunpack.c.l.b16 %v3895
        %v4024 = vunpack.c.l.b16 %v3896
        %v4025 = vunpack.c.l.b16 %v3897
        %v4026 = vunpack.c.l.b16 %v3898
        %v4027 = vunpack.c.l.b16 %v3899
        %v4028 = vunpack.c.l.b16 %v3900
        %v4029 = vunpack.c.l.b16 %v3901
        %v4030 = vunpack.c.l.b16 %v3902
        %v4031 = vunpack.c.l.b16 %v3903
        %v4032 = vunpack.c.l.b16 %v3904
        %v4033 = vunpack.c.l.b16 %v3905
        %v4034 = vpack.c.b16 %v3987, %v3986
        %v4035 = vpack.c.b16 %v3989, %v3988
        %v4036 = vpack.c.b16 %v3991, %v3990
        %v4037 = vpack.c.b16 %v3993, %v3992
        %v4038 = vpack.c.b16 %v3995, %v3994
        %v4039 = vpack.c.b16 %v3997, %v3996
        %v4040 = vpack.c.b16 %v3999, %v3998
        %v4041 = vpack.c.b16 %v4001, %v4000
        %v4042 = vpack.c.b16 %v4003, %v4002
        %v4043 = vpack.c.b16 %v4005, %v4004
        %v4044 = vpack.c.b16 %v4007, %v4006
        %v4045 = vpack.c.b16 %v4009, %v4008
        %v4046 = vpack.c.b16 %v4011, %v4010
        %v4047 = vpack.c.b16 %v4013, %v4012
        %v4048 = vpack.c.b16 %v4015, %v4014
        %v4049 = vpack.c.b16 %v4017, %v4016
        %v4050 = vpack.c.b16 %v4019, %v4018
        %v4051 = vpack.c.b16 %v4021, %v4020
        %v4052 = vpack.c.b16 %v4023, %v4022
        %v4053 = vpack.c.b16 %v4025, %v4024
        %v4054 = vpack.c.b16 %v4027, %v4026
        %v4055 = vpack.c.b16 %v4029, %v4028
        %v4056 = vpack.c.b16 %v4031, %v4030
        %v4057 = vpack.c.b16 %v4033, %v4032
        %4082 = vmatpush.bf16.msra.mxu0 %v4041
        %4083 = vmatpush.bf16.msra.mxu0 %v4040
        %4084 = vmatpush.bf16.msra.mxu0 %v4039
        %4085 = vmatpush.bf16.msra.mxu0 %v4038
        %4086 = vmatpush.bf16.msra.mxu0 %v4037
        %4087 = vmatpush.bf16.msra.mxu0 %v4036
        %4088 = vmatpush.bf16.msra.mxu0 %v4035
        %4089 = vmatpush.bf16.msra.mxu0 %v4034
        %4090 = vmatmul.bf16.gmra.mxu0 %v3926
        %v4091 = vpop.f32.mrf.mxu0
        %v4092 = vadd.f32 0.0, %v4091
        %v4093 = vpop.f32.mrf.mxu0
        %v4094 = vadd.f32 0.0, %v4093
        %4095 = vmatmul.bf16.gmra.mxu0 %v3929
        %v4096 = vpop.f32.mrf.mxu0
        %v4097 = vadd.f32 0.0, %v4096
        %v4098 = vpop.f32.mrf.mxu0
        %v4099 = vadd.f32 0.0, %v4098
        %4100 = vdwg.mxu0
        %4101 = vmatpush.bf16.msra.mxu0 %v4049
        %4102 = vmatpush.bf16.msra.mxu0 %v4048
        %4103 = vmatpush.bf16.msra.mxu0 %v4047
        %4104 = vmatpush.bf16.msra.mxu0 %v4046
        %4105 = vmatpush.bf16.msra.mxu0 %v4045
        %4106 = vmatpush.bf16.msra.mxu0 %v4044
        %4107 = vmatpush.bf16.msra.mxu0 %v4043
        %4108 = vmatpush.bf16.msra.mxu0 %v4042
        %4109 = vmatmul.bf16.gmra.mxu0 %v3927
        %v4110 = vpop.f32.mrf.mxu0
        %v4111 = vadd.f32 %v4092, %v4110
        %v4112 = vpop.f32.mrf.mxu0
        %v4113 = vadd.f32 %v4094, %v4112
        %4114 = vmatmul.bf16.gmra.mxu0 %v3930
        %v4115 = vpop.f32.mrf.mxu0
        %v4116 = vadd.f32 %v4097, %v4115
        %v4117 = vpop.f32.mrf.mxu0
        %v4118 = vadd.f32 %v4099, %v4117
        %4119 = vdwg.mxu0
        %4120 = vmatpush.bf16.msra.mxu0 %v4057
        %4121 = vmatpush.bf16.msra.mxu0 %v4056
        %4122 = vmatpush.bf16.msra.mxu0 %v4055
        %4123 = vmatpush.bf16.msra.mxu0 %v4054
        %4124 = vmatpush.bf16.msra.mxu0 %v4053
        %4125 = vmatpush.bf16.msra.mxu0 %v4052
        %4126 = vmatpush.bf16.msra.mxu0 %v4051
        %4127 = vmatpush.bf16.msra.mxu0 %v4050
        %4128 = vmatmul.bf16.gmra.mxu0 %v3928
        %v4129 = vpop.f32.mrf.mxu0
        %v4130 = vadd.f32 %v4111, %v4129
        %v4131 = vpop.f32.mrf.mxu0
        %v4132 = vadd.f32 %v4113, %v4131
        %4133 = vmatmul.bf16.gmra.mxu0 %v3931
        %v4134 = vpop.f32.mrf.mxu0
        %v4135 = vadd.f32 %v4116, %v4134
        %v4136 = vpop.f32.mrf.mxu0
        %v4137 = vadd.f32 %v4118, %v4136
        %4138 = vdwg.mxu0
        %v4141 = vunpack.c.l.b16 %v3798
        %v4142 = vunpack.c.h.b16 %v3798
        %v4143 = vunpack.c.l.b16 %v3799
        %v4144 = vpack.c.b16 %v3914, %v4141
        %v4145 = vpack.c.b16 %v3915, %v4142
        %v4146 = vpack.c.b16 %v3916, %v4143
        %v4147 = vpack.c.b16 %v3920, %v3917
        %v4148 = vpack.c.b16 %v3921, %v3918
        %v4149 = vpack.c.b16 %v3922, %v3919
        %v4204 = vunpack.c.l.b16 %v3810
        %v4205 = vunpack.c.l.b16 %v3811
        %v4206 = vunpack.c.l.b16 %v3812
        %v4207 = vunpack.c.l.b16 %v3813
        %v4208 = vunpack.c.l.b16 %v3814
        %v4209 = vunpack.c.l.b16 %v3815
        %v4210 = vunpack.c.l.b16 %v3816
        %v4211 = vunpack.c.l.b16 %v3817
        %v4212 = vunpack.c.l.b16 %v3818
        %v4213 = vunpack.c.l.b16 %v3819
        %v4214 = vunpack.c.l.b16 %v3820
        %v4215 = vunpack.c.l.b16 %v3821
        %v4216 = vunpack.c.l.b16 %v3822
        %v4217 = vunpack.c.l.b16 %v3823
        %v4218 = vunpack.c.l.b16 %v3824
        %v4219 = vunpack.c.l.b16 %v3825
        %v4220 = vunpack.c.l.b16 %v3826
        %v4221 = vunpack.c.l.b16 %v3827
        %v4222 = vunpack.c.l.b16 %v3828
        %v4223 = vunpack.c.l.b16 %v3829
        %v4224 = vunpack.c.l.b16 %v3830
        %v4225 = vunpack.c.l.b16 %v3831
        %v4226 = vunpack.c.l.b16 %v3832
        %v4227 = vunpack.c.l.b16 %v3833
        %v4228 = vunpack.c.l.b16 %v3834
        %v4229 = vunpack.c.l.b16 %v3835
        %v4230 = vunpack.c.l.b16 %v3836
        %v4231 = vunpack.c.l.b16 %v3837
        %v4232 = vunpack.c.l.b16 %v3838
        %v4233 = vunpack.c.l.b16 %v3839
        %v4234 = vunpack.c.l.b16 %v3840
        %v4235 = vunpack.c.l.b16 %v3841
        %v4236 = vunpack.c.l.b16 %v3842
        %v4237 = vunpack.c.l.b16 %v3843
        %v4238 = vunpack.c.l.b16 %v3844
        %v4239 = vunpack.c.l.b16 %v3845
        %v4240 = vunpack.c.l.b16 %v3846
        %v4241 = vunpack.c.l.b16 %v3847
        %v4242 = vunpack.c.l.b16 %v3848
        %v4243 = vunpack.c.l.b16 %v3849
        %v4244 = vunpack.c.l.b16 %v3850
        %v4245 = vunpack.c.l.b16 %v3851
        %v4246 = vunpack.c.l.b16 %v3852
        %v4247 = vunpack.c.l.b16 %v3853
        %v4248 = vunpack.c.l.b16 %v3854
        %v4249 = vunpack.c.l.b16 %v3855
        %v4250 = vunpack.c.l.b16 %v3856
        %v4251 = vunpack.c.l.b16 %v3857
        %v4252 = vpack.c.b16 %v4205, %v4204
        %v4253 = vpack.c.b16 %v4207, %v4206
        %v4254 = vpack.c.b16 %v4209, %v4208
        %v4255 = vpack.c.b16 %v4211, %v4210
        %v4256 = vpack.c.b16 %v4213, %v4212
        %v4257 = vpack.c.b16 %v4215, %v4214
        %v4258 = vpack.c.b16 %v4217, %v4216
        %v4259 = vpack.c.b16 %v4219, %v4218
        %v4260 = vpack.c.b16 %v4221, %v4220
        %v4261 = vpack.c.b16 %v4223, %v4222
        %v4262 = vpack.c.b16 %v4225, %v4224
        %v4263 = vpack.c.b16 %v4227, %v4226
        %v4264 = vpack.c.b16 %v4229, %v4228
        %v4265 = vpack.c.b16 %v4231, %v4230
        %v4266 = vpack.c.b16 %v4233, %v4232
        %v4267 = vpack.c.b16 %v4235, %v4234
        %v4268 = vpack.c.b16 %v4237, %v4236
        %v4269 = vpack.c.b16 %v4239, %v4238
        %v4270 = vpack.c.b16 %v4241, %v4240
        %v4271 = vpack.c.b16 %v4243, %v4242
        %v4272 = vpack.c.b16 %v4245, %v4244
        %v4273 = vpack.c.b16 %v4247, %v4246
        %v4274 = vpack.c.b16 %v4249, %v4248
        %v4275 = vpack.c.b16 %v4251, %v4250
        %4300 = vmatpush.bf16.msra.mxu0 %v4259
        %4301 = vmatpush.bf16.msra.mxu0 %v4258
        %4302 = vmatpush.bf16.msra.mxu0 %v4257
        %4303 = vmatpush.bf16.msra.mxu0 %v4256
        %4304 = vmatpush.bf16.msra.mxu0 %v4255
        %4305 = vmatpush.bf16.msra.mxu0 %v4254
        %4306 = vmatpush.bf16.msra.mxu0 %v4253
        %4307 = vmatpush.bf16.msra.mxu0 %v4252
        %4308 = vmatmul.bf16.gmra.mxu0 %v4144
        %v4309 = vpop.f32.mrf.mxu0
        %v4310 = vadd.f32 %v4130, %v4309
        %v4311 = vpop.f32.mrf.mxu0
        %v4312 = vadd.f32 %v4132, %v4311
        %4313 = vmatmul.bf16.gmra.mxu0 %v4147
        %v4314 = vpop.f32.mrf.mxu0
        %v4315 = vadd.f32 %v4135, %v4314
        %v4316 = vpop.f32.mrf.mxu0
        %v4317 = vadd.f32 %v4137, %v4316
        %4318 = vdwg.mxu0
        %4319 = vmatpush.bf16.msra.mxu0 %v4267
        %4320 = vmatpush.bf16.msra.mxu0 %v4266
        %4321 = vmatpush.bf16.msra.mxu0 %v4265
        %4322 = vmatpush.bf16.msra.mxu0 %v4264
        %4323 = vmatpush.bf16.msra.mxu0 %v4263
        %4324 = vmatpush.bf16.msra.mxu0 %v4262
        %4325 = vmatpush.bf16.msra.mxu0 %v4261
        %4326 = vmatpush.bf16.msra.mxu0 %v4260
        %4327 = vmatmul.bf16.gmra.mxu0 %v4145
        %v4328 = vpop.f32.mrf.mxu0
        %v4329 = vadd.f32 %v4310, %v4328
        %v4330 = vpop.f32.mrf.mxu0
        %v4331 = vadd.f32 %v4312, %v4330
        %4332 = vmatmul.bf16.gmra.mxu0 %v4148
        %v4333 = vpop.f32.mrf.mxu0
        %v4334 = vadd.f32 %v4315, %v4333
        %v4335 = vpop.f32.mrf.mxu0
        %v4336 = vadd.f32 %v4317, %v4335
        %4337 = vdwg.mxu0
        %4338 = vmatpush.bf16.msra.mxu0 %v4275
        %4339 = vmatpush.bf16.msra.mxu0 %v4274
        %4340 = vmatpush.bf16.msra.mxu0 %v4273
        %4341 = vmatpush.bf16.msra.mxu0 %v4272
        %4342 = vmatpush.bf16.msra.mxu0 %v4271
        %4343 = vmatpush.bf16.msra.mxu0 %v4270
        %4344 = vmatpush.bf16.msra.mxu0 %v4269
        %4345 = vmatpush.bf16.msra.mxu0 %v4268
        %4346 = vmatmul.bf16.gmra.mxu0 %v4146
        %v4347 = vpop.f32.mrf.mxu0
        %v4348 = vadd.f32 %v4329, %v4347
        %v4349 = vpop.f32.mrf.mxu0
        %v4350 = vadd.f32 %v4331, %v4349
        %4351 = vmatmul.bf16.gmra.mxu0 %v4149
        %v4352 = vpop.f32.mrf.mxu0
        %v4353 = vadd.f32 %v4334, %v4352
        %v4354 = vpop.f32.mrf.mxu0
        %v4355 = vadd.f32 %v4336, %v4354
        %4356 = vdwg.mxu0
        %v4357 = vld [vmem:[%s1567] sm:$0xf]
        %v4358 = vld [vmem:[%s1567 + $0x4] sm:$0xf]
        %v4359 = vld [vmem:[%s1567 + $0x8] sm:$0xf]
        %v4360 = vld [vmem:[%s1567 + $0xc] sm:$0xf]
        %v4361 = vld [vmem:[%s1567 + $0x10] sm:$0xf]
        %v4362 = vld [vmem:[%s1567 + $0x14] sm:$0xf]
        %v4363 = vld [vmem:[%s1567 + $0x18] sm:$0xf]
        %v4364 = vld [vmem:[%s1567 + $0x1c] sm:$0xf]
        %v4365 = vld [vmem:[%s1567 + $0x20] sm:$0xf]
        %v4366 = vld [vmem:[%s1567 + $0x24] sm:$0xf]
        %v4367 = vld [vmem:[%s1567 + $0x28] sm:$0xf]
        %v4368 = vld [vmem:[%s1567 + $0x2c] sm:$0xf]
        %v4369 = vld [vmem:[%s1567 + $0x30] sm:$0xf]
        %v4370 = vld [vmem:[%s1567 + $0x34] sm:$0xf]
        %v4371 = vld [vmem:[%s1567 + $0x38] sm:$0xf]
        %v4372 = vld [vmem:[%s1567 + $0x3c] sm:$0xf]
        %v4373 = vld [vmem:[%s1567 + $0x40] sm:$0xf]
        %v4374 = vld [vmem:[%s1567 + $0x44] sm:$0xf]
        %v4375 = vld [vmem:[%s1567 + $0x48] sm:$0xf]
        %v4376 = vld [vmem:[%s1567 + $0x4c] sm:$0xf]
        %v4377 = vld [vmem:[%s1567 + $0x50] sm:$0xf]
        %v4378 = vld [vmem:[%s1567 + $0x54] sm:$0xf]
        %v4379 = vld [vmem:[%s1567 + $0x58] sm:$0xf]
        %v4380 = vld [vmem:[%s1567 + $0x5c] sm:$0xf]
        %v4381 = vld [vmem:[%s1567 + $0x60] sm:$0xf]
        %v4382 = vld [vmem:[%s1567 + $0x64] sm:$0xf]
        %v4383 = vld [vmem:[%s1567 + $0x68] sm:$0xf]
        %v4384 = vld [vmem:[%s1567 + $0x6c] sm:$0xf]
        %v4385 = vld [vmem:[%s1567 + $0x70] sm:$0xf]
        %v4386 = vld [vmem:[%s1567 + $0x74] sm:$0xf]
        %v4387 = vld [vmem:[%s1567 + $0x78] sm:$0xf]
        %v4388 = vld [vmem:[%s1567 + $0x7c] sm:$0xf]
        %v4389 = vld [vmem:[%s1567 + $0x80] sm:$0xf]
        %v4390 = vld [vmem:[%s1567 + $0x84] sm:$0xf]
        %v4391 = vld [vmem:[%s1567 + $0x88] sm:$0xf]
        %v4392 = vld [vmem:[%s1567 + $0x8c] sm:$0xf]
        %v4393 = vld [vmem:[%s1567 + $0x90] sm:$0xf]
        %v4394 = vld [vmem:[%s1567 + $0x94] sm:$0xf]
        %v4395 = vld [vmem:[%s1567 + $0x98] sm:$0xf]
        %v4396 = vld [vmem:[%s1567 + $0x9c] sm:$0xf]
        %v4397 = vld [vmem:[%s1567 + $0xa0] sm:$0xf]
        %v4398 = vld [vmem:[%s1567 + $0xa4] sm:$0xf]
        %v4399 = vld [vmem:[%s1567 + $0xa8] sm:$0xf]
        %v4400 = vld [vmem:[%s1567 + $0xac] sm:$0xf]
        %v4401 = vld [vmem:[%s1567 + $0xb0] sm:$0xf]
        %v4402 = vld [vmem:[%s1567 + $0xb4] sm:$0xf]
        %v4403 = vld [vmem:[%s1567 + $0xb8] sm:$0xf]
        %v4404 = vld [vmem:[%s1567 + $0xbc] sm:$0xf]
        %v4407 = vunpack.c.l.b16 %v3808
        %v4408 = vunpack.c.h.b16 %v3808
        %v4409 = vunpack.c.l.b16 %v3809
        %v4410 = vpack.c.b16 %v4407, %v3923
        %v4411 = vpack.c.b16 %v4408, %v3924
        %v4412 = vpack.c.b16 %v4409, %v3925
        %v4464 = vunpack.c.l.b16 %v4357
        %v4465 = vunpack.c.l.b16 %v4358
        %v4466 = vunpack.c.l.b16 %v4359
        %v4467 = vunpack.c.l.b16 %v4360
        %v4468 = vunpack.c.l.b16 %v4361
        %v4469 = vunpack.c.l.b16 %v4362
        %v4470 = vunpack.c.l.b16 %v4363
        %v4471 = vunpack.c.l.b16 %v4364
        %v4472 = vunpack.c.l.b16 %v4365
        %v4473 = vunpack.c.l.b16 %v4366
        %v4474 = vunpack.c.l.b16 %v4367
        %v4475 = vunpack.c.l.b16 %v4368
        %v4476 = vunpack.c.l.b16 %v4369
        %v4477 = vunpack.c.l.b16 %v4370
        %v4478 = vunpack.c.l.b16 %v4371
        %v4479 = vunpack.c.l.b16 %v4372
        %v4480 = vunpack.c.l.b16 %v4373
        %v4481 = vunpack.c.l.b16 %v4374
        %v4482 = vunpack.c.l.b16 %v4375
        %v4483 = vunpack.c.l.b16 %v4376
        %v4484 = vunpack.c.l.b16 %v4377
        %v4485 = vunpack.c.l.b16 %v4378
        %v4486 = vunpack.c.l.b16 %v4379
        %v4487 = vunpack.c.l.b16 %v4380
        %v4488 = vunpack.c.l.b16 %v4381
        %v4489 = vunpack.c.l.b16 %v4382
        %v4490 = vunpack.c.l.b16 %v4383
        %v4491 = vunpack.c.l.b16 %v4384
        %v4492 = vunpack.c.l.b16 %v4385
        %v4493 = vunpack.c.l.b16 %v4386
        %v4494 = vunpack.c.l.b16 %v4387
        %v4495 = vunpack.c.l.b16 %v4388
        %v4496 = vunpack.c.l.b16 %v4389
        %v4497 = vunpack.c.l.b16 %v4390
        %v4498 = vunpack.c.l.b16 %v4391
        %v4499 = vunpack.c.l.b16 %v4392
        %v4500 = vunpack.c.l.b16 %v4393
        %v4501 = vunpack.c.l.b16 %v4394
        %v4502 = vunpack.c.l.b16 %v4395
        %v4503 = vunpack.c.l.b16 %v4396
        %v4504 = vunpack.c.l.b16 %v4397
        %v4505 = vunpack.c.l.b16 %v4398
        %v4506 = vunpack.c.l.b16 %v4399
        %v4507 = vunpack.c.l.b16 %v4400
        %v4508 = vunpack.c.l.b16 %v4401
        %v4509 = vunpack.c.l.b16 %v4402
        %v4510 = vunpack.c.l.b16 %v4403
        %v4511 = vunpack.c.l.b16 %v4404
        %v4512 = vpack.c.b16 %v4465, %v4464
        %v4513 = vpack.c.b16 %v4467, %v4466
        %v4514 = vpack.c.b16 %v4469, %v4468
        %v4515 = vpack.c.b16 %v4471, %v4470
        %v4516 = vpack.c.b16 %v4473, %v4472
        %v4517 = vpack.c.b16 %v4475, %v4474
        %v4518 = vpack.c.b16 %v4477, %v4476
        %v4519 = vpack.c.b16 %v4479, %v4478
        %v4520 = vpack.c.b16 %v4481, %v4480
        %v4521 = vpack.c.b16 %v4483, %v4482
        %v4522 = vpack.c.b16 %v4485, %v4484
        %v4523 = vpack.c.b16 %v4487, %v4486
        %v4524 = vpack.c.b16 %v4489, %v4488
        %v4525 = vpack.c.b16 %v4491, %v4490
        %v4526 = vpack.c.b16 %v4493, %v4492
        %v4527 = vpack.c.b16 %v4495, %v4494
        %v4528 = vpack.c.b16 %v4497, %v4496
        %v4529 = vpack.c.b16 %v4499, %v4498
        %v4530 = vpack.c.b16 %v4501, %v4500
        %v4531 = vpack.c.b16 %v4503, %v4502
        %v4532 = vpack.c.b16 %v4505, %v4504
        %v4533 = vpack.c.b16 %v4507, %v4506
        %v4534 = vpack.c.b16 %v4509, %v4508
        %v4535 = vpack.c.b16 %v4511, %v4510
        %4560 = vmatpush.bf16.msra.mxu0 %v4519
        %4561 = vmatpush.bf16.msra.mxu0 %v4518
        %4562 = vmatpush.bf16.msra.mxu0 %v4517
        %4563 = vmatpush.bf16.msra.mxu0 %v4516
        %4564 = vmatpush.bf16.msra.mxu0 %v4515
        %4565 = vmatpush.bf16.msra.mxu0 %v4514
        %4566 = vmatpush.bf16.msra.mxu0 %v4513
        %4567 = vmatpush.bf16.msra.mxu0 %v4512
        %4568 = vmatmul.bf16.gmra.mxu0 %v4147
        %v4569 = vpop.f32.mrf.mxu0
        %v4570 = vadd.f32 0.0, %v4569
        %v4571 = vpop.f32.mrf.mxu0
        %v4572 = vadd.f32 0.0, %v4571
        %4573 = vmatmul.bf16.gmra.mxu0 %v4410
        %v4574 = vpop.f32.mrf.mxu0
        %v4575 = vadd.f32 0.0, %v4574
        %v4576 = vpop.f32.mrf.mxu0
        %v4577 = vadd.f32 0.0, %v4576
        %4578 = vdwg.mxu0
        %4579 = vmatpush.bf16.msra.mxu0 %v4527
        %4580 = vmatpush.bf16.msra.mxu0 %v4526
        %4581 = vmatpush.bf16.msra.mxu0 %v4525
        %4582 = vmatpush.bf16.msra.mxu0 %v4524
        %4583 = vmatpush.bf16.msra.mxu0 %v4523
        %4584 = vmatpush.bf16.msra.mxu0 %v4522
        %4585 = vmatpush.bf16.msra.mxu0 %v4521
        %4586 = vmatpush.bf16.msra.mxu0 %v4520
        %4587 = vmatmul.bf16.gmra.mxu0 %v4148
        %v4588 = vpop.f32.mrf.mxu0
        %v4589 = vadd.f32 %v4570, %v4588
        %v4590 = vpop.f32.mrf.mxu0
        %v4591 = vadd.f32 %v4572, %v4590
        %4592 = vmatmul.bf16.gmra.mxu0 %v4411
        %v4593 = vpop.f32.mrf.mxu0
        %v4594 = vadd.f32 %v4575, %v4593
        %v4595 = vpop.f32.mrf.mxu0
        %v4596 = vadd.f32 %v4577, %v4595
        %4597 = vdwg.mxu0
        %4598 = vmatpush.bf16.msra.mxu0 %v4535
        %4599 = vmatpush.bf16.msra.mxu0 %v4534
        %4600 = vmatpush.bf16.msra.mxu0 %v4533
        %4601 = vmatpush.bf16.msra.mxu0 %v4532
        %4602 = vmatpush.bf16.msra.mxu0 %v4531
        %4603 = vmatpush.bf16.msra.mxu0 %v4530
        %4604 = vmatpush.bf16.msra.mxu0 %v4529
        %4605 = vmatpush.bf16.msra.mxu0 %v4528
        %4606 = vmatmul.bf16.gmra.mxu0 %v4149
        %v4607 = vpop.f32.mrf.mxu0
        %v4608 = vadd.f32 %v4589, %v4607
        %v4609 = vpop.f32.mrf.mxu0
        %v4610 = vadd.f32 %v4591, %v4609
        %4611 = vmatmul.bf16.gmra.mxu0 %v4412
        %v4612 = vpop.f32.mrf.mxu0
        %v4613 = vadd.f32 %v4594, %v4612
        %v4614 = vpop.f32.mrf.mxu0
        %v4615 = vadd.f32 %v4596, %v4614
        %4616 = vdwg.mxu0
        %v4617 = vadd.f32 %v4348, %v4608
        %v4618 = vadd.f32 %v4350, %v4610
        %v4619 = vadd.f32 %v4353, %v4613
        %v4620 = vadd.f32 %v4355, %v4615
        %v4621 = vadd.f32 %v4617, %v575
        %v4622 = vadd.f32 %v4618, %v575
        %v4623 = vadd.f32 %v4619, %v575
        %v4624 = vadd.f32 %v4620, %v575
        %v4625 = vmax.f32 %v4621, 0.0
        %v4626 = vmax.f32 %v4622, 0.0
        %v4627 = vmax.f32 %v4623, 0.0
        %v4628 = vmax.f32 %v4624, 0.0
        %v4629 = vpack.c.bf16 %v4626, %v4625
        %v4630 = vpack.c.bf16 %v4628, %v4627
        %v4631 = vld [vmem:[#allocation11] sm:$0xf]
        %v4632 = vld [vmem:[#allocation11 + $0x4] sm:$0xf]
        %v4633 = vld [vmem:[#allocation11 + $0x8] sm:$0xf]
        %v4634 = vld [vmem:[#allocation11 + $0xc] sm:$0xf]
        %v4635 = vld [vmem:[#allocation11 + $0x10] sm:$0xf]
        %v4636 = vld [vmem:[#allocation11 + $0x14] sm:$0xf]
        %v4637 = vld [vmem:[#allocation11 + $0x18] sm:$0xf]
        %v4638 = vld [vmem:[#allocation11 + $0x1c] sm:$0xf]
        %v4639 = vld [vmem:[#allocation11 + $0x20] sm:$0xf]
        %v4640 = vld [vmem:[#allocation11 + $0x24] sm:$0xf]
        %v4641 = vld [vmem:[#allocation11 + $0x28] sm:$0xf]
        %v4642 = vld [vmem:[#allocation11 + $0x2c] sm:$0xf]
        %v4643 = vld [vmem:[#allocation11 + $0x30] sm:$0xf]
        %v4644 = vld [vmem:[#allocation11 + $0x34] sm:$0xf]
        %v4645 = vld [vmem:[#allocation11 + $0x38] sm:$0xf]
        %v4646 = vld [vmem:[#allocation11 + $0x3c] sm:$0xf]
        %v4663 = vunpack.c.l.b16 %v4631
        %v4664 = vunpack.c.l.b16 %v4632
        %v4665 = vunpack.c.l.b16 %v4633
        %v4666 = vunpack.c.l.b16 %v4634
        %v4667 = vunpack.c.l.b16 %v4635
        %v4668 = vunpack.c.l.b16 %v4636
        %v4669 = vunpack.c.l.b16 %v4637
        %v4670 = vunpack.c.l.b16 %v4638
        %v4671 = vunpack.c.l.b16 %v4639
        %v4672 = vunpack.c.l.b16 %v4640
        %v4673 = vunpack.c.l.b16 %v4641
        %v4674 = vunpack.c.l.b16 %v4642
        %v4675 = vunpack.c.l.b16 %v4643
        %v4676 = vunpack.c.l.b16 %v4644
        %v4677 = vunpack.c.l.b16 %v4645
        %v4678 = vunpack.c.l.b16 %v4646
        %v4679 = vpack.c.b16 %v4664, %v4663
        %v4680 = vpack.c.b16 %v4666, %v4665
        %v4681 = vpack.c.b16 %v4668, %v4667
        %v4682 = vpack.c.b16 %v4670, %v4669
        %v4683 = vpack.c.b16 %v4672, %v4671
        %v4684 = vpack.c.b16 %v4674, %v4673
        %v4685 = vpack.c.b16 %v4676, %v4675
        %v4686 = vpack.c.b16 %v4678, %v4677
        %4695 = vmatpush.bf16.msra.mxu0 %v4686
        %4696 = vmatpush.bf16.msra.mxu0 %v4685
        %4697 = vmatpush.bf16.msra.mxu0 %v4684
        %4698 = vmatpush.bf16.msra.mxu0 %v4683
        %4699 = vmatpush.bf16.msra.mxu0 %v4682
        %4700 = vmatpush.bf16.msra.mxu0 %v4681
        %4701 = vmatpush.bf16.msra.mxu0 %v4680
        %4702 = vmatpush.bf16.msra.mxu0 %v4679
        %4703 = vmatmul.bf16.gmra.mxu0 %v4629
        %v4704 = vpop.f32.mrf.mxu0
        %v4705 = vadd.f32 %v579, %v4704
        %v4706 = vpop.f32.mrf.mxu0
        %v4707 = vadd.f32 %v579, %v4706
        %4708 = vmatmul.bf16.gmra.mxu0 %v4630
        %v4709 = vpop.f32.mrf.mxu0
        %v4710 = vadd.f32 %v579, %v4709
        %v4711 = vpop.f32.mrf.mxu0
        %v4712 = vadd.f32 %v579, %v4711
        %4713 = vdwg.mxu0
        %v4714 = vunpack.c.l.bf16 %v3340
        %v4715 = vunpack.c.l.bf16 %v3341
        %v4716 = vunpack.c.l.bf16 %v3342
        %v4717 = vunpack.c.l.bf16 %v3343
        %v4718 = vadd.f32 %v4705, %v4714
        %v4719 = vadd.f32 %v4707, %v4715
        %v4720 = vadd.f32 %v4710, %v4716
        %v4721 = vadd.f32 %v4712, %v4717
        %v4722 = vmax.f32 %v4718, 0.0
        %v4723 = vmax.f32 %v4719, 0.0
        %v4724 = vmax.f32 %v4720, 0.0
        %v4725 = vmax.f32 %v4721, 0.0
        %v4726 = vpack.c.bf16 %v4722, %v4722
        %v4727 = vpack.c.bf16 %v4723, %v4723
        %v4728 = vpack.c.bf16 %v4724, %v4724
        %v4729 = vpack.c.bf16 %v4725, %v4725
        %s4730 = scalar_lea.vmem %s556, 32 [#allocation13]
        %4731 = vst [vmem:[%s4730] sm:$0xf] %v4726
        %4732 = vst [vmem:[%s4730 + $0x4] sm:$0xf] %v4727
        %4733 = vst [vmem:[%s4730 + $0x8] sm:$0xf] %v4728
        %4734 = vst [vmem:[%s4730 + $0xc] sm:$0xf] %v4729
        %v4735 = vld [vmem:[%s3538] sm:$0xf]
        %v4736 = vld [vmem:[%s3538 + $0x4] sm:$0xf]
        %v4737 = vld [vmem:[%s3538 + $0x8] sm:$0xf]
        %v4738 = vld [vmem:[%s3538 + $0xc] sm:$0xf]
        %v4739 = vld [vmem:[%s676] sm:$0xf]
        %v4740 = vld [vmem:[%s676 + $0x4] sm:$0xf]
        %v4741 = vld [vmem:[%s676 + $0x8] sm:$0xf]
        %v4742 = vld [vmem:[%s676 + $0xc] sm:$0xf]
        %v4743 = vld [vmem:[%s676 + $0x10] sm:$0xf]
        %v4744 = vld [vmem:[%s676 + $0x14] sm:$0xf]
        %v4745 = vld [vmem:[%s676 + $0x18] sm:$0xf]
        %v4746 = vld [vmem:[%s676 + $0x1c] sm:$0xf]
        %v4747 = vld [vmem:[%s676 + $0x20] sm:$0xf]
        %v4748 = vld [vmem:[%s676 + $0x24] sm:$0xf]
        %v4749 = vld [vmem:[%s676 + $0x28] sm:$0xf]
        %v4750 = vld [vmem:[%s676 + $0x2c] sm:$0xf]
        %v4751 = vld [vmem:[%s676 + $0x30] sm:$0xf]
        %v4752 = vld [vmem:[%s676 + $0x34] sm:$0xf]
        %v4753 = vld [vmem:[%s676 + $0x38] sm:$0xf]
        %v4754 = vld [vmem:[%s676 + $0x3c] sm:$0xf]
        %v4755 = vld [vmem:[%s2143] sm:$0xf]
        %v4756 = vld [vmem:[%s2143 + $0x4] sm:$0xf]
        %v4757 = vld [vmem:[%s2143 + $0x8] sm:$0xf]
        %v4758 = vld [vmem:[%s2143 + $0xc] sm:$0xf]
        %v4759 = vld [vmem:[#allocation8] sm:$0xf]
        %v4760 = vld [vmem:[#allocation8 + $0x4] sm:$0xf]
        %v4761 = vld [vmem:[#allocation8 + $0x8] sm:$0xf]
        %v4762 = vld [vmem:[#allocation8 + $0xc] sm:$0xf]
        %v4763 = vld [vmem:[#allocation8 + $0x10] sm:$0xf]
        %v4764 = vld [vmem:[#allocation8 + $0x14] sm:$0xf]
        %v4765 = vld [vmem:[#allocation8 + $0x18] sm:$0xf]
        %v4766 = vld [vmem:[#allocation8 + $0x1c] sm:$0xf]
        %v4767 = vld [vmem:[#allocation8 + $0x20] sm:$0xf]
        %v4768 = vld [vmem:[#allocation8 + $0x24] sm:$0xf]
        %v4769 = vld [vmem:[#allocation8 + $0x28] sm:$0xf]
        %v4770 = vld [vmem:[#allocation8 + $0x2c] sm:$0xf]
        %v4771 = vld [vmem:[#allocation8 + $0x30] sm:$0xf]
        %v4772 = vld [vmem:[#allocation8 + $0x34] sm:$0xf]
        %v4773 = vld [vmem:[#allocation8 + $0x38] sm:$0xf]
        %v4774 = vld [vmem:[#allocation8 + $0x3c] sm:$0xf]
        %v4779 = vunpack.c.l.b16 %v4755
        %v4780 = vunpack.c.l.b16 %v4756
        %v4781 = vunpack.c.l.b16 %v4757
        %v4782 = vunpack.c.l.b16 %v4758
        %v4783 = vpack.c.b16 %v4780, %v4779
        %v4784 = vpack.c.b16 %v4782, %v4781
        %v4803 = vunpack.c.l.b16 %v4759
        %v4804 = vunpack.c.l.b16 %v4760
        %v4805 = vunpack.c.l.b16 %v4761
        %v4806 = vunpack.c.l.b16 %v4762
        %v4807 = vunpack.c.l.b16 %v4763
        %v4808 = vunpack.c.l.b16 %v4764
        %v4809 = vunpack.c.l.b16 %v4765
        %v4810 = vunpack.c.l.b16 %v4766
        %v4811 = vunpack.c.l.b16 %v4767
        %v4812 = vunpack.c.l.b16 %v4768
        %v4813 = vunpack.c.l.b16 %v4769
        %v4814 = vunpack.c.l.b16 %v4770
        %v4815 = vunpack.c.l.b16 %v4771
        %v4816 = vunpack.c.l.b16 %v4772
        %v4817 = vunpack.c.l.b16 %v4773
        %v4818 = vunpack.c.l.b16 %v4774
        %v4819 = vpack.c.b16 %v4804, %v4803
        %v4820 = vpack.c.b16 %v4806, %v4805
        %v4821 = vpack.c.b16 %v4808, %v4807
        %v4822 = vpack.c.b16 %v4810, %v4809
        %v4823 = vpack.c.b16 %v4812, %v4811
        %v4824 = vpack.c.b16 %v4814, %v4813
        %v4825 = vpack.c.b16 %v4816, %v4815
        %v4826 = vpack.c.b16 %v4818, %v4817
        %4835 = vmatpush.bf16.msra.mxu0 %v4826
        %4836 = vmatpush.bf16.msra.mxu0 %v4825
        %4837 = vmatpush.bf16.msra.mxu0 %v4824
        %4838 = vmatpush.bf16.msra.mxu0 %v4823
        %4839 = vmatpush.bf16.msra.mxu0 %v4822
        %4840 = vmatpush.bf16.msra.mxu0 %v4821
        %4841 = vmatpush.bf16.msra.mxu0 %v4820
        %4842 = vmatpush.bf16.msra.mxu0 %v4819
        %4843 = vmatmul.bf16.gmra.mxu0 %v4783
        %v4844 = vpop.f32.mrf.mxu0
        %v4845 = vadd.f32 0.0, %v4844
        %v4846 = vpop.f32.mrf.mxu0
        %v4847 = vadd.f32 0.0, %v4846
        %4848 = vmatmul.bf16.gmra.mxu0 %v4784
        %v4849 = vpop.f32.mrf.mxu0
        %v4850 = vadd.f32 0.0, %v4849
        %v4851 = vpop.f32.mrf.mxu0
        %v4852 = vadd.f32 0.0, %v4851
        %4853 = vdwg.mxu0
        %v4858 = vunpack.c.l.b16 %v4735
        %v4859 = vunpack.c.l.b16 %v4736
        %v4860 = vunpack.c.l.b16 %v4737
        %v4861 = vunpack.c.l.b16 %v4738
        %v4862 = vpack.c.b16 %v4859, %v4858
        %v4863 = vpack.c.b16 %v4861, %v4860
        %v4882 = vunpack.c.l.b16 %v4739
        %v4883 = vunpack.c.l.b16 %v4740
        %v4884 = vunpack.c.l.b16 %v4741
        %v4885 = vunpack.c.l.b16 %v4742
        %v4886 = vunpack.c.l.b16 %v4743
        %v4887 = vunpack.c.l.b16 %v4744
        %v4888 = vunpack.c.l.b16 %v4745
        %v4889 = vunpack.c.l.b16 %v4746
        %v4890 = vunpack.c.l.b16 %v4747
        %v4891 = vunpack.c.l.b16 %v4748
        %v4892 = vunpack.c.l.b16 %v4749
        %v4893 = vunpack.c.l.b16 %v4750
        %v4894 = vunpack.c.l.b16 %v4751
        %v4895 = vunpack.c.l.b16 %v4752
        %v4896 = vunpack.c.l.b16 %v4753
        %v4897 = vunpack.c.l.b16 %v4754
        %v4898 = vpack.c.b16 %v4883, %v4882
        %v4899 = vpack.c.b16 %v4885, %v4884
        %v4900 = vpack.c.b16 %v4887, %v4886
        %v4901 = vpack.c.b16 %v4889, %v4888
        %v4902 = vpack.c.b16 %v4891, %v4890
        %v4903 = vpack.c.b16 %v4893, %v4892
        %v4904 = vpack.c.b16 %v4895, %v4894
        %v4905 = vpack.c.b16 %v4897, %v4896
        %4914 = vmatpush.bf16.msra.mxu0 %v4905
        %4915 = vmatpush.bf16.msra.mxu0 %v4904
        %4916 = vmatpush.bf16.msra.mxu0 %v4903
        %4917 = vmatpush.bf16.msra.mxu0 %v4902
        %4918 = vmatpush.bf16.msra.mxu0 %v4901
        %4919 = vmatpush.bf16.msra.mxu0 %v4900
        %4920 = vmatpush.bf16.msra.mxu0 %v4899
        %4921 = vmatpush.bf16.msra.mxu0 %v4898
        %4922 = vmatmul.bf16.gmra.mxu0 %v4862
        %v4923 = vpop.f32.mrf.mxu0
        %v4924 = vadd.f32 %v4845, %v4923
        %v4925 = vpop.f32.mrf.mxu0
        %v4926 = vadd.f32 %v4847, %v4925
        %4927 = vmatmul.bf16.gmra.mxu0 %v4863
        %v4928 = vpop.f32.mrf.mxu0
        %v4929 = vadd.f32 %v4850, %v4928
        %v4930 = vpop.f32.mrf.mxu0
        %v4931 = vadd.f32 %v4852, %v4930
        %4932 = vdwg.mxu0
        %v4933 = vadd.f32 %v4924, %v571
        %v4934 = vadd.f32 %v4926, %v571
        %v4935 = vadd.f32 %v4929, %v571
        %v4936 = vadd.f32 %v4931, %v571
        %v4937 = vmax.f32 %v4933, 0.0
        %v4938 = vmax.f32 %v4934, 0.0
        %v4939 = vmax.f32 %v4935, 0.0
        %v4940 = vmax.f32 %v4936, 0.0
        %v4941 = vld [vmem:[%s3678] sm:$0xf]
        %v4942 = vld [vmem:[%s2283] sm:$0xf]
        %4943 = vmatpush.bf16.msra.mxu0 %v4826
        %4944 = vmatpush.bf16.msra.mxu0 %v4825
        %4945 = vmatpush.bf16.msra.mxu0 %v4824
        %4946 = vmatpush.bf16.msra.mxu0 %v4823
        %4947 = vmatpush.bf16.msra.mxu0 %v4822
        %4948 = vmatpush.bf16.msra.mxu0 %v4821
        %4949 = vmatpush.bf16.msra.mxu0 %v4820
        %4950 = vmatpush.bf16.msra.mxu0 %v4819
        %4951 = vmatmul.bf16.gmra.mxu0 %v4942
        %v4952 = vpop.f32.mrf.mxu0
        %v4953 = vadd.f32 0.0, %v4952
        %v4954 = vpop.f32.mrf.mxu0
        %4955 = vdwg.mxu0
        %4956 = vmatpush.bf16.msra.mxu0 %v4905
        %4957 = vmatpush.bf16.msra.mxu0 %v4904
        %4958 = vmatpush.bf16.msra.mxu0 %v4903
        %4959 = vmatpush.bf16.msra.mxu0 %v4902
        %4960 = vmatpush.bf16.msra.mxu0 %v4901
        %4961 = vmatpush.bf16.msra.mxu0 %v4900
        %4962 = vmatpush.bf16.msra.mxu0 %v4899
        %4963 = vmatpush.bf16.msra.mxu0 %v4898
        %4964 = vmatmul.bf16.gmra.mxu0 %v4941
        %v4965 = vpop.f32.mrf.mxu0
        %v4966 = vadd.f32 %v4953, %v4965
        %v4967 = vpop.f32.mrf.mxu0
        %4968 = vdwg.mxu0
        %v4969 = vadd.f32 %v4966, %v571
        %v4970 = vmax.f32 %v4969, 0.0
        %v4971 = vsel %vm914, 0.0, %v4970
        %v4972 = vld [vmem:[%s3725] sm:$0xf]
        %v4973 = vld [vmem:[%s2330] sm:$0xf]
        %4974 = vmatpush.bf16.msra.mxu0 %v4826
        %4975 = vmatpush.bf16.msra.mxu0 %v4825
        %4976 = vmatpush.bf16.msra.mxu0 %v4824
        %4977 = vmatpush.bf16.msra.mxu0 %v4823
        %4978 = vmatpush.bf16.msra.mxu0 %v4822
        %4979 = vmatpush.bf16.msra.mxu0 %v4821
        %4980 = vmatpush.bf16.msra.mxu0 %v4820
        %4981 = vmatpush.bf16.msra.mxu0 %v4819
        %4982 = vmatmul.bf16.gmra.mxu0 %v4973
        %v4983 = vpop.f32.mrf.mxu0
        %v4984 = vadd.f32 0.0, %v4983
        %v4985 = vpop.f32.mrf.mxu0
        %4986 = vdwg.mxu0
        %4987 = vmatpush.bf16.msra.mxu0 %v4905
        %4988 = vmatpush.bf16.msra.mxu0 %v4904
        %4989 = vmatpush.bf16.msra.mxu0 %v4903
        %4990 = vmatpush.bf16.msra.mxu0 %v4902
        %4991 = vmatpush.bf16.msra.mxu0 %v4901
        %4992 = vmatpush.bf16.msra.mxu0 %v4900
        %4993 = vmatpush.bf16.msra.mxu0 %v4899
        %4994 = vmatpush.bf16.msra.mxu0 %v4898
        %4995 = vmatmul.bf16.gmra.mxu0 %v4972
        %v4996 = vpop.f32.mrf.mxu0
        %v4997 = vadd.f32 %v4984, %v4996
        %v4998 = vpop.f32.mrf.mxu0
        %4999 = vdwg.mxu0
        %v5000 = vadd.f32 %v4997, %v571
        %v5001 = vmax.f32 %v5000, 0.0
        %v5002 = vsel %vm949, 0.0, %v5001
        %v5009 = vrot.slane %v4971, 7
        %v5010 = vrot.slane %v4937, 7
        %v5011 = vsel %vm957, %v5009, %v5010
        %v5012 = vrot.slane %v4938, 7
        %v5013 = vsel %vm957, %v5010, %v5012
        %v5014 = vrot.slane %v4939, 7
        %v5015 = vsel %vm957, %v5012, %v5014
        %v5016 = vrot.slane %v4940, 7
        %v5017 = vsel %vm957, %v5014, %v5016
        %v5018 = vrot.slane %v5002, 7
        %v5019 = vsel %vm957, %v5016, %v5018
        %v5026 = vsel %vm957, 0.0, %v5009
        %v5027 = vsel %vm660, %v5026, 0.0
        %v5028 = vsel %vm661, %v5011, 0.0
        %v5029 = vsel %vm662, %v5013, 0.0
        %v5030 = vsel %vm663, %v5015, 0.0
        %v5031 = vsel %vm664, %v5017, 0.0
        %v5032 = vsel %vm665, %v5019, 0.0
        %v5033 = vrot.slane %v4971, 1
        %v5034 = vrot.slane %v4937, 1
        %v5035 = vsel %vm982, %v5033, %v5034
        %v5036 = vrot.slane %v4938, 1
        %v5037 = vsel %vm982, %v5034, %v5036
        %v5038 = vrot.slane %v4939, 1
        %v5039 = vsel %vm982, %v5036, %v5038
        %v5040 = vrot.slane %v4940, 1
        %v5041 = vsel %vm982, %v5038, %v5040
        %v5042 = vrot.slane %v5002, 1
        %v5043 = vsel %vm982, %v5040, %v5042
        %v5050 = vsel %vm982, %v5042, 0.0
        %v5051 = vsel %vm666, %v5035, 0.0
        %v5052 = vsel %vm667, %v5037, 0.0
        %v5053 = vsel %vm668, %v5039, 0.0
        %v5054 = vsel %vm669, %v5041, 0.0
        %v5055 = vsel %vm670, %v5043, 0.0
        %v5056 = vsel %vm671, %v5050, 0.0
        %v5057 = vpack.c.bf16 %v4971, %v5027
        %v5058 = vpack.c.bf16 %v5051, %v5051
        %v5059 = vpack.c.bf16 %v4937, %v5028
        %v5060 = vpack.c.bf16 %v5052, %v5052
        %v5061 = vpack.c.bf16 %v4938, %v5029
        %v5062 = vpack.c.bf16 %v5053, %v5053
        %v5063 = vpack.c.bf16 %v4939, %v5030
        %v5064 = vpack.c.bf16 %v5054, %v5054
        %v5065 = vpack.c.bf16 %v4940, %v5031
        %v5066 = vpack.c.bf16 %v5055, %v5055
        %v5067 = vpack.c.bf16 %v5002, %v5032
        %v5068 = vpack.c.bf16 %v5056, %v5056
        %v5069 = vld [vmem:[#allocation10] sm:$0xf]
        %v5070 = vld [vmem:[#allocation10 + $0x4] sm:$0xf]
        %v5071 = vld [vmem:[#allocation10 + $0x8] sm:$0xf]
        %v5072 = vld [vmem:[#allocation10 + $0xc] sm:$0xf]
        %v5073 = vld [vmem:[#allocation10 + $0x10] sm:$0xf]
        %v5074 = vld [vmem:[#allocation10 + $0x14] sm:$0xf]
        %v5075 = vld [vmem:[#allocation10 + $0x18] sm:$0xf]
        %v5076 = vld [vmem:[#allocation10 + $0x1c] sm:$0xf]
        %v5077 = vld [vmem:[#allocation10 + $0x20] sm:$0xf]
        %v5078 = vld [vmem:[#allocation10 + $0x24] sm:$0xf]
        %v5079 = vld [vmem:[#allocation10 + $0x28] sm:$0xf]
        %v5080 = vld [vmem:[#allocation10 + $0x2c] sm:$0xf]
        %v5081 = vld [vmem:[#allocation10 + $0x30] sm:$0xf]
        %v5082 = vld [vmem:[#allocation10 + $0x34] sm:$0xf]
        %v5083 = vld [vmem:[#allocation10 + $0x38] sm:$0xf]
        %v5084 = vld [vmem:[#allocation10 + $0x3c] sm:$0xf]
        %v5085 = vld [vmem:[#allocation10 + $0x40] sm:$0xf]
        %v5086 = vld [vmem:[#allocation10 + $0x44] sm:$0xf]
        %v5087 = vld [vmem:[#allocation10 + $0x48] sm:$0xf]
        %v5088 = vld [vmem:[#allocation10 + $0x4c] sm:$0xf]
        %v5089 = vld [vmem:[#allocation10 + $0x50] sm:$0xf]
        %v5090 = vld [vmem:[#allocation10 + $0x54] sm:$0xf]
        %v5091 = vld [vmem:[#allocation10 + $0x58] sm:$0xf]
        %v5092 = vld [vmem:[#allocation10 + $0x5c] sm:$0xf]
        %v5093 = vld [vmem:[#allocation10 + $0x60] sm:$0xf]
        %v5094 = vld [vmem:[#allocation10 + $0x64] sm:$0xf]
        %v5095 = vld [vmem:[#allocation10 + $0x68] sm:$0xf]
        %v5096 = vld [vmem:[#allocation10 + $0x6c] sm:$0xf]
        %v5097 = vld [vmem:[#allocation10 + $0x70] sm:$0xf]
        %v5098 = vld [vmem:[#allocation10 + $0x74] sm:$0xf]
        %v5099 = vld [vmem:[#allocation10 + $0x78] sm:$0xf]
        %v5100 = vld [vmem:[#allocation10 + $0x7c] sm:$0xf]
        %v5101 = vld [vmem:[#allocation10 + $0x80] sm:$0xf]
        %v5102 = vld [vmem:[#allocation10 + $0x84] sm:$0xf]
        %v5103 = vld [vmem:[#allocation10 + $0x88] sm:$0xf]
        %v5104 = vld [vmem:[#allocation10 + $0x8c] sm:$0xf]
        %v5105 = vld [vmem:[#allocation10 + $0x90] sm:$0xf]
        %v5106 = vld [vmem:[#allocation10 + $0x94] sm:$0xf]
        %v5107 = vld [vmem:[#allocation10 + $0x98] sm:$0xf]
        %v5108 = vld [vmem:[#allocation10 + $0x9c] sm:$0xf]
        %v5109 = vld [vmem:[#allocation10 + $0xa0] sm:$0xf]
        %v5110 = vld [vmem:[#allocation10 + $0xa4] sm:$0xf]
        %v5111 = vld [vmem:[#allocation10 + $0xa8] sm:$0xf]
        %v5112 = vld [vmem:[#allocation10 + $0xac] sm:$0xf]
        %v5113 = vld [vmem:[#allocation10 + $0xb0] sm:$0xf]
        %v5114 = vld [vmem:[#allocation10 + $0xb4] sm:$0xf]
        %v5115 = vld [vmem:[#allocation10 + $0xb8] sm:$0xf]
        %v5116 = vld [vmem:[#allocation10 + $0xbc] sm:$0xf]
        %v5117 = vld [vmem:[%s1067] sm:$0xf]
        %v5118 = vld [vmem:[%s1067 + $0x4] sm:$0xf]
        %v5119 = vld [vmem:[%s1067 + $0x8] sm:$0xf]
        %v5120 = vld [vmem:[%s1067 + $0xc] sm:$0xf]
        %v5121 = vld [vmem:[%s1067 + $0x10] sm:$0xf]
        %v5122 = vld [vmem:[%s1067 + $0x14] sm:$0xf]
        %v5123 = vld [vmem:[%s1067 + $0x18] sm:$0xf]
        %v5124 = vld [vmem:[%s1067 + $0x1c] sm:$0xf]
        %v5125 = vld [vmem:[%s1067 + $0x20] sm:$0xf]
        %v5126 = vld [vmem:[%s1067 + $0x24] sm:$0xf]
        %v5127 = vld [vmem:[%s1067 + $0x28] sm:$0xf]
        %v5128 = vld [vmem:[%s1067 + $0x2c] sm:$0xf]
        %v5129 = vld [vmem:[%s1067 + $0x30] sm:$0xf]
        %v5130 = vld [vmem:[%s1067 + $0x34] sm:$0xf]
        %v5131 = vld [vmem:[%s1067 + $0x38] sm:$0xf]
        %v5132 = vld [vmem:[%s1067 + $0x3c] sm:$0xf]
        %v5133 = vld [vmem:[%s1067 + $0x40] sm:$0xf]
        %v5134 = vld [vmem:[%s1067 + $0x44] sm:$0xf]
        %v5135 = vld [vmem:[%s1067 + $0x48] sm:$0xf]
        %v5136 = vld [vmem:[%s1067 + $0x4c] sm:$0xf]
        %v5137 = vld [vmem:[%s1067 + $0x50] sm:$0xf]
        %v5138 = vld [vmem:[%s1067 + $0x54] sm:$0xf]
        %v5139 = vld [vmem:[%s1067 + $0x58] sm:$0xf]
        %v5140 = vld [vmem:[%s1067 + $0x5c] sm:$0xf]
        %v5141 = vld [vmem:[%s1067 + $0x60] sm:$0xf]
        %v5142 = vld [vmem:[%s1067 + $0x64] sm:$0xf]
        %v5143 = vld [vmem:[%s1067 + $0x68] sm:$0xf]
        %v5144 = vld [vmem:[%s1067 + $0x6c] sm:$0xf]
        %v5145 = vld [vmem:[%s1067 + $0x70] sm:$0xf]
        %v5146 = vld [vmem:[%s1067 + $0x74] sm:$0xf]
        %v5147 = vld [vmem:[%s1067 + $0x78] sm:$0xf]
        %v5148 = vld [vmem:[%s1067 + $0x7c] sm:$0xf]
        %v5149 = vld [vmem:[%s1067 + $0x80] sm:$0xf]
        %v5150 = vld [vmem:[%s1067 + $0x84] sm:$0xf]
        %v5151 = vld [vmem:[%s1067 + $0x88] sm:$0xf]
        %v5152 = vld [vmem:[%s1067 + $0x8c] sm:$0xf]
        %v5153 = vld [vmem:[%s1067 + $0x90] sm:$0xf]
        %v5154 = vld [vmem:[%s1067 + $0x94] sm:$0xf]
        %v5155 = vld [vmem:[%s1067 + $0x98] sm:$0xf]
        %v5156 = vld [vmem:[%s1067 + $0x9c] sm:$0xf]
        %v5157 = vld [vmem:[%s1067 + $0xa0] sm:$0xf]
        %v5158 = vld [vmem:[%s1067 + $0xa4] sm:$0xf]
        %v5159 = vld [vmem:[%s1067 + $0xa8] sm:$0xf]
        %v5160 = vld [vmem:[%s1067 + $0xac] sm:$0xf]
        %v5161 = vld [vmem:[%s1067 + $0xb0] sm:$0xf]
        %v5162 = vld [vmem:[%s1067 + $0xb4] sm:$0xf]
        %v5163 = vld [vmem:[%s1067 + $0xb8] sm:$0xf]
        %v5164 = vld [vmem:[%s1067 + $0xbc] sm:$0xf]
        %v5173 = vunpack.c.l.b16 %v5059
        %v5174 = vunpack.c.h.b16 %v5059
        %v5175 = vunpack.c.l.b16 %v5060
        %v5176 = vunpack.c.l.b16 %v5061
        %v5177 = vunpack.c.h.b16 %v5061
        %v5178 = vunpack.c.l.b16 %v5062
        %v5179 = vunpack.c.l.b16 %v5063
        %v5180 = vunpack.c.h.b16 %v5063
        %v5181 = vunpack.c.l.b16 %v5064
        %v5182 = vunpack.c.l.b16 %v5065
        %v5183 = vunpack.c.h.b16 %v5065
        %v5184 = vunpack.c.l.b16 %v5066
        %v5185 = vpack.c.b16 %v5176, %v5173
        %v5186 = vpack.c.b16 %v5177, %v5174
        %v5187 = vpack.c.b16 %v5178, %v5175
        %v5188 = vpack.c.b16 %v5182, %v5179
        %v5189 = vpack.c.b16 %v5183, %v5180
        %v5190 = vpack.c.b16 %v5184, %v5181
        %v5245 = vunpack.c.l.b16 %v5117
        %v5246 = vunpack.c.l.b16 %v5118
        %v5247 = vunpack.c.l.b16 %v5119
        %v5248 = vunpack.c.l.b16 %v5120
        %v5249 = vunpack.c.l.b16 %v5121
        %v5250 = vunpack.c.l.b16 %v5122
        %v5251 = vunpack.c.l.b16 %v5123
        %v5252 = vunpack.c.l.b16 %v5124
        %v5253 = vunpack.c.l.b16 %v5125
        %v5254 = vunpack.c.l.b16 %v5126
        %v5255 = vunpack.c.l.b16 %v5127
        %v5256 = vunpack.c.l.b16 %v5128
        %v5257 = vunpack.c.l.b16 %v5129
        %v5258 = vunpack.c.l.b16 %v5130
        %v5259 = vunpack.c.l.b16 %v5131
        %v5260 = vunpack.c.l.b16 %v5132
        %v5261 = vunpack.c.l.b16 %v5133
        %v5262 = vunpack.c.l.b16 %v5134
        %v5263 = vunpack.c.l.b16 %v5135
        %v5264 = vunpack.c.l.b16 %v5136
        %v5265 = vunpack.c.l.b16 %v5137
        %v5266 = vunpack.c.l.b16 %v5138
        %v5267 = vunpack.c.l.b16 %v5139
        %v5268 = vunpack.c.l.b16 %v5140
        %v5269 = vunpack.c.l.b16 %v5141
        %v5270 = vunpack.c.l.b16 %v5142
        %v5271 = vunpack.c.l.b16 %v5143
        %v5272 = vunpack.c.l.b16 %v5144
        %v5273 = vunpack.c.l.b16 %v5145
        %v5274 = vunpack.c.l.b16 %v5146
        %v5275 = vunpack.c.l.b16 %v5147
        %v5276 = vunpack.c.l.b16 %v5148
        %v5277 = vunpack.c.l.b16 %v5149
        %v5278 = vunpack.c.l.b16 %v5150
        %v5279 = vunpack.c.l.b16 %v5151
        %v5280 = vunpack.c.l.b16 %v5152
        %v5281 = vunpack.c.l.b16 %v5153
        %v5282 = vunpack.c.l.b16 %v5154
        %v5283 = vunpack.c.l.b16 %v5155
        %v5284 = vunpack.c.l.b16 %v5156
        %v5285 = vunpack.c.l.b16 %v5157
        %v5286 = vunpack.c.l.b16 %v5158
        %v5287 = vunpack.c.l.b16 %v5159
        %v5288 = vunpack.c.l.b16 %v5160
        %v5289 = vunpack.c.l.b16 %v5161
        %v5290 = vunpack.c.l.b16 %v5162
        %v5291 = vunpack.c.l.b16 %v5163
        %v5292 = vunpack.c.l.b16 %v5164
        %v5293 = vpack.c.b16 %v5246, %v5245
        %v5294 = vpack.c.b16 %v5248, %v5247
        %v5295 = vpack.c.b16 %v5250, %v5249
        %v5296 = vpack.c.b16 %v5252, %v5251
        %v5297 = vpack.c.b16 %v5254, %v5253
        %v5298 = vpack.c.b16 %v5256, %v5255
        %v5299 = vpack.c.b16 %v5258, %v5257
        %v5300 = vpack.c.b16 %v5260, %v5259
        %v5301 = vpack.c.b16 %v5262, %v5261
        %v5302 = vpack.c.b16 %v5264, %v5263
        %v5303 = vpack.c.b16 %v5266, %v5265
        %v5304 = vpack.c.b16 %v5268, %v5267
        %v5305 = vpack.c.b16 %v5270, %v5269
        %v5306 = vpack.c.b16 %v5272, %v5271
        %v5307 = vpack.c.b16 %v5274, %v5273
        %v5308 = vpack.c.b16 %v5276, %v5275
        %v5309 = vpack.c.b16 %v5278, %v5277
        %v5310 = vpack.c.b16 %v5280, %v5279
        %v5311 = vpack.c.b16 %v5282, %v5281
        %v5312 = vpack.c.b16 %v5284, %v5283
        %v5313 = vpack.c.b16 %v5286, %v5285
        %v5314 = vpack.c.b16 %v5288, %v5287
        %v5315 = vpack.c.b16 %v5290, %v5289
        %v5316 = vpack.c.b16 %v5292, %v5291
        %5341 = vmatpush.bf16.msra.mxu0 %v5300
        %5342 = vmatpush.bf16.msra.mxu0 %v5299
        %5343 = vmatpush.bf16.msra.mxu0 %v5298
        %5344 = vmatpush.bf16.msra.mxu0 %v5297
        %5345 = vmatpush.bf16.msra.mxu0 %v5296
        %5346 = vmatpush.bf16.msra.mxu0 %v5295
        %5347 = vmatpush.bf16.msra.mxu0 %v5294
        %5348 = vmatpush.bf16.msra.mxu0 %v5293
        %5349 = vmatmul.bf16.gmra.mxu0 %v5185
        %v5350 = vpop.f32.mrf.mxu0
        %v5351 = vadd.f32 0.0, %v5350
        %v5352 = vpop.f32.mrf.mxu0
        %v5353 = vadd.f32 0.0, %v5352
        %5354 = vmatmul.bf16.gmra.mxu0 %v5188
        %v5355 = vpop.f32.mrf.mxu0
        %v5356 = vadd.f32 0.0, %v5355
        %v5357 = vpop.f32.mrf.mxu0
        %v5358 = vadd.f32 0.0, %v5357
        %5359 = vdwg.mxu0
        %5360 = vmatpush.bf16.msra.mxu0 %v5308
        %5361 = vmatpush.bf16.msra.mxu0 %v5307
        %5362 = vmatpush.bf16.msra.mxu0 %v5306
        %5363 = vmatpush.bf16.msra.mxu0 %v5305
        %5364 = vmatpush.bf16.msra.mxu0 %v5304
        %5365 = vmatpush.bf16.msra.mxu0 %v5303
        %5366 = vmatpush.bf16.msra.mxu0 %v5302
        %5367 = vmatpush.bf16.msra.mxu0 %v5301
        %5368 = vmatmul.bf16.gmra.mxu0 %v5186
        %v5369 = vpop.f32.mrf.mxu0
        %v5370 = vadd.f32 %v5351, %v5369
        %v5371 = vpop.f32.mrf.mxu0
        %v5372 = vadd.f32 %v5353, %v5371
        %5373 = vmatmul.bf16.gmra.mxu0 %v5189
        %v5374 = vpop.f32.mrf.mxu0
        %v5375 = vadd.f32 %v5356, %v5374
        %v5376 = vpop.f32.mrf.mxu0
        %v5377 = vadd.f32 %v5358, %v5376
        %5378 = vdwg.mxu0
        %5379 = vmatpush.bf16.msra.mxu0 %v5316
        %5380 = vmatpush.bf16.msra.mxu0 %v5315
        %5381 = vmatpush.bf16.msra.mxu0 %v5314
        %5382 = vmatpush.bf16.msra.mxu0 %v5313
        %5383 = vmatpush.bf16.msra.mxu0 %v5312
        %5384 = vmatpush.bf16.msra.mxu0 %v5311
        %5385 = vmatpush.bf16.msra.mxu0 %v5310
        %5386 = vmatpush.bf16.msra.mxu0 %v5309
        %5387 = vmatmul.bf16.gmra.mxu0 %v5187
        %v5388 = vpop.f32.mrf.mxu0
        %v5389 = vadd.f32 %v5370, %v5388
        %v5390 = vpop.f32.mrf.mxu0
        %v5391 = vadd.f32 %v5372, %v5390
        %5392 = vmatmul.bf16.gmra.mxu0 %v5190
        %v5393 = vpop.f32.mrf.mxu0
        %v5394 = vadd.f32 %v5375, %v5393
        %v5395 = vpop.f32.mrf.mxu0
        %v5396 = vadd.f32 %v5377, %v5395
        %5397 = vdwg.mxu0
        %v5400 = vunpack.c.l.b16 %v5057
        %v5401 = vunpack.c.h.b16 %v5057
        %v5402 = vunpack.c.l.b16 %v5058
        %v5403 = vpack.c.b16 %v5173, %v5400
        %v5404 = vpack.c.b16 %v5174, %v5401
        %v5405 = vpack.c.b16 %v5175, %v5402
        %v5406 = vpack.c.b16 %v5179, %v5176
        %v5407 = vpack.c.b16 %v5180, %v5177
        %v5408 = vpack.c.b16 %v5181, %v5178
        %v5463 = vunpack.c.l.b16 %v5069
        %v5464 = vunpack.c.l.b16 %v5070
        %v5465 = vunpack.c.l.b16 %v5071
        %v5466 = vunpack.c.l.b16 %v5072
        %v5467 = vunpack.c.l.b16 %v5073
        %v5468 = vunpack.c.l.b16 %v5074
        %v5469 = vunpack.c.l.b16 %v5075
        %v5470 = vunpack.c.l.b16 %v5076
        %v5471 = vunpack.c.l.b16 %v5077
        %v5472 = vunpack.c.l.b16 %v5078
        %v5473 = vunpack.c.l.b16 %v5079
        %v5474 = vunpack.c.l.b16 %v5080
        %v5475 = vunpack.c.l.b16 %v5081
        %v5476 = vunpack.c.l.b16 %v5082
        %v5477 = vunpack.c.l.b16 %v5083
        %v5478 = vunpack.c.l.b16 %v5084
        %v5479 = vunpack.c.l.b16 %v5085
        %v5480 = vunpack.c.l.b16 %v5086
        %v5481 = vunpack.c.l.b16 %v5087
        %v5482 = vunpack.c.l.b16 %v5088
        %v5483 = vunpack.c.l.b16 %v5089
        %v5484 = vunpack.c.l.b16 %v5090
        %v5485 = vunpack.c.l.b16 %v5091
        %v5486 = vunpack.c.l.b16 %v5092
        %v5487 = vunpack.c.l.b16 %v5093
        %v5488 = vunpack.c.l.b16 %v5094
        %v5489 = vunpack.c.l.b16 %v5095
        %v5490 = vunpack.c.l.b16 %v5096
        %v5491 = vunpack.c.l.b16 %v5097
        %v5492 = vunpack.c.l.b16 %v5098
        %v5493 = vunpack.c.l.b16 %v5099
        %v5494 = vunpack.c.l.b16 %v5100
        %v5495 = vunpack.c.l.b16 %v5101
        %v5496 = vunpack.c.l.b16 %v5102
        %v5497 = vunpack.c.l.b16 %v5103
        %v5498 = vunpack.c.l.b16 %v5104
        %v5499 = vunpack.c.l.b16 %v5105
        %v5500 = vunpack.c.l.b16 %v5106
        %v5501 = vunpack.c.l.b16 %v5107
        %v5502 = vunpack.c.l.b16 %v5108
        %v5503 = vunpack.c.l.b16 %v5109
        %v5504 = vunpack.c.l.b16 %v5110
        %v5505 = vunpack.c.l.b16 %v5111
        %v5506 = vunpack.c.l.b16 %v5112
        %v5507 = vunpack.c.l.b16 %v5113
        %v5508 = vunpack.c.l.b16 %v5114
        %v5509 = vunpack.c.l.b16 %v5115
        %v5510 = vunpack.c.l.b16 %v5116
        %v5511 = vpack.c.b16 %v5464, %v5463
        %v5512 = vpack.c.b16 %v5466, %v5465
        %v5513 = vpack.c.b16 %v5468, %v5467
        %v5514 = vpack.c.b16 %v5470, %v5469
        %v5515 = vpack.c.b16 %v5472, %v5471
        %v5516 = vpack.c.b16 %v5474, %v5473
        %v5517 = vpack.c.b16 %v5476, %v5475
        %v5518 = vpack.c.b16 %v5478, %v5477
        %v5519 = vpack.c.b16 %v5480, %v5479
        %v5520 = vpack.c.b16 %v5482, %v5481
        %v5521 = vpack.c.b16 %v5484, %v5483
        %v5522 = vpack.c.b16 %v5486, %v5485
        %v5523 = vpack.c.b16 %v5488, %v5487
        %v5524 = vpack.c.b16 %v5490, %v5489
        %v5525 = vpack.c.b16 %v5492, %v5491
        %v5526 = vpack.c.b16 %v5494, %v5493
        %v5527 = vpack.c.b16 %v5496, %v5495
        %v5528 = vpack.c.b16 %v5498, %v5497
        %v5529 = vpack.c.b16 %v5500, %v5499
        %v5530 = vpack.c.b16 %v5502, %v5501
        %v5531 = vpack.c.b16 %v5504, %v5503
        %v5532 = vpack.c.b16 %v5506, %v5505
        %v5533 = vpack.c.b16 %v5508, %v5507
        %v5534 = vpack.c.b16 %v5510, %v5509
        %5559 = vmatpush.bf16.msra.mxu0 %v5518
        %5560 = vmatpush.bf16.msra.mxu0 %v5517
        %5561 = vmatpush.bf16.msra.mxu0 %v5516
        %5562 = vmatpush.bf16.msra.mxu0 %v5515
        %5563 = vmatpush.bf16.msra.mxu0 %v5514
        %5564 = vmatpush.bf16.msra.mxu0 %v5513
        %5565 = vmatpush.bf16.msra.mxu0 %v5512
        %5566 = vmatpush.bf16.msra.mxu0 %v5511
        %5567 = vmatmul.bf16.gmra.mxu0 %v5403
        %v5568 = vpop.f32.mrf.mxu0
        %v5569 = vadd.f32 %v5389, %v5568
        %v5570 = vpop.f32.mrf.mxu0
        %v5571 = vadd.f32 %v5391, %v5570
        %5572 = vmatmul.bf16.gmra.mxu0 %v5406
        %v5573 = vpop.f32.mrf.mxu0
        %v5574 = vadd.f32 %v5394, %v5573
        %v5575 = vpop.f32.mrf.mxu0
        %v5576 = vadd.f32 %v5396, %v5575
        %5577 = vdwg.mxu0
        %5578 = vmatpush.bf16.msra.mxu0 %v5526
        %5579 = vmatpush.bf16.msra.mxu0 %v5525
        %5580 = vmatpush.bf16.msra.mxu0 %v5524
        %5581 = vmatpush.bf16.msra.mxu0 %v5523
        %5582 = vmatpush.bf16.msra.mxu0 %v5522
        %5583 = vmatpush.bf16.msra.mxu0 %v5521
        %5584 = vmatpush.bf16.msra.mxu0 %v5520
        %5585 = vmatpush.bf16.msra.mxu0 %v5519
        %5586 = vmatmul.bf16.gmra.mxu0 %v5404
        %v5587 = vpop.f32.mrf.mxu0
        %v5588 = vadd.f32 %v5569, %v5587
        %v5589 = vpop.f32.mrf.mxu0
        %v5590 = vadd.f32 %v5571, %v5589
        %5591 = vmatmul.bf16.gmra.mxu0 %v5407
        %v5592 = vpop.f32.mrf.mxu0
        %v5593 = vadd.f32 %v5574, %v5592
        %v5594 = vpop.f32.mrf.mxu0
        %v5595 = vadd.f32 %v5576, %v5594
        %5596 = vdwg.mxu0
        %5597 = vmatpush.bf16.msra.mxu0 %v5534
        %5598 = vmatpush.bf16.msra.mxu0 %v5533
        %5599 = vmatpush.bf16.msra.mxu0 %v5532
        %5600 = vmatpush.bf16.msra.mxu0 %v5531
        %5601 = vmatpush.bf16.msra.mxu0 %v5530
        %5602 = vmatpush.bf16.msra.mxu0 %v5529
        %5603 = vmatpush.bf16.msra.mxu0 %v5528
        %5604 = vmatpush.bf16.msra.mxu0 %v5527
        %5605 = vmatmul.bf16.gmra.mxu0 %v5405
        %v5606 = vpop.f32.mrf.mxu0
        %v5607 = vadd.f32 %v5588, %v5606
        %v5608 = vpop.f32.mrf.mxu0
        %v5609 = vadd.f32 %v5590, %v5608
        %5610 = vmatmul.bf16.gmra.mxu0 %v5408
        %v5611 = vpop.f32.mrf.mxu0
        %v5612 = vadd.f32 %v5593, %v5611
        %v5613 = vpop.f32.mrf.mxu0
        %v5614 = vadd.f32 %v5595, %v5613
        %5615 = vdwg.mxu0
        %v5616 = vld [vmem:[%s1567] sm:$0xf]
        %v5617 = vld [vmem:[%s1567 + $0x4] sm:$0xf]
        %v5618 = vld [vmem:[%s1567 + $0x8] sm:$0xf]
        %v5619 = vld [vmem:[%s1567 + $0xc] sm:$0xf]
        %v5620 = vld [vmem:[%s1567 + $0x10] sm:$0xf]
        %v5621 = vld [vmem:[%s1567 + $0x14] sm:$0xf]
        %v5622 = vld [vmem:[%s1567 + $0x18] sm:$0xf]
        %v5623 = vld [vmem:[%s1567 + $0x1c] sm:$0xf]
        %v5624 = vld [vmem:[%s1567 + $0x20] sm:$0xf]
        %v5625 = vld [vmem:[%s1567 + $0x24] sm:$0xf]
        %v5626 = vld [vmem:[%s1567 + $0x28] sm:$0xf]
        %v5627 = vld [vmem:[%s1567 + $0x2c] sm:$0xf]
        %v5628 = vld [vmem:[%s1567 + $0x30] sm:$0xf]
        %v5629 = vld [vmem:[%s1567 + $0x34] sm:$0xf]
        %v5630 = vld [vmem:[%s1567 + $0x38] sm:$0xf]
        %v5631 = vld [vmem:[%s1567 + $0x3c] sm:$0xf]
        %v5632 = vld [vmem:[%s1567 + $0x40] sm:$0xf]
        %v5633 = vld [vmem:[%s1567 + $0x44] sm:$0xf]
        %v5634 = vld [vmem:[%s1567 + $0x48] sm:$0xf]
        %v5635 = vld [vmem:[%s1567 + $0x4c] sm:$0xf]
        %v5636 = vld [vmem:[%s1567 + $0x50] sm:$0xf]
        %v5637 = vld [vmem:[%s1567 + $0x54] sm:$0xf]
        %v5638 = vld [vmem:[%s1567 + $0x58] sm:$0xf]
        %v5639 = vld [vmem:[%s1567 + $0x5c] sm:$0xf]
        %v5640 = vld [vmem:[%s1567 + $0x60] sm:$0xf]
        %v5641 = vld [vmem:[%s1567 + $0x64] sm:$0xf]
        %v5642 = vld [vmem:[%s1567 + $0x68] sm:$0xf]
        %v5643 = vld [vmem:[%s1567 + $0x6c] sm:$0xf]
        %v5644 = vld [vmem:[%s1567 + $0x70] sm:$0xf]
        %v5645 = vld [vmem:[%s1567 + $0x74] sm:$0xf]
        %v5646 = vld [vmem:[%s1567 + $0x78] sm:$0xf]
        %v5647 = vld [vmem:[%s1567 + $0x7c] sm:$0xf]
        %v5648 = vld [vmem:[%s1567 + $0x80] sm:$0xf]
        %v5649 = vld [vmem:[%s1567 + $0x84] sm:$0xf]
        %v5650 = vld [vmem:[%s1567 + $0x88] sm:$0xf]
        %v5651 = vld [vmem:[%s1567 + $0x8c] sm:$0xf]
        %v5652 = vld [vmem:[%s1567 + $0x90] sm:$0xf]
        %v5653 = vld [vmem:[%s1567 + $0x94] sm:$0xf]
        %v5654 = vld [vmem:[%s1567 + $0x98] sm:$0xf]
        %v5655 = vld [vmem:[%s1567 + $0x9c] sm:$0xf]
        %v5656 = vld [vmem:[%s1567 + $0xa0] sm:$0xf]
        %v5657 = vld [vmem:[%s1567 + $0xa4] sm:$0xf]
        %v5658 = vld [vmem:[%s1567 + $0xa8] sm:$0xf]
        %v5659 = vld [vmem:[%s1567 + $0xac] sm:$0xf]
        %v5660 = vld [vmem:[%s1567 + $0xb0] sm:$0xf]
        %v5661 = vld [vmem:[%s1567 + $0xb4] sm:$0xf]
        %v5662 = vld [vmem:[%s1567 + $0xb8] sm:$0xf]
        %v5663 = vld [vmem:[%s1567 + $0xbc] sm:$0xf]
        %v5666 = vunpack.c.l.b16 %v5067
        %v5667 = vunpack.c.h.b16 %v5067
        %v5668 = vunpack.c.l.b16 %v5068
        %v5669 = vpack.c.b16 %v5666, %v5182
        %v5670 = vpack.c.b16 %v5667, %v5183
        %v5671 = vpack.c.b16 %v5668, %v5184
        %v5723 = vunpack.c.l.b16 %v5616
        %v5724 = vunpack.c.l.b16 %v5617
        %v5725 = vunpack.c.l.b16 %v5618
        %v5726 = vunpack.c.l.b16 %v5619
        %v5727 = vunpack.c.l.b16 %v5620
        %v5728 = vunpack.c.l.b16 %v5621
        %v5729 = vunpack.c.l.b16 %v5622
        %v5730 = vunpack.c.l.b16 %v5623
        %v5731 = vunpack.c.l.b16 %v5624
        %v5732 = vunpack.c.l.b16 %v5625
        %v5733 = vunpack.c.l.b16 %v5626
        %v5734 = vunpack.c.l.b16 %v5627
        %v5735 = vunpack.c.l.b16 %v5628
        %v5736 = vunpack.c.l.b16 %v5629
        %v5737 = vunpack.c.l.b16 %v5630
        %v5738 = vunpack.c.l.b16 %v5631
        %v5739 = vunpack.c.l.b16 %v5632
        %v5740 = vunpack.c.l.b16 %v5633
        %v5741 = vunpack.c.l.b16 %v5634
        %v5742 = vunpack.c.l.b16 %v5635
        %v5743 = vunpack.c.l.b16 %v5636
        %v5744 = vunpack.c.l.b16 %v5637
        %v5745 = vunpack.c.l.b16 %v5638
        %v5746 = vunpack.c.l.b16 %v5639
        %v5747 = vunpack.c.l.b16 %v5640
        %v5748 = vunpack.c.l.b16 %v5641
        %v5749 = vunpack.c.l.b16 %v5642
        %v5750 = vunpack.c.l.b16 %v5643
        %v5751 = vunpack.c.l.b16 %v5644
        %v5752 = vunpack.c.l.b16 %v5645
        %v5753 = vunpack.c.l.b16 %v5646
        %v5754 = vunpack.c.l.b16 %v5647
        %v5755 = vunpack.c.l.b16 %v5648
        %v5756 = vunpack.c.l.b16 %v5649
        %v5757 = vunpack.c.l.b16 %v5650
        %v5758 = vunpack.c.l.b16 %v5651
        %v5759 = vunpack.c.l.b16 %v5652
        %v5760 = vunpack.c.l.b16 %v5653
        %v5761 = vunpack.c.l.b16 %v5654
        %v5762 = vunpack.c.l.b16 %v5655
        %v5763 = vunpack.c.l.b16 %v5656
        %v5764 = vunpack.c.l.b16 %v5657
        %v5765 = vunpack.c.l.b16 %v5658
        %v5766 = vunpack.c.l.b16 %v5659
        %v5767 = vunpack.c.l.b16 %v5660
        %v5768 = vunpack.c.l.b16 %v5661
        %v5769 = vunpack.c.l.b16 %v5662
        %v5770 = vunpack.c.l.b16 %v5663
        %v5771 = vpack.c.b16 %v5724, %v5723
        %v5772 = vpack.c.b16 %v5726, %v5725
        %v5773 = vpack.c.b16 %v5728, %v5727
        %v5774 = vpack.c.b16 %v5730, %v5729
        %v5775 = vpack.c.b16 %v5732, %v5731
        %v5776 = vpack.c.b16 %v5734, %v5733
        %v5777 = vpack.c.b16 %v5736, %v5735
        %v5778 = vpack.c.b16 %v5738, %v5737
        %v5779 = vpack.c.b16 %v5740, %v5739
        %v5780 = vpack.c.b16 %v5742, %v5741
        %v5781 = vpack.c.b16 %v5744, %v5743
        %v5782 = vpack.c.b16 %v5746, %v5745
        %v5783 = vpack.c.b16 %v5748, %v5747
        %v5784 = vpack.c.b16 %v5750, %v5749
        %v5785 = vpack.c.b16 %v5752, %v5751
        %v5786 = vpack.c.b16 %v5754, %v5753
        %v5787 = vpack.c.b16 %v5756, %v5755
        %v5788 = vpack.c.b16 %v5758, %v5757
        %v5789 = vpack.c.b16 %v5760, %v5759
        %v5790 = vpack.c.b16 %v5762, %v5761
        %v5791 = vpack.c.b16 %v5764, %v5763
        %v5792 = vpack.c.b16 %v5766, %v5765
        %v5793 = vpack.c.b16 %v5768, %v5767
        %v5794 = vpack.c.b16 %v5770, %v5769
        %5819 = vmatpush.bf16.msra.mxu0 %v5778
        %5820 = vmatpush.bf16.msra.mxu0 %v5777
        %5821 = vmatpush.bf16.msra.mxu0 %v5776
        %5822 = vmatpush.bf16.msra.mxu0 %v5775
        %5823 = vmatpush.bf16.msra.mxu0 %v5774
        %5824 = vmatpush.bf16.msra.mxu0 %v5773
        %5825 = vmatpush.bf16.msra.mxu0 %v5772
        %5826 = vmatpush.bf16.msra.mxu0 %v5771
        %5827 = vmatmul.bf16.gmra.mxu0 %v5406
        %v5828 = vpop.f32.mrf.mxu0
        %v5829 = vadd.f32 0.0, %v5828
        %v5830 = vpop.f32.mrf.mxu0
        %v5831 = vadd.f32 0.0, %v5830
        %5832 = vmatmul.bf16.gmra.mxu0 %v5669
        %v5833 = vpop.f32.mrf.mxu0
        %v5834 = vadd.f32 0.0, %v5833
        %v5835 = vpop.f32.mrf.mxu0
        %v5836 = vadd.f32 0.0, %v5835
        %5837 = vdwg.mxu0
        %5838 = vmatpush.bf16.msra.mxu0 %v5786
        %5839 = vmatpush.bf16.msra.mxu0 %v5785
        %5840 = vmatpush.bf16.msra.mxu0 %v5784
        %5841 = vmatpush.bf16.msra.mxu0 %v5783
        %5842 = vmatpush.bf16.msra.mxu0 %v5782
        %5843 = vmatpush.bf16.msra.mxu0 %v5781
        %5844 = vmatpush.bf16.msra.mxu0 %v5780
        %5845 = vmatpush.bf16.msra.mxu0 %v5779
        %5846 = vmatmul.bf16.gmra.mxu0 %v5407
        %v5847 = vpop.f32.mrf.mxu0
        %v5848 = vadd.f32 %v5829, %v5847
        %v5849 = vpop.f32.mrf.mxu0
        %v5850 = vadd.f32 %v5831, %v5849
        %5851 = vmatmul.bf16.gmra.mxu0 %v5670
        %v5852 = vpop.f32.mrf.mxu0
        %v5853 = vadd.f32 %v5834, %v5852
        %v5854 = vpop.f32.mrf.mxu0
        %v5855 = vadd.f32 %v5836, %v5854
        %5856 = vdwg.mxu0
        %5857 = vmatpush.bf16.msra.mxu0 %v5794
        %5858 = vmatpush.bf16.msra.mxu0 %v5793
        %5859 = vmatpush.bf16.msra.mxu0 %v5792
        %5860 = vmatpush.bf16.msra.mxu0 %v5791
        %5861 = vmatpush.bf16.msra.mxu0 %v5790
        %5862 = vmatpush.bf16.msra.mxu0 %v5789
        %5863 = vmatpush.bf16.msra.mxu0 %v5788
        %5864 = vmatpush.bf16.msra.mxu0 %v5787
        %5865 = vmatmul.bf16.gmra.mxu0 %v5408
        %v5866 = vpop.f32.mrf.mxu0
        %v5867 = vadd.f32 %v5848, %v5866
        %v5868 = vpop.f32.mrf.mxu0
        %v5869 = vadd.f32 %v5850, %v5868
        %5870 = vmatmul.bf16.gmra.mxu0 %v5671
        %v5871 = vpop.f32.mrf.mxu0
        %v5872 = vadd.f32 %v5853, %v5871
        %v5873 = vpop.f32.mrf.mxu0
        %v5874 = vadd.f32 %v5855, %v5873
        %5875 = vdwg.mxu0
        %v5876 = vadd.f32 %v5607, %v5867
        %v5877 = vadd.f32 %v5609, %v5869
        %v5878 = vadd.f32 %v5612, %v5872
        %v5879 = vadd.f32 %v5614, %v5874
        %v5880 = vadd.f32 %v5876, %v575
        %v5881 = vadd.f32 %v5877, %v575
        %v5882 = vadd.f32 %v5878, %v575
        %v5883 = vadd.f32 %v5879, %v575
        %v5884 = vmax.f32 %v5880, 0.0
        %v5885 = vmax.f32 %v5881, 0.0
        %v5886 = vmax.f32 %v5882, 0.0
        %v5887 = vmax.f32 %v5883, 0.0
        %v5888 = vpack.c.bf16 %v5885, %v5884
        %v5889 = vpack.c.bf16 %v5887, %v5886
        %v5890 = vld [vmem:[#allocation11] sm:$0xf]
        %v5891 = vld [vmem:[#allocation11 + $0x4] sm:$0xf]
        %v5892 = vld [vmem:[#allocation11 + $0x8] sm:$0xf]
        %v5893 = vld [vmem:[#allocation11 + $0xc] sm:$0xf]
        %v5894 = vld [vmem:[#allocation11 + $0x10] sm:$0xf]
        %v5895 = vld [vmem:[#allocation11 + $0x14] sm:$0xf]
        %v5896 = vld [vmem:[#allocation11 + $0x18] sm:$0xf]
        %v5897 = vld [vmem:[#allocation11 + $0x1c] sm:$0xf]
        %v5898 = vld [vmem:[#allocation11 + $0x20] sm:$0xf]
        %v5899 = vld [vmem:[#allocation11 + $0x24] sm:$0xf]
        %v5900 = vld [vmem:[#allocation11 + $0x28] sm:$0xf]
        %v5901 = vld [vmem:[#allocation11 + $0x2c] sm:$0xf]
        %v5902 = vld [vmem:[#allocation11 + $0x30] sm:$0xf]
        %v5903 = vld [vmem:[#allocation11 + $0x34] sm:$0xf]
        %v5904 = vld [vmem:[#allocation11 + $0x38] sm:$0xf]
        %v5905 = vld [vmem:[#allocation11 + $0x3c] sm:$0xf]
        %v5922 = vunpack.c.l.b16 %v5890
        %v5923 = vunpack.c.l.b16 %v5891
        %v5924 = vunpack.c.l.b16 %v5892
        %v5925 = vunpack.c.l.b16 %v5893
        %v5926 = vunpack.c.l.b16 %v5894
        %v5927 = vunpack.c.l.b16 %v5895
        %v5928 = vunpack.c.l.b16 %v5896
        %v5929 = vunpack.c.l.b16 %v5897
        %v5930 = vunpack.c.l.b16 %v5898
        %v5931 = vunpack.c.l.b16 %v5899
        %v5932 = vunpack.c.l.b16 %v5900
        %v5933 = vunpack.c.l.b16 %v5901
        %v5934 = vunpack.c.l.b16 %v5902
        %v5935 = vunpack.c.l.b16 %v5903
        %v5936 = vunpack.c.l.b16 %v5904
        %v5937 = vunpack.c.l.b16 %v5905
        %v5938 = vpack.c.b16 %v5923, %v5922
        %v5939 = vpack.c.b16 %v5925, %v5924
        %v5940 = vpack.c.b16 %v5927, %v5926
        %v5941 = vpack.c.b16 %v5929, %v5928
        %v5942 = vpack.c.b16 %v5931, %v5930
        %v5943 = vpack.c.b16 %v5933, %v5932
        %v5944 = vpack.c.b16 %v5935, %v5934
        %v5945 = vpack.c.b16 %v5937, %v5936
        %5954 = vmatpush.bf16.msra.mxu0 %v5945
        %5955 = vmatpush.bf16.msra.mxu0 %v5944
        %5956 = vmatpush.bf16.msra.mxu0 %v5943
        %5957 = vmatpush.bf16.msra.mxu0 %v5942
        %5958 = vmatpush.bf16.msra.mxu0 %v5941
        %5959 = vmatpush.bf16.msra.mxu0 %v5940
        %5960 = vmatpush.bf16.msra.mxu0 %v5939
        %5961 = vmatpush.bf16.msra.mxu0 %v5938
        %5962 = vmatmul.bf16.gmra.mxu0 %v5888
        %v5963 = vpop.f32.mrf.mxu0
        %v5964 = vadd.f32 %v579, %v5963
        %v5965 = vpop.f32.mrf.mxu0
        %v5966 = vadd.f32 %v579, %v5965
        %5967 = vmatmul.bf16.gmra.mxu0 %v5889
        %v5968 = vpop.f32.mrf.mxu0
        %v5969 = vadd.f32 %v579, %v5968
        %v5970 = vpop.f32.mrf.mxu0
        %v5971 = vadd.f32 %v579, %v5970
        %5972 = vdwg.mxu0
        %v5973 = vunpack.c.l.bf16 %v4735
        %v5974 = vunpack.c.l.bf16 %v4736
        %v5975 = vunpack.c.l.bf16 %v4737
        %v5976 = vunpack.c.l.bf16 %v4738
        %v5977 = vadd.f32 %v5964, %v5973
        %v5978 = vadd.f32 %v5966, %v5974
        %v5979 = vadd.f32 %v5969, %v5975
        %v5980 = vadd.f32 %v5971, %v5976
        %v5981 = vmax.f32 %v5977, 0.0
        %v5982 = vmax.f32 %v5978, 0.0
        %v5983 = vmax.f32 %v5979, 0.0
        %v5984 = vmax.f32 %v5980, 0.0
        %v5985 = vpack.c.bf16 %v5981, %v5981
        %v5986 = vpack.c.bf16 %v5982, %v5982
        %v5987 = vpack.c.bf16 %v5983, %v5983
        %v5988 = vpack.c.bf16 %v5984, %v5984
        %s5989 = scalar_lea.vmem %s556, 48 [#allocation13]
        %5990 = vst [vmem:[%s5989] sm:$0xf] %v5985
        %5991 = vst [vmem:[%s5989 + $0x4] sm:$0xf] %v5986
        %5992 = vst [vmem:[%s5989 + $0x8] sm:$0xf] %v5987
        %5993 = vst [vmem:[%s5989 + $0xc] sm:$0xf] %v5988
        %s5994 = sand.u32 %s279, 1
        %s5995 = scalar_lea.sflag [#allocation4], %s5994
        %s5996 = sand.u32 %s279, 1
        %s5997 = smul.addr %s5996, 64
        %s5998 = scalar_lea.vmem [#allocation13], %s5997
        // Predicated region
        $region81: #{tpu_custom_call.1} parent=55 // pred_check
          %p5999 = pneg %p289
        $region82: #{tpu_custom_call.1} parent=55 // pred_check_branch
          %6001 = sbr.rel (%p5999) target = $region84
        $region83: #{tpu_custom_call.1} parent=55 // pred_region
          #allocation17 [shape = 'u32[6]{0}', space=smem, size = 0x18, scoped, tag = 'DMA stride descriptor']
          %s6002 = smul.u32 4, %s36
          %6004 = vsyncadd %s5995, 0
          %s6005 = smul.addr %s35, 32
          %s6006 = sadd.s32 %s6002, %s6005
          %s6007 = smul.addr %s6006, 4
          %s6008 = scalar_lea.hbm %s9, %s6007
          %s6010 = sshll.u32 1, 14
          %s6011 = sxor.u32 4294967295, %s6010
          %s6014 = sshll.u32 7, 18
          %s6015 = sxor.u32 4294967295, %s6014
          %s6016 = sand.u32 0, %s6015
          %s6018 = sor.u32 %s6016, 0
          %s6019 = sshll.u32 %s5998, 4
          %s6020 = int_to_ptr.vmem [resolvable:$true] %s6019
          %s6021 = sshll.u32 %s6008, 4
          %s6022 = int_to_ptr.hbm [resolvable:$true] %s6021
          %6028 = sst [smem:[#allocation17]] 256
          %s6029 = scalar_lea.smem [#allocation17], 1
          %6030 = sst [smem:[%s6029]] 512
          %s6031 = scalar_lea.smem [#allocation17], 2
          %6032 = sst [smem:[%s6031]] 4
          %s6033 = scalar_lea.smem [#allocation17], 3
          %6034 = sst [smem:[%s6033]] 64
          %s6035 = scalar_lea.smem [#allocation17], 4
          %6036 = sst [smem:[%s6035]] 64
          %s6037 = scalar_lea.smem [#allocation17], 5
          %6038 = sst [smem:[%s6037]] 4
          %6040 = dma.general %s6020, 1024, %s6022, %s5995, [#allocation16], [#allocation17], %s6018, 0
        $region84: #{tpu_custom_call.1} parent=55 // pred_fallthru
          _
      $region56: #{tpu_custom_call.1} parent=5 // pred_fallthru
        _
      %p6041 = scmp.le.s32.totalorder 2, %s26
      // Predicated region
      $region85: #{tpu_custom_call.1} parent=5 // pred_check
        %p6042 = pneg %p6041
      $region86: #{tpu_custom_call.1} parent=5 // pred_check_branch
        %6044 = sbr.rel (%p6042) target = $region88
      $region87: #{tpu_custom_call.1} parent=5 // pred_region
        %s6045 = ssub.s32 %s26, 2
        // Predicated region
        $region89: #{tpu_custom_call.1} parent=87 // pred_check
          %p6046 = pneg %p295
        $region90: #{tpu_custom_call.1} parent=87 // pred_check_branch
          %6048 = sbr.rel (%p6046) target = $region92
        $region91: #{tpu_custom_call.1} parent=87 // pred_region
          %s6049 = sand.u32 %s280, 1
          %s6050 = scalar_lea.sflag [#allocation4], %s6049
          %s6051 = sand.u32 %s280, 1
          %s6052 = smul.addr %s6051, 64
          %s6053 = scalar_lea.vmem [#allocation13], %s6052
          %6055 = dma.done %s6050, 1024
        $region92: #{tpu_custom_call.1} parent=87 // pred_fallthru
          _
      $region88: #{tpu_custom_call.1} parent=5 // pred_fallthru
        _
    $region6: #{tpu_custom_call.1} parent=1 // loop_footer
      %s30 = sadd.s32 1, %s26
    $region7: #{tpu_custom_call.1} parent=1 // loop_footer_branch
      %25 = sbr.rel target = $region3
    $region8: #{tpu_custom_call.1} parent=1 // loop_exit
      _
    %6056 = vsyncpa [#allocation3], 1
    %s6057 = scalar_lea.sflag [#allocation3], 1
    %6058 = vsyncpa %s6057, 1
    %6059 = vsyncpa [#allocation6], 1
    %s6060 = scalar_lea.sflag [#allocation6], 1
    %6061 = vsyncpa %s6060, 1
    %6062 = vsyncpa [#allocation9], 1
    %6063 = vsyncpa [#allocation12], 1
    %6064 = vsyncpa [#allocation4], 1
    %s6065 = scalar_lea.sflag [#allocation4], 1
    %6066 = vsyncpa %s6065, 1

</llo_original>
